<compile_context>
chip_gen: v7x
topology: tpu7x:2x2x1
jax: 0.10.0
libtpu: 0.0.40
codegen_flags: <defaults>
</compile_context>

<pallas_src>
import functools

import jax
import jax.numpy as jnp
from jax import lax
from jax.experimental import pallas as pl
from jax.experimental.pallas import tpu as pltpu

EPS = 1e-5
LANE = 128
_TAPS = tuple((dy, dx) for dy in range(3) for dx in range(3))


def _ceil_to(v, m):
    return -(-v // m) * m


def _vmem_limit_bytes():
    """~(physical - 16 MiB), capped at 100 MiB (v5e/v6e: 128 MiB, v7x: 64 MiB)."""
    cap = 64 * 1024 * 1024
    try:
        info = pltpu.get_tpu_info()
        cap = int(getattr(info, "vmem_capacity_bytes", cap))
    except Exception:
        pass
    return max(min(cap - 16 * 1024 * 1024, 100 * 1024 * 1024), 32 * 1024 * 1024)


def _largest_row_block(total, cap=2048):
    """Largest divisor of `total` that is a multiple of 8 and <= cap."""
    best, d = 8, 8
    limit = min(total, cap)
    while d <= limit:
        if total % d == 0:
            best = d
        d += 8
    return best


# --------------------------- in-kernel helpers ----------------------------- #
def _bn_scale_shift(stats_ref, g_ref, b_ref, count):
    """Fold batch stats (row0=sum, row1=sumsq) + gamma/beta into scale/shift."""
    inv_n = 1.0 / count
    mean = stats_ref[0:1, :] * inv_n
    var = jnp.maximum(stats_ref[1:2, :] * inv_n - mean * mean, 0.0)
    scale = g_ref[...] * lax.rsqrt(var + EPS)
    shift = b_ref[...] - mean * scale
    return scale, shift


def _write_stats(st_ref, y):
    """Per-image partial BN stats: row0 = sum, row1 = sumsq (rows 2..7 zero)."""
    s0 = jnp.sum(y, axis=0, keepdims=True)
    s1 = jnp.sum(y * y, axis=0, keepdims=True)
    pad = jnp.zeros((6, y.shape[1]), jnp.float32)
    st_ref[0, :, :] = jnp.concatenate([s0, s1, pad], axis=0)


# ----------------------------- Pallas kernels ------------------------------ #
def _make_conv1_kernel(*, stride, hq, ho, wo, cin_p, downsample):
    """conv1 (3x3, stride) [+ 1x1/stride shortcut conv] + per-image BN stats."""
    m_img = ho * wo

    def kernel(*refs):
        if downsample:
            x_ref, w1_ref, ws_ref, y1_ref, s_ref, st1_ref, sts_ref, xcol_ref = refs
        else:
            x_ref, w1_ref, y1_ref, st1_ref, xcol_ref = refs

        # Build the im2col operand (m_img, 9*cin_p) in VMEM: tap (dy,dx) of the
        # phase-decomposed padded image is a static contiguous slice:
        #   x_pad[oy*s+dy, ox*s+dx] == phase[(dy%s, dx%s)][oy + dy//s, ox + dx//s]
        for i, (dy, dx) in enumerate(_TAPS):
            p = (dy % stride) * stride + (dx % stride)
            r0 = p * hq + dy // stride
            c0 = dx // stride
            tap = x_ref[0, r0:r0 + ho, c0:c0 + wo, :]
            xcol_ref[:, i * cin_p:(i + 1) * cin_p] = tap.reshape(m_img, cin_p)

        # One MXU matmul per image, K = 9*cin_p, f32 accumulation.
        y = jnp.dot(xcol_ref[...], w1_ref[...],
                    preferred_element_type=jnp.float32)
        y1_ref[0, :, :] = y.astype(y1_ref.dtype)
        _write_stats(st1_ref, y)

        if downsample:
            # 1x1 stride-s shortcut conv: reuses the center-tap im2col slice.
            sc = jnp.dot(xcol_ref[:, 4 * cin_p:5 * cin_p], ws_ref[...],
                         preferred_element_type=jnp.float32)
            s_ref[0, :, :] = sc.astype(s_ref.dtype)
            _write_stats(sts_ref, sc)

    return kernel


def _make_conv2_kernel(*, ho, wo, cout_p, count):
    """bn1+relu (fused) -> zero-halo pad in VMEM -> im2col -> conv2 (3x3, s=1)."""
    m_img = ho * wo

    def kernel(y1_ref, st1_ref, g1_ref, b1_ref, w2_ref,
               y2_ref, st2_ref, pad_ref, xcol_ref):
        # bn1 + relu on the VMEM-resident conv1 output (stats already reduced).
        scale1, shift1 = _bn_scale_shift(st1_ref, g1_ref, b1_ref, count)
        act = jnp.maximum(
            y1_ref[0, :, :].astype(jnp.float32) * scale1 + shift1, 0.0)

        # Zero-halo buffer rebuilt every grid step (keeps the axis "parallel").
        pad_ref[...] = jnp.zeros_like(pad_ref)
        pad_ref[1:1 + ho, 1:1 + wo, :] = (
            act.reshape(ho, wo, cout_p).astype(pad_ref.dtype))

        for i, (dy, dx) in enumerate(_TAPS):
            tap = pad_ref[dy:dy + ho, dx:dx + wo, :]
            xcol_ref[:, i * cout_p:(i + 1) * cout_p] = tap.reshape(m_img, cout_p)

        y = jnp.dot(xcol_ref[...], w2_ref[...],
                    preferred_element_type=jnp.float32)
        y2_ref[0, :, :] = y.astype(y2_ref.dtype)
        _write_stats(st2_ref, y)

    return kernel


def _make_finalize_kernel(*, count, downsample):
    """bn2 apply [+ shortcut-bn apply | identity] + residual add + relu."""
    def kernel(*refs):
        if downsample:
            (y2_ref, s_ref, st2_ref, g2_ref, b2_ref,
             sts_ref, gs_ref, bs_ref, out_ref) = refs
        else:
            y2_ref, res_ref, st2_ref, g2_ref, b2_ref, out_ref = refs

        scale2, shift2 = _bn_scale_shift(st2_ref, g2_ref, b2_ref, count)
        y = y2_ref[...].astype(jnp.float32) * scale2 + shift2
        if downsample:
            ss, sh = _bn_scale_shift(sts_ref, gs_ref, bs_ref, count)
            res = s_ref[...].astype(jnp.float32) * ss + sh
        else:
            res = res_ref[...].astype(jnp.float32)
        out_ref[...] = jnp.maximum(y + res, 0.0).astype(out_ref.dtype)

    return kernel


# ------------------------------ wrapper glue ------------------------------- #
def _pad_channels(a, cp):
    pad = cp - a.shape[-1]
    if pad:
        a = jnp.pad(a, [(0, 0)] * (a.ndim - 1) + [(0, pad)])
    return a


def _conv_weight_matrix(w_oihw, cin_p, cout_p, dtype):
    # OIHW -> tap-major (k*k*Cin_p, Cout_p), zero-padded to lane-dense channels.
    k = w_oihw.shape[-1]
    w = jnp.transpose(w_oihw, (2, 3, 1, 0))               # (k,k,Cin,Cout)
    w = jnp.pad(w, ((0, 0), (0, 0),
                    (0, cin_p - w.shape[2]), (0, cout_p - w.shape[3])))
    return w.reshape(k * k * cin_p, cout_p).astype(dtype)


def _phase_decompose(x_nhwc, stride):
    """Zero-pad spatially by 1, split into stride*stride phases and fold the
    phases into the row axis -> (N, s*s*Hq, Wq, C).  Lets the kernel form every
    3x3 tap (incl. strided ones) with contiguous static slices."""
    n, h, w, c = x_nhwc.shape
    hp, wp = h + 2, w + 2
    hq, wq = -(-hp // stride), -(-wp // stride)
    xp = jnp.pad(x_nhwc, ((0, 0),
                          (1, hq * stride - hp + 1),
                          (1, wq * stride - wp + 1),
                          (0, 0)))
    xp = xp.reshape(n, hq, stride, wq, stride, c)
    xp = jnp.transpose(xp, (0, 2, 4, 1, 3, 5))            # (N, sy, sx, Hq, Wq, C)
    return xp.reshape(n, stride * stride * hq, wq, c), hq, wq


def basic_block_forward(x_nchw, params, *, stride, compute_dtype=jnp.bfloat16):
    """BasicBlock forward (training-mode BN).  x_nchw: NCHW (PyTorch layout)."""
    cdt = jnp.dtype(compute_dtype)
    x = jnp.transpose(x_nchw, (0, 2, 3, 1)).astype(cdt)            # NHWC, cdt
    n, h, w, cin = x.shape
    cout = params["w1"].shape[0]
    cin_p, cout_p = _ceil_to(cin, LANE), _ceil_to(cout, LANE)
    ho, wo = (h - 1) // stride + 1, (w - 1) // stride + 1
    m_img = ho * wo
    count = float(n * m_img)
    downsample = (stride != 1) or (cin != cout)
    assert wo % 8 == 0, "Wo must be a multiple of 8 (layout-free reshapes)"

    x_cp = _pad_channels(x, cin_p)                                  # cdt
    x_ph, hq, wq = _phase_decompose(x_cp, stride)
    w1f = _conv_weight_matrix(params["w1"], cin_p, cout_p, cdt)
    w2f = _conv_weight_matrix(params["w2"], cout_p, cout_p, cdt)

    def _vec(v):
        return _pad_channels(v.reshape(1, -1).astype(jnp.float32), cout_p)

    g1, b1 = _vec(params["g1"]), _vec(params["b1"])
    g2, b2 = _vec(params["g2"]), _vec(params["b2"])

    acts = jax.ShapeDtypeStruct((n, m_img, cout_p), cdt)
    stats_pi = jax.ShapeDtypeStruct((n, 8, cout_p), jnp.float32)
    img_spec = pl.BlockSpec((1, m_img, cout_p), lambda i: (i, 0, 0))
    st_out_spec = pl.BlockSpec((1, 8, cout_p), lambda i: (i, 0, 0))
    st_in_spec = pl.BlockSpec((8, cout_p), lambda i: (0, 0))
    vec_spec = pl.BlockSpec((1, cout_p), lambda i: (0, 0))
    xph_spec = pl.BlockSpec((1, stride * stride * hq, wq, cin_p),
                            lambda i: (i, 0, 0, 0))
    w1_spec = pl.BlockSpec(w1f.shape, lambda i: (0, 0))
    w2_spec = pl.BlockSpec(w2f.shape, lambda i: (0, 0))

    cparams = pltpu.CompilerParams(dimension_semantics=("parallel",),
                                   vmem_limit_bytes=_vmem_limit_bytes())

    # ---- pass 1: conv1 (+ shortcut conv) -> per-image BN partial stats ----
    conv1_kernel = _make_conv1_kernel(stride=stride, hq=hq, ho=ho, wo=wo,
                                      cin_p=cin_p, downsample=downsample)
    xcol1 = pltpu.VMEM((m_img, 9 * cin_p), cdt)
    if downsample:
        wsf = _conv_weight_matrix(params["ws"], cin_p, cout_p, cdt)
        gs, bs = _vec(params["gs"]), _vec(params["bs"])
        ws_spec = pl.BlockSpec(wsf.shape, lambda i: (0, 0))
        y1, s_pre, stats1, stats_s = pl.pallas_call(
            conv1_kernel, grid=(n,),
            in_specs=[xph_spec, w1_spec, ws_spec],
            out_specs=(img_spec, img_spec, st_out_spec, st_out_spec),
            out_shape=(acts, acts, stats_pi, stats_pi),
            scratch_shapes=[xcol1],
            compiler_params=cparams,
        )(x_ph, w1f, wsf)
        stats_s_tot = jnp.sum(stats_s, axis=0)
    else:
        y1, stats1 = pl.pallas_call(
            conv1_kernel, grid=(n,),
            in_specs=[xph_spec, w1_spec],
            out_specs=(img_spec, st_out_spec),
            out_shape=(acts, stats_pi),
            scratch_shapes=[xcol1],
            compiler_params=cparams,
        )(x_ph, w1f)
    stats1_tot = jnp.sum(stats1, axis=0)            # tiny (8, Cout_p) reduce

    # ---- pass 2: bn1+relu (fused) -> conv2 -> per-image BN partial stats ----
    conv2_kernel = _make_conv2_kernel(ho=ho, wo=wo, cout_p=cout_p, count=count)
    y2, stats2 = pl.pallas_call(
        conv2_kernel, grid=(n,),
        in_specs=[img_spec, st_in_spec, vec_spec, vec_spec, w2_spec],
        out_specs=(img_spec, st_out_spec),
        out_shape=(acts, stats_pi),
        scratch_shapes=[pltpu.VMEM((ho + 2, wo + 2, cout_p), cdt),
                        pltpu.VMEM((m_img, 9 * cout_p), cdt)],
        compiler_params=cparams,
    )(y1, stats1_tot, g1, b1, w2f)
    stats2_tot = jnp.sum(stats2, axis=0)

    # ---- pass 3: bn2 (+ shortcut-bn | identity) + add + relu, flat rows ----
    total_rows = n * m_img
    tr = _largest_row_block(total_rows)
    row_spec = pl.BlockSpec((tr, cout_p), lambda r: (r, 0))
    st_row_spec = pl.BlockSpec((8, cout_p), lambda r: (0, 0))
    vec_row_spec = pl.BlockSpec((1, cout_p), lambda r: (0, 0))

    fin_kernel = _make_finalize_kernel(count=count, downsample=downsample)
    y2_flat = y2.reshape(total_rows, cout_p)
    if downsample:
        args = (y2_flat, s_pre.reshape(total_rows, cout_p),
                stats2_tot, g2, b2, stats_s_tot, gs, bs)
        in_specs = [row_spec, row_spec, st_row_spec, vec_row_spec, vec_row_spec,
                    st_row_spec, vec_row_spec, vec_row_spec]
    else:
        # Identity residual: reuse the already channel-padded input
        # (cin_p == cout_p and Ho*Wo == H*W here) — no extra HBM pass.
        args = (y2_flat, x_cp.reshape(total_rows, cout_p), stats2_tot, g2, b2)
        in_specs = [row_spec, row_spec, st_row_spec, vec_row_spec, vec_row_spec]
    out = pl.pallas_call(
        fin_kernel, grid=(total_rows // tr,),
        in_specs=in_specs,
        out_specs=row_spec,
        out_shape=jax.ShapeDtypeStruct((total_rows, cout_p), jnp.float32),
        compiler_params=cparams,
    )(*args)

    out = out.reshape(n, ho, wo, cout_p)[:, :, :, :cout]
    return jnp.transpose(out, (0, 3, 1, 2))        # back to NCHW


# --------------------------- pure-JAX reference ---------------------------- #
def _reference(x, params, stride):
    def conv(a, w, s, p):
        return lax.conv_general_dilated(
            a, w, (s, s), [(p, p), (p, p)],
            dimension_numbers=("NCHW", "OIHW", "NCHW"))

    def bn(a, g, b):
        mean = jnp.mean(a, axis=(0, 2, 3), keepdims=True)
        var = jnp.mean(jnp.square(a - mean), axis=(0, 2, 3), keepdims=True)
        return ((a - mean) * lax.rsqrt(var + EPS)
                * g.reshape(1, -1, 1, 1) + b.reshape(1, -1, 1, 1))

    cin, cout = x.shape[1], params["w1"].shape[0]
    if stride != 1 or cin != cout:
        identity = bn(conv(x, params["ws"], stride, 0), params["gs"], params["bs"])
    else:
        identity = x
    y = jnp.maximum(bn(conv(x, params["w1"], stride, 1),
                       params["g1"], params["b1"]), 0.0)
    y = bn(conv(y, params["w2"], 1, 1), params["g2"], params["b2"])
    return jnp.maximum(y + identity, 0.0)


if __name__ == "__main__":
    key = jax.random.PRNGKey(0)

    def make_params(k, cin, cout, downsample):
        ks = jax.random.split(k, 10)
        p = {
            "w1": 0.2 * jax.random.normal(ks[1], (cout, cin, 3, 3), jnp.float32),
            "g1": 1.0 + 0.1 * jax.random.normal(ks[2], (cout,), jnp.float32),
            "b1": 0.1 * jax.random.normal(ks[3], (cout,), jnp.float32),
            "w2": 0.2 * jax.random.normal(ks[4], (cout, cout, 3, 3), jnp.float32),
            "g2": 1.0 + 0.1 * jax.random.normal(ks[5], (cout,), jnp.float32),
            "b2": 0.1 * jax.random.normal(ks[6], (cout,), jnp.float32),
        }
        if downsample:
            p["ws"] = 0.2 * jax.random.normal(ks[7], (cout, cin, 1, 1), jnp.float32)
            p["gs"] = 1.0 + 0.1 * jax.random.normal(ks[8], (cout,), jnp.float32)
            p["bs"] = 0.1 * jax.random.normal(ks[9], (cout,), jnp.float32)
        return p

    k1, k2, k3, k4 = jax.random.split(key, 4)

    # config A: stride-2 downsample block, f32 compute path, strict check -----
    n, cin, cout, hw, stride = 2, 4, 8, 16, 2
    x = jax.random.normal(k1, (n, cin, hw, hw), jnp.float32)
    params = make_params(k2, cin, cout, True)
    fwd = jax.jit(functools.partial(basic_block_forward, stride=stride,
                                    compute_dtype=jnp.float32))
    out = jax.block_until_ready(fwd(x, params))
    ref = _reference(x, params, stride)
    assert out.shape == (n, cout, hw // stride, hw // stride), out.shape
    assert jnp.allclose(out, ref, rtol=2e-4, atol=2e-4), \
        float(jnp.max(jnp.abs(out - ref)))

    # config B: stride-1 identity block, default bf16 MXU/storage path --------
    # Compared against the f32 reference evaluated on bf16-rounded inputs so the
    # check isolates kernel math from input quantisation; the remaining delta is
    # the in-kernel bf16 rounding of the intermediate activations.
    n, c, hw, stride = 2, 8, 16, 1
    xb = jax.random.normal(k3, (n, c, hw, hw), jnp.float32)
    pb = make_params(k4, c, c, False)
    xq = xb.astype(jnp.bfloat16).astype(jnp.float32)
    pq = {k: v.astype(jnp.bfloat16).astype(jnp.float32) for k, v in pb.items()}
    fwd_bf16 = jax.jit(functools.partial(basic_block_forward, stride=stride,
                                         compute_dtype=jnp.bfloat16))
    out_b = jax.block_until_ready(fwd_bf16(xq, pq))
    ref_b = _reference(xq, pq, stride)
    assert out_b.shape == (n, c, hw, hw), out_b.shape
    assert jnp.allclose(out_b, ref_b, rtol=6e-2, atol=6e-2), \
        float(jnp.max(jnp.abs(out_b - ref_b)))

    print("KERNEL_OK")
</pallas_src>

<mosaic_0001>
module attributes {stable_mosaic.version = 11 : i64} {
  func.func @kernel(%arg0: i32, %arg1: memref<1x36x9x128xf32, #tpu.memory_space<vmem>>, %arg2: memref<1152x128xf32, #tpu.memory_space<vmem>>, %arg3: memref<128x128xf32, #tpu.memory_space<vmem>>, %arg4: memref<1x64x128xf32, #tpu.memory_space<vmem>>, %arg5: memref<1x64x128xf32, #tpu.memory_space<vmem>>, %arg6: memref<1x8x128xf32, #tpu.memory_space<vmem>>, %arg7: memref<1x8x128xf32, #tpu.memory_space<vmem>>, %arg8: memref<64x1152xf32, #tpu.memory_space<vmem>>) attributes {dimension_semantics = [#tpu.dimension_semantics<parallel>], iteration_bounds = array<i64: 2>, scalar_prefetch = 0 : i64, scratch_operands = 1 : i64, tpu.core_type = #tpu.core_type<tc>, window_params = [{transform_indices = @transform_0, window_bounds = array<i64: 1, 36, 9, 128>}, {pipeline_mode = #tpu.pipeline_mode<synchronous>, transform_indices = @transform_1, window_bounds = array<i64: 1152, 128>}, {pipeline_mode = #tpu.pipeline_mode<synchronous>, transform_indices = @transform_2, window_bounds = array<i64: 128, 128>}, {transform_indices = @transform_3, window_bounds = array<i64: 1, 64, 128>}, {transform_indices = @transform_4, window_bounds = array<i64: 1, 64, 128>}, {transform_indices = @transform_5, window_bounds = array<i64: 1, 8, 128>}, {transform_indices = @transform_6, window_bounds = array<i64: 1, 8, 128>}]} {
    %c0 = arith.constant 0 : index
    %c0_0 = arith.constant 0 : index
    %c0_1 = arith.constant 0 : index
    %c0_2 = arith.constant 0 : index
    %0 = vector.load %arg1[%c0, %c0_0, %c0_1, %c0_2] : memref<1x36x9x128xf32, #tpu.memory_space<vmem>>, vector<1x8x8x128xf32>
    %1 = vector.shape_cast %0 : vector<1x8x8x128xf32> to vector<8x8x128xf32>
    %2 = vector.shape_cast %1 : vector<8x8x128xf32> to vector<64x128xf32>
    %c0_3 = arith.constant 0 : index
    %c0_4 = arith.constant 0 : index
    %3 = vector.load %arg8[%c0_3, %c0_4] : memref<64x1152xf32, #tpu.memory_space<vmem>>, vector<64x128xf32>
    tpu.vector_store %arg8[%c0_3, %c0_4], %2 {strides = array<i32>} : memref<64x1152xf32, #tpu.memory_space<vmem>>, vector<64x128xf32>,
    %c0_5 = arith.constant 0 : index
    %c9 = arith.constant 9 : index
    %c0_6 = arith.constant 0 : index
    %c0_7 = arith.constant 0 : index
    %4 = vector.load %arg1[%c0_5, %c9, %c0_6, %c0_7] : memref<1x36x9x128xf32, #tpu.memory_space<vmem>>, vector<1x8x8x128xf32>
    %5 = vector.shape_cast %4 : vector<1x8x8x128xf32> to vector<8x8x128xf32>
    %6 = vector.shape_cast %5 : vector<8x8x128xf32> to vector<64x128xf32>
    %c0_8 = arith.constant 0 : index
    %c128 = arith.constant 128 : index
    %7 = vector.load %arg8[%c0_8, %c128] : memref<64x1152xf32, #tpu.memory_space<vmem>>, vector<64x128xf32>
    tpu.vector_store %arg8[%c0_8, %c128], %6 {strides = array<i32>} : memref<64x1152xf32, #tpu.memory_space<vmem>>, vector<64x128xf32>,
    %c0_9 = arith.constant 0 : index
    %c0_10 = arith.constant 0 : index
    %c1 = arith.constant 1 : index
    %c0_11 = arith.constant 0 : index
    %8 = vector.load %arg1[%c0_9, %c0_10, %c1, %c0_11] : memref<1x36x9x128xf32, #tpu.memory_space<vmem>>, vector<1x8x8x128xf32>
    %9 = vector.shape_cast %8 : vector<1x8x8x128xf32> to vector<8x8x128xf32>
    %10 = vector.shape_cast %9 : vector<8x8x128xf32> to vector<64x128xf32>
    %c0_12 = arith.constant 0 : index
    %c256 = arith.constant 256 : index
    %11 = vector.load %arg8[%c0_12, %c256] : memref<64x1152xf32, #tpu.memory_space<vmem>>, vector<64x128xf32>
    tpu.vector_store %arg8[%c0_12, %c256], %10 {strides = array<i32>} : memref<64x1152xf32, #tpu.memory_space<vmem>>, vector<64x128xf32>,
    %c0_13 = arith.constant 0 : index
    %c18 = arith.constant 18 : index
    %c0_14 = arith.constant 0 : index
    %c0_15 = arith.constant 0 : index
    %12 = vector.load %arg1[%c0_13, %c18, %c0_14, %c0_15] : memref<1x36x9x128xf32, #tpu.memory_space<vmem>>, vector<1x8x8x128xf32>
    %13 = vector.shape_cast %12 : vector<1x8x8x128xf32> to vector<8x8x128xf32>
    %14 = vector.shape_cast %13 : vector<8x8x128xf32> to vector<64x128xf32>
    %c0_16 = arith.constant 0 : index
    %c384 = arith.constant 384 : index
    %15 = vector.load %arg8[%c0_16, %c384] : memref<64x1152xf32, #tpu.memory_space<vmem>>, vector<64x128xf32>
    tpu.vector_store %arg8[%c0_16, %c384], %14 {strides = array<i32>} : memref<64x1152xf32, #tpu.memory_space<vmem>>, vector<64x128xf32>,
    %c0_17 = arith.constant 0 : index
    %c27 = arith.constant 27 : index
    %c0_18 = arith.constant 0 : index
    %c0_19 = arith.constant 0 : index
    %16 = vector.load %arg1[%c0_17, %c27, %c0_18, %c0_19] : memref<1x36x9x128xf32, #tpu.memory_space<vmem>>, vector<1x8x8x128xf32>
    %17 = vector.shape_cast %16 : vector<1x8x8x128xf32> to vector<8x8x128xf32>
    %18 = vector.shape_cast %17 : vector<8x8x128xf32> to vector<64x128xf32>
    %c0_20 = arith.constant 0 : index
    %c512 = arith.constant 512 : index
    %19 = vector.load %arg8[%c0_20, %c512] : memref<64x1152xf32, #tpu.memory_space<vmem>>, vector<64x128xf32>
    tpu.vector_store %arg8[%c0_20, %c512], %18 {strides = array<i32>} : memref<64x1152xf32, #tpu.memory_space<vmem>>, vector<64x128xf32>,
    %c0_21 = arith.constant 0 : index
    %c18_22 = arith.constant 18 : index
    %c1_23 = arith.constant 1 : index
    %c0_24 = arith.constant 0 : index
    %20 = vector.load %arg1[%c0_21, %c18_22, %c1_23, %c0_24] : memref<1x36x9x128xf32, #tpu.memory_space<vmem>>, vector<1x8x8x128xf32>
    %21 = vector.shape_cast %20 : vector<1x8x8x128xf32> to vector<8x8x128xf32>
    %22 = vector.shape_cast %21 : vector<8x8x128xf32> to vector<64x128xf32>
    %c0_25 = arith.constant 0 : index
    %c640 = arith.constant 640 : index
    %23 = vector.load %arg8[%c0_25, %c640] : memref<64x1152xf32, #tpu.memory_space<vmem>>, vector<64x128xf32>
    tpu.vector_store %arg8[%c0_25, %c640], %22 {strides = array<i32>} : memref<64x1152xf32, #tpu.memory_space<vmem>>, vector<64x128xf32>,
    %c0_26 = arith.constant 0 : index
    %c1_27 = arith.constant 1 : index
    %c0_28 = arith.constant 0 : index
    %c0_29 = arith.constant 0 : index
    %24 = vector.load %arg1[%c0_26, %c1_27, %c0_28, %c0_29] : memref<1x36x9x128xf32, #tpu.memory_space<vmem>>, vector<1x8x8x128xf32>
    %25 = vector.shape_cast %24 : vector<1x8x8x128xf32> to vector<8x8x128xf32>
    %26 = vector.shape_cast %25 : vector<8x8x128xf32> to vector<64x128xf32>
    %c0_30 = arith.constant 0 : index
    %c768 = arith.constant 768 : index
    %27 = vector.load %arg8[%c0_30, %c768] : memref<64x1152xf32, #tpu.memory_space<vmem>>, vector<64x128xf32>
    tpu.vector_store %arg8[%c0_30, %c768], %26 {strides = array<i32>} : memref<64x1152xf32, #tpu.memory_space<vmem>>, vector<64x128xf32>,
    %c0_31 = arith.constant 0 : index
    %c10 = arith.constant 10 : index
    %c0_32 = arith.constant 0 : index
    %c0_33 = arith.constant 0 : index
    %28 = vector.load %arg1[%c0_31, %c10, %c0_32, %c0_33] : memref<1x36x9x128xf32, #tpu.memory_space<vmem>>, vector<1x8x8x128xf32>
    %29 = vector.shape_cast %28 : vector<1x8x8x128xf32> to vector<8x8x128xf32>
    %30 = vector.shape_cast %29 : vector<8x8x128xf32> to vector<64x128xf32>
    %c0_34 = arith.constant 0 : index
    %c896 = arith.constant 896 : index
    %31 = vector.load %arg8[%c0_34, %c896] : memref<64x1152xf32, #tpu.memory_space<vmem>>, vector<64x128xf32>
    tpu.vector_store %arg8[%c0_34, %c896], %30 {strides = array<i32>} : memref<64x1152xf32, #tpu.memory_space<vmem>>, vector<64x128xf32>,
    %c0_35 = arith.constant 0 : index
    %c1_36 = arith.constant 1 : index
    %c1_37 = arith.constant 1 : index
    %c0_38 = arith.constant 0 : index
    %32 = vector.load %arg1[%c0_35, %c1_36, %c1_37, %c0_38] : memref<1x36x9x128xf32, #tpu.memory_space<vmem>>, vector<1x8x8x128xf32>
    %33 = vector.shape_cast %32 : vector<1x8x8x128xf32> to vector<8x8x128xf32>
    %34 = vector.shape_cast %33 : vector<8x8x128xf32> to vector<64x128xf32>
    %c0_39 = arith.constant 0 : index
    %c1024 = arith.constant 1024 : index
    %35 = vector.load %arg8[%c0_39, %c1024] : memref<64x1152xf32, #tpu.memory_space<vmem>>, vector<64x128xf32>
    tpu.vector_store %arg8[%c0_39, %c1024], %34 {strides = array<i32>} : memref<64x1152xf32, #tpu.memory_space<vmem>>, vector<64x128xf32>,
    %c0_40 = arith.constant 0 : index
    %c0_41 = arith.constant 0 : index
    %36 = vector.load %arg8[%c0_40, %c0_41] : memref<64x1152xf32, #tpu.memory_space<vmem>>, vector<64x1152xf32>
    %c0_42 = arith.constant 0 : index
    %c0_43 = arith.constant 0 : index
    %37 = vector.load %arg2[%c0_42, %c0_43] : memref<1152x128xf32, #tpu.memory_space<vmem>>, vector<1152x128xf32>
    %cst = arith.constant dense<0.000000e+00> : vector<64x128xf32>
    %38 = tpu.matmul %36, %37, %cst {dimension_numbers = #tpu.dot_dimension_numbers<[1], [0], [0], [1], [0, 0, 1, 1], [], []>} : vector<64x1152xf32>, vector<1152x128xf32>, vector<64x128xf32> -> vector<64x128xf32>
    %c0_44 = arith.constant 0 : index
    %c0_45 = arith.constant 0 : index
    %c0_46 = arith.constant 0 : index
    %39 = vector.load %arg4[%c0_44, %c0_45, %c0_46] : memref<1x64x128xf32, #tpu.memory_space<vmem>>, vector<1x64x128xf32>
    %40 = vector.shape_cast %39 : vector<1x64x128xf32> to vector<64x128xf32>
    %41 = vector.shape_cast %38 : vector<64x128xf32> to vector<1x64x128xf32>
    tpu.vector_store %arg4[%c0_44, %c0_45, %c0_46], %41 {strides = array<i32>} : memref<1x64x128xf32, #tpu.memory_space<vmem>>, vector<1x64x128xf32>,
    %cst_47 = arith.constant dense<0.000000e+00> : vector<128xf32>
    %42 = vector.multi_reduction <add>, %38, %cst_47 [0] : vector<64x128xf32> to vector<128xf32>
    %43 = vector.shape_cast %42 : vector<128xf32> to vector<1x128xf32>
    %44 = arith.mulf %38, %38 : vector<64x128xf32>
    %cst_48 = arith.constant dense<0.000000e+00> : vector<128xf32>
    %45 = vector.multi_reduction <add>, %44, %cst_48 [0] : vector<64x128xf32> to vector<128xf32>
    %46 = vector.shape_cast %45 : vector<128xf32> to vector<1x128xf32>
    %cst_49 = arith.constant 0.000000e+00 : f32
    %47 = vector.broadcast %cst_49 : f32 to vector<6x128xf32>
    %48 = tpu.concatenate %43, %46, %47 in 0 : vector<1x128xf32>, vector<1x128xf32>, vector<6x128xf32> -> vector<8x128xf32>
    %c0_50 = arith.constant 0 : index
    %c0_51 = arith.constant 0 : index
    %c0_52 = arith.constant 0 : index
    %49 = vector.load %arg6[%c0_50, %c0_51, %c0_52] : memref<1x8x128xf32, #tpu.memory_space<vmem>>, vector<1x8x128xf32>
    %50 = vector.shape_cast %49 : vector<1x8x128xf32> to vector<8x128xf32>
    %51 = vector.shape_cast %48 : vector<8x128xf32> to vector<1x8x128xf32>
    tpu.vector_store %arg6[%c0_50, %c0_51, %c0_52], %51 {strides = array<i32>} : memref<1x8x128xf32, #tpu.memory_space<vmem>>, vector<1x8x128xf32>,
    %c0_53 = arith.constant 0 : index
    %c512_54 = arith.constant 512 : index
    %52 = vector.load %arg8[%c0_53, %c512_54] : memref<64x1152xf32, #tpu.memory_space<vmem>>, vector<64x128xf32>
    %c0_55 = arith.constant 0 : index
    %c0_56 = arith.constant 0 : index
    %53 = vector.load %arg3[%c0_55, %c0_56] : memref<128x128xf32, #tpu.memory_space<vmem>>, vector<128x128xf32>
    %cst_57 = arith.constant dense<0.000000e+00> : vector<64x128xf32>
    %54 = tpu.matmul %52, %53, %cst_57 {dimension_numbers = #tpu.dot_dimension_numbers<[1], [0], [0], [1], [0, 0, 1, 1], [], []>} : vector<64x128xf32>, vector<128x128xf32>, vector<64x128xf32> -> vector<64x128xf32>
    %c0_58 = arith.constant 0 : index
    %c0_59 = arith.constant 0 : index
    %c0_60 = arith.constant 0 : index
    %55 = vector.load %arg5[%c0_58, %c0_59, %c0_60] : memref<1x64x128xf32, #tpu.memory_space<vmem>>, vector<1x64x128xf32>
    %56 = vector.shape_cast %55 : vector<1x64x128xf32> to vector<64x128xf32>
    %57 = vector.shape_cast %54 : vector<64x128xf32> to vector<1x64x128xf32>
    tpu.vector_store %arg5[%c0_58, %c0_59, %c0_60], %57 {strides = array<i32>} : memref<1x64x128xf32, #tpu.memory_space<vmem>>, vector<1x64x128xf32>,
    %cst_61 = arith.constant dense<0.000000e+00> : vector<128xf32>
    %58 = vector.multi_reduction <add>, %54, %cst_61 [0] : vector<64x128xf32> to vector<128xf32>
    %59 = vector.shape_cast %58 : vector<128xf32> to vector<1x128xf32>
    %60 = arith.mulf %54, %54 : vector<64x128xf32>
    %cst_62 = arith.constant dense<0.000000e+00> : vector<128xf32>
    %61 = vector.multi_reduction <add>, %60, %cst_62 [0] : vector<64x128xf32> to vector<128xf32>
    %62 = vector.shape_cast %61 : vector<128xf32> to vector<1x128xf32>
    %cst_63 = arith.constant 0.000000e+00 : f32
    %63 = vector.broadcast %cst_63 : f32 to vector<6x128xf32>
    %64 = tpu.concatenate %59, %62, %63 in 0 : vector<1x128xf32>, vector<1x128xf32>, vector<6x128xf32> -> vector<8x128xf32>
    %c0_64 = arith.constant 0 : index
    %c0_65 = arith.constant 0 : index
    %c0_66 = arith.constant 0 : index
    %65 = vector.load %arg7[%c0_64, %c0_65, %c0_66] : memref<1x8x128xf32, #tpu.memory_space<vmem>>, vector<1x8x128xf32>
    %66 = vector.shape_cast %65 : vector<1x8x128xf32> to vector<8x128xf32>
    %67 = vector.shape_cast %64 : vector<8x128xf32> to vector<1x8x128xf32>
    tpu.vector_store %arg7[%c0_64, %c0_65, %c0_66], %67 {strides = array<i32>} : memref<1x8x128xf32, #tpu.memory_space<vmem>>, vector<1x8x128xf32>,
    return
  }
  func.func @transform_0(%arg0: i32) -> (i32, i32, i32, i32) {
    %c0_i32 = arith.constant 0 : i32
    %c0_i32_0 = arith.constant 0 : i32
    %c0_i32_1 = arith.constant 0 : i32
    %c0_i32_2 = arith.constant 0 : i32
    return %arg0, %c0_i32, %c0_i32_0, %c0_i32_1 : i32, i32, i32, i32
  }
  func.func @transform_1(%arg0: i32) -> (i32, i32) {
    %c0_i32 = arith.constant 0 : i32
    %c0_i32_0 = arith.constant 0 : i32
    %c0_i32_1 = arith.constant 0 : i32
    return %c0_i32, %c0_i32_0 : i32, i32
  }
  func.func @transform_2(%arg0: i32) -> (i32, i32) {
    %c0_i32 = arith.constant 0 : i32
    %c0_i32_0 = arith.constant 0 : i32
    %c0_i32_1 = arith.constant 0 : i32
    return %c0_i32, %c0_i32_0 : i32, i32
  }
  func.func @transform_3(%arg0: i32) -> (i32, i32, i32) {
    %c0_i32 = arith.constant 0 : i32
    %c0_i32_0 = arith.constant 0 : i32
    %c0_i32_1 = arith.constant 0 : i32
    return %arg0, %c0_i32, %c0_i32_0 : i32, i32, i32
  }
  func.func @transform_4(%arg0: i32) -> (i32, i32, i32) {
    %c0_i32 = arith.constant 0 : i32
    %c0_i32_0 = arith.constant 0 : i32
    %c0_i32_1 = arith.constant 0 : i32
    return %arg0, %c0_i32, %c0_i32_0 : i32, i32, i32
  }
  func.func @transform_5(%arg0: i32) -> (i32, i32, i32) {
    %c0_i32 = arith.constant 0 : i32
    %c0_i32_0 = arith.constant 0 : i32
    %c0_i32_1 = arith.constant 0 : i32
    return %arg0, %c0_i32, %c0_i32_0 : i32, i32, i32
  }
  func.func @transform_6(%arg0: i32) -> (i32, i32, i32) {
    %c0_i32 = arith.constant 0 : i32
    %c0_i32_0 = arith.constant 0 : i32
    %c0_i32_1 = arith.constant 0 : i32
    return %arg0, %c0_i32, %c0_i32_0 : i32, i32, i32
  }
}

module attributes {stable_mosaic.version = 11 : i64} {
  func.func @kernel(%arg0: i32, %arg1: memref<128x128xf32, #tpu.memory_space<vmem>>, %arg2: memref<128x128xf32, #tpu.memory_space<vmem>>, %arg3: memref<8x128xf32, #tpu.memory_space<vmem>>, %arg4: memref<1x128xf32, #tpu.memory_space<vmem>>, %arg5: memref<1x128xf32, #tpu.memory_space<vmem>>, %arg6: memref<8x128xf32, #tpu.memory_space<vmem>>, %arg7: memref<1x128xf32, #tpu.memory_space<vmem>>, %arg8: memref<1x128xf32, #tpu.memory_space<vmem>>, %arg9: memref<128x128xf32, #tpu.memory_space<vmem>>) attributes {dimension_semantics = [#tpu.dimension_semantics<parallel>], iteration_bounds = array<i64: 1>, scalar_prefetch = 0 : i64, scratch_operands = 0 : i64, tpu.core_type = #tpu.core_type<tc>, window_params = [{transform_indices = @transform_0, window_bounds = array<i64: 128, 128>}, {transform_indices = @transform_1, window_bounds = array<i64: 128, 128>}, {pipeline_mode = #tpu.pipeline_mode<synchronous>, transform_indices = @transform_2, window_bounds = array<i64: 8, 128>}, {pipeline_mode = #tpu.pipeline_mode<synchronous>, transform_indices = @transform_3, window_bounds = array<i64: 1, 128>}, {pipeline_mode = #tpu.pipeline_mode<synchronous>, transform_indices = @transform_4, window_bounds = array<i64: 1, 128>}, {pipeline_mode = #tpu.pipeline_mode<synchronous>, transform_indices = @transform_5, window_bounds = array<i64: 8, 128>}, {pipeline_mode = #tpu.pipeline_mode<synchronous>, transform_indices = @transform_6, window_bounds = array<i64: 1, 128>}, {pipeline_mode = #tpu.pipeline_mode<synchronous>, transform_indices = @transform_7, window_bounds = array<i64: 1, 128>}, {transform_indices = @transform_8, window_bounds = array<i64: 128, 128>}]} {
    %c0 = arith.constant 0 : index
    %c0_0 = arith.constant 0 : index
    %0 = vector.load %arg3[%c0, %c0_0] : memref<8x128xf32, #tpu.memory_space<vmem>>, vector<1x128xf32>
    %cst = arith.constant 7.812500e-03 : f32
    %1 = vector.broadcast %cst : f32 to vector<1x128xf32>
    %2 = arith.mulf %0, %1 : vector<1x128xf32>
    %c1 = arith.constant 1 : index
    %c0_1 = arith.constant 0 : index
    %3 = vector.load %arg3[%c1, %c0_1] : memref<8x128xf32, #tpu.memory_space<vmem>>, vector<1x128xf32>
    %cst_2 = arith.constant 7.812500e-03 : f32
    %4 = vector.broadcast %cst_2 : f32 to vector<1x128xf32>
    %5 = arith.mulf %3, %4 : vector<1x128xf32>
    %6 = arith.mulf %2, %2 : vector<1x128xf32>
    %7 = arith.subf %5, %6 : vector<1x128xf32>
    %cst_3 = arith.constant 0.000000e+00 : f32
    %8 = vector.broadcast %cst_3 : f32 to vector<1x128xf32>
    %9 = arith.maximumf %7, %8 : vector<1x128xf32>
    %c0_4 = arith.constant 0 : index
    %c0_5 = arith.constant 0 : index
    %10 = vector.load %arg4[%c0_4, %c0_5] : memref<1x128xf32, #tpu.memory_space<vmem>>, vector<1x128xf32>
    %cst_6 = arith.constant 9.99999974E-6 : f32
    %11 = vector.broadcast %cst_6 : f32 to vector<1x128xf32>
    %12 = arith.addf %9, %11 : vector<1x128xf32>
    %13 = math.rsqrt %12 : vector<1x128xf32>
    %14 = arith.mulf %10, %13 : vector<1x128xf32>
    %c0_7 = arith.constant 0 : index
    %c0_8 = arith.constant 0 : index
    %15 = vector.load %arg5[%c0_7, %c0_8] : memref<1x128xf32, #tpu.memory_space<vmem>>, vector<1x128xf32>
    %16 = arith.mulf %2, %14 : vector<1x128xf32>
    %17 = arith.subf %15, %16 : vector<1x128xf32>
    %c0_9 = arith.constant 0 : index
    %c0_10 = arith.constant 0 : index
    %18 = vector.load %arg1[%c0_9, %c0_10] : memref<128x128xf32, #tpu.memory_space<vmem>>, vector<128x128xf32>
    %19 = vector.broadcast %14 : vector<1x128xf32> to vector<128x128xf32>
    %20 = arith.mulf %18, %19 : vector<128x128xf32>
    %21 = vector.broadcast %17 : vector<1x128xf32> to vector<128x128xf32>
    %22 = arith.addf %20, %21 : vector<128x128xf32>
    %c0_11 = arith.constant 0 : index
    %c0_12 = arith.constant 0 : index
    %23 = vector.load %arg6[%c0_11, %c0_12] : memref<8x128xf32, #tpu.memory_space<vmem>>, vector<1x128xf32>
    %cst_13 = arith.constant 7.812500e-03 : f32
    %24 = vector.broadcast %cst_13 : f32 to vector<1x128xf32>
    %25 = arith.mulf %23, %24 : vector<1x128xf32>
    %c1_14 = arith.constant 1 : index
    %c0_15 = arith.constant 0 : index
    %26 = vector.load %arg6[%c1_14, %c0_15] : memref<8x128xf32, #tpu.memory_space<vmem>>, vector<1x128xf32>
    %cst_16 = arith.constant 7.812500e-03 : f32
    %27 = vector.broadcast %cst_16 : f32 to vector<1x128xf32>
    %28 = arith.mulf %26, %27 : vector<1x128xf32>
    %29 = arith.mulf %25, %25 : vector<1x128xf32>
    %30 = arith.subf %28, %29 : vector<1x128xf32>
    %cst_17 = arith.constant 0.000000e+00 : f32
    %31 = vector.broadcast %cst_17 : f32 to vector<1x128xf32>
    %32 = arith.maximumf %30, %31 : vector<1x128xf32>
    %c0_18 = arith.constant 0 : index
    %c0_19 = arith.constant 0 : index
    %33 = vector.load %arg7[%c0_18, %c0_19] : memref<1x128xf32, #tpu.memory_space<vmem>>, vector<1x128xf32>
    %cst_20 = arith.constant 9.99999974E-6 : f32
    %34 = vector.broadcast %cst_20 : f32 to vector<1x128xf32>
    %35 = arith.addf %32, %34 : vector<1x128xf32>
    %36 = math.rsqrt %35 : vector<1x128xf32>
    %37 = arith.mulf %33, %36 : vector<1x128xf32>
    %c0_21 = arith.constant 0 : index
    %c0_22 = arith.constant 0 : index
    %38 = vector.load %arg8[%c0_21, %c0_22] : memref<1x128xf32, #tpu.memory_space<vmem>>, vector<1x128xf32>
    %39 = arith.mulf %25, %37 : vector<1x128xf32>
    %40 = arith.subf %38, %39 : vector<1x128xf32>
    %c0_23 = arith.constant 0 : index
    %c0_24 = arith.constant 0 : index
    %41 = vector.load %arg2[%c0_23, %c0_24] : memref<128x128xf32, #tpu.memory_space<vmem>>, vector<128x128xf32>
    %42 = vector.broadcast %37 : vector<1x128xf32> to vector<128x128xf32>
    %43 = arith.mulf %41, %42 : vector<128x128xf32>
    %44 = vector.broadcast %40 : vector<1x128xf32> to vector<128x128xf32>
    %45 = arith.addf %43, %44 : vector<128x128xf32>
    %46 = arith.addf %22, %45 : vector<128x128xf32>
    %cst_25 = arith.constant 0.000000e+00 : f32
    %47 = vector.broadcast %cst_25 : f32 to vector<128x128xf32>
    %48 = arith.maximumf %46, %47 : vector<128x128xf32>
    %c0_26 = arith.constant 0 : index
    %c0_27 = arith.constant 0 : index
    %49 = vector.load %arg9[%c0_26, %c0_27] : memref<128x128xf32, #tpu.memory_space<vmem>>, vector<128x128xf32>
    tpu.vector_store %arg9[%c0_26, %c0_27], %48 {strides = array<i32>} : memref<128x128xf32, #tpu.memory_space<vmem>>, vector<128x128xf32>,
    return
  }
  func.func @transform_0(%arg0: i32) -> (i32, i32) {
    %c0_i32 = arith.constant 0 : i32
    %c0_i32_0 = arith.constant 0 : i32
    return %arg0, %c0_i32 : i32, i32
  }
  func.func @transform_1(%arg0: i32) -> (i32, i32) {
    %c0_i32 = arith.constant 0 : i32
    %c0_i32_0 = arith.constant 0 : i32
    return %arg0, %c0_i32 : i32, i32
  }
  func.func @transform_2(%arg0: i32) -> (i32, i32) {
    %c0_i32 = arith.constant 0 : i32
    %c0_i32_0 = arith.constant 0 : i32
    %c0_i32_1 = arith.constant 0 : i32
    return %c0_i32, %c0_i32_0 : i32, i32
  }
  func.func @transform_3(%arg0: i32) -> (i32, i32) {
    %c0_i32 = arith.constant 0 : i32
    %c0_i32_0 = arith.constant 0 : i32
    %c0_i32_1 = arith.constant 0 : i32
    return %c0_i32, %c0_i32_0 : i32, i32
  }
  func.func @transform_4(%arg0: i32) -> (i32, i32) {
    %c0_i32 = arith.constant 0 : i32
    %c0_i32_0 = arith.constant 0 : i32
    %c0_i32_1 = arith.constant 0 : i32
    return %c0_i32, %c0_i32_0 : i32, i32
  }
  func.func @transform_5(%arg0: i32) -> (i32, i32) {
    %c0_i32 = arith.constant 0 : i32
    %c0_i32_0 = arith.constant 0 : i32
    %c0_i32_1 = arith.constant 0 : i32
    return %c0_i32, %c0_i32_0 : i32, i32
  }
  func.func @transform_6(%arg0: i32) -> (i32, i32) {
    %c0_i32 = arith.constant 0 : i32
    %c0_i32_0 = arith.constant 0 : i32
    %c0_i32_1 = arith.constant 0 : i32
    return %c0_i32, %c0_i32_0 : i32, i32
  }
  func.func @transform_7(%arg0: i32) -> (i32, i32) {
    %c0_i32 = arith.constant 0 : i32
    %c0_i32_0 = arith.constant 0 : i32
    %c0_i32_1 = arith.constant 0 : i32
    return %c0_i32, %c0_i32_0 : i32, i32
  }
  func.func @transform_8(%arg0: i32) -> (i32, i32) {
    %c0_i32 = arith.constant 0 : i32
    %c0_i32_0 = arith.constant 0 : i32
    return %arg0, %c0_i32 : i32, i32
  }
}

module attributes {stable_mosaic.version = 11 : i64} {
  func.func @kernel(%arg0: i32, %arg1: memref<1x64x128xf32, #tpu.memory_space<vmem>>, %arg2: memref<8x128xf32, #tpu.memory_space<vmem>>, %arg3: memref<1x128xf32, #tpu.memory_space<vmem>>, %arg4: memref<1x128xf32, #tpu.memory_space<vmem>>, %arg5: memref<1152x128xf32, #tpu.memory_space<vmem>>, %arg6: memref<1x64x128xf32, #tpu.memory_space<vmem>>, %arg7: memref<1x8x128xf32, #tpu.memory_space<vmem>>, %arg8: memref<10x10x128xf32, #tpu.memory_space<vmem>>, %arg9: memref<64x1152xf32, #tpu.memory_space<vmem>>) attributes {dimension_semantics = [#tpu.dimension_semantics<parallel>], iteration_bounds = array<i64: 2>, scalar_prefetch = 0 : i64, scratch_operands = 2 : i64, tpu.core_type = #tpu.core_type<tc>, window_params = [{transform_indices = @transform_0, window_bounds = array<i64: 1, 64, 128>}, {pipeline_mode = #tpu.pipeline_mode<synchronous>, transform_indices = @transform_1, window_bounds = array<i64: 8, 128>}, {pipeline_mode = #tpu.pipeline_mode<synchronous>, transform_indices = @transform_2, window_bounds = array<i64: 1, 128>}, {pipeline_mode = #tpu.pipeline_mode<synchronous>, transform_indices = @transform_3, window_bounds = array<i64: 1, 128>}, {pipeline_mode = #tpu.pipeline_mode<synchronous>, transform_indices = @transform_4, window_bounds = array<i64: 1152, 128>}, {transform_indices = @transform_5, window_bounds = array<i64: 1, 64, 128>}, {transform_indices = @transform_6, window_bounds = array<i64: 1, 8, 128>}]} {
    %c0 = arith.constant 0 : index
    %c0_0 = arith.constant 0 : index
    %0 = vector.load %arg2[%c0, %c0_0] : memref<8x128xf32, #tpu.memory_space<vmem>>, vector<1x128xf32>
    %cst = arith.constant 7.812500e-03 : f32
    %1 = vector.broadcast %cst : f32 to vector<1x128xf32>
    %2 = arith.mulf %0, %1 : vector<1x128xf32>
    %c1 = arith.constant 1 : index
    %c0_1 = arith.constant 0 : index
    %3 = vector.load %arg2[%c1, %c0_1] : memref<8x128xf32, #tpu.memory_space<vmem>>, vector<1x128xf32>
    %cst_2 = arith.constant 7.812500e-03 : f32
    %4 = vector.broadcast %cst_2 : f32 to vector<1x128xf32>
    %5 = arith.mulf %3, %4 : vector<1x128xf32>
    %6 = arith.mulf %2, %2 : vector<1x128xf32>
    %7 = arith.subf %5, %6 : vector<1x128xf32>
    %cst_3 = arith.constant 0.000000e+00 : f32
    %8 = vector.broadcast %cst_3 : f32 to vector<1x128xf32>
    %9 = arith.maximumf %7, %8 : vector<1x128xf32>
    %c0_4 = arith.constant 0 : index
    %c0_5 = arith.constant 0 : index
    %10 = vector.load %arg3[%c0_4, %c0_5] : memref<1x128xf32, #tpu.memory_space<vmem>>, vector<1x128xf32>
    %cst_6 = arith.constant 9.99999974E-6 : f32
    %11 = vector.broadcast %cst_6 : f32 to vector<1x128xf32>
    %12 = arith.addf %9, %11 : vector<1x128xf32>
    %13 = math.rsqrt %12 : vector<1x128xf32>
    %14 = arith.mulf %10, %13 : vector<1x128xf32>
    %c0_7 = arith.constant 0 : index
    %c0_8 = arith.constant 0 : index
    %15 = vector.load %arg4[%c0_7, %c0_8] : memref<1x128xf32, #tpu.memory_space<vmem>>, vector<1x128xf32>
    %16 = arith.mulf %2, %14 : vector<1x128xf32>
    %17 = arith.subf %15, %16 : vector<1x128xf32>
    %c0_9 = arith.constant 0 : index
    %c0_10 = arith.constant 0 : index
    %c0_11 = arith.constant 0 : index
    %18 = vector.load %arg1[%c0_9, %c0_10, %c0_11] : memref<1x64x128xf32, #tpu.memory_space<vmem>>, vector<1x64x128xf32>
    %19 = vector.shape_cast %18 : vector<1x64x128xf32> to vector<64x128xf32>
    %20 = vector.broadcast %14 : vector<1x128xf32> to vector<64x128xf32>
    %21 = arith.mulf %19, %20 : vector<64x128xf32>
    %22 = vector.broadcast %17 : vector<1x128xf32> to vector<64x128xf32>
    %23 = arith.addf %21, %22 : vector<64x128xf32>
    %cst_12 = arith.constant 0.000000e+00 : f32
    %24 = vector.broadcast %cst_12 : f32 to vector<64x128xf32>
    %25 = arith.maximumf %23, %24 : vector<64x128xf32>
    %cst_13 = arith.constant 0.000000e+00 : f32
    %26 = vector.broadcast %cst_13 : f32 to vector<10x10x128xf32>
    %c0_14 = arith.constant 0 : index
    %c0_15 = arith.constant 0 : index
    %c0_16 = arith.constant 0 : index
    %27 = vector.load %arg8[%c0_14, %c0_15, %c0_16] : memref<10x10x128xf32, #tpu.memory_space<vmem>>, vector<10x10x128xf32>
    tpu.vector_store %arg8[%c0_14, %c0_15, %c0_16], %26 {strides = array<i32>} : memref<10x10x128xf32, #tpu.memory_space<vmem>>, vector<10x10x128xf32>,
    %28 = vector.shape_cast %25 : vector<64x128xf32> to vector<8x8x128xf32>
    %c1_17 = arith.constant 1 : index
    %c1_18 = arith.constant 1 : index
    %c0_19 = arith.constant 0 : index
    %29 = vector.load %arg8[%c1_17, %c1_18, %c0_19] : memref<10x10x128xf32, #tpu.memory_space<vmem>>, vector<8x8x128xf32>
    tpu.vector_store %arg8[%c1_17, %c1_18, %c0_19], %28 {strides = array<i32>} : memref<10x10x128xf32, #tpu.memory_space<vmem>>, vector<8x8x128xf32>,
    %c0_20 = arith.constant 0 : index
    %c0_21 = arith.constant 0 : index
    %c0_22 = arith.constant 0 : index
    %30 = vector.load %arg8[%c0_20, %c0_21, %c0_22] : memref<10x10x128xf32, #tpu.memory_space<vmem>>, vector<8x8x128xf32>
    %31 = vector.shape_cast %30 : vector<8x8x128xf32> to vector<64x128xf32>
    %c0_23 = arith.constant 0 : index
    %c0_24 = arith.constant 0 : index
    %32 = vector.load %arg9[%c0_23, %c0_24] : memref<64x1152xf32, #tpu.memory_space<vmem>>, vector<64x128xf32>
    tpu.vector_store %arg9[%c0_23, %c0_24], %31 {strides = array<i32>} : memref<64x1152xf32, #tpu.memory_space<vmem>>, vector<64x128xf32>,
    %c0_25 = arith.constant 0 : index
    %c1_26 = arith.constant 1 : index
    %c0_27 = arith.constant 0 : index
    %33 = vector.load %arg8[%c0_25, %c1_26, %c0_27] : memref<10x10x128xf32, #tpu.memory_space<vmem>>, vector<8x8x128xf32>
    %34 = vector.shape_cast %33 : vector<8x8x128xf32> to vector<64x128xf32>
    %c0_28 = arith.constant 0 : index
    %c128 = arith.constant 128 : index
    %35 = vector.load %arg9[%c0_28, %c128] : memref<64x1152xf32, #tpu.memory_space<vmem>>, vector<64x128xf32>
    tpu.vector_store %arg9[%c0_28, %c128], %34 {strides = array<i32>} : memref<64x1152xf32, #tpu.memory_space<vmem>>, vector<64x128xf32>,
    %c0_29 = arith.constant 0 : index
    %c2 = arith.constant 2 : index
    %c0_30 = arith.constant 0 : index
    %36 = vector.load %arg8[%c0_29, %c2, %c0_30] : memref<10x10x128xf32, #tpu.memory_space<vmem>>, vector<8x8x128xf32>
    %37 = vector.shape_cast %36 : vector<8x8x128xf32> to vector<64x128xf32>
    %c0_31 = arith.constant 0 : index
    %c256 = arith.constant 256 : index
    %38 = vector.load %arg9[%c0_31, %c256] : memref<64x1152xf32, #tpu.memory_space<vmem>>, vector<64x128xf32>
    tpu.vector_store %arg9[%c0_31, %c256], %37 {strides = array<i32>} : memref<64x1152xf32, #tpu.memory_space<vmem>>, vector<64x128xf32>,
    %c1_32 = arith.constant 1 : index
    %c0_33 = arith.constant 0 : index
    %c0_34 = arith.constant 0 : index
    %39 = vector.load %arg8[%c1_32, %c0_33, %c0_34] : memref<10x10x128xf32, #tpu.memory_space<vmem>>, vector<8x8x128xf32>
    %40 = vector.shape_cast %39 : vector<8x8x128xf32> to vector<64x128xf32>
    %c0_35 = arith.constant 0 : index
    %c384 = arith.constant 384 : index
    %41 = vector.load %arg9[%c0_35, %c384] : memref<64x1152xf32, #tpu.memory_space<vmem>>, vector<64x128xf32>
    tpu.vector_store %arg9[%c0_35, %c384], %40 {strides = array<i32>} : memref<64x1152xf32, #tpu.memory_space<vmem>>, vector<64x128xf32>,
    %c1_36 = arith.constant 1 : index
    %c1_37 = arith.constant 1 : index
    %c0_38 = arith.constant 0 : index
    %42 = vector.load %arg8[%c1_36, %c1_37, %c0_38] : memref<10x10x128xf32, #tpu.memory_space<vmem>>, vector<8x8x128xf32>
    %43 = vector.shape_cast %42 : vector<8x8x128xf32> to vector<64x128xf32>
    %c0_39 = arith.constant 0 : index
    %c512 = arith.constant 512 : index
    %44 = vector.load %arg9[%c0_39, %c512] : memref<64x1152xf32, #tpu.memory_space<vmem>>, vector<64x128xf32>
    tpu.vector_store %arg9[%c0_39, %c512], %43 {strides = array<i32>} : memref<64x1152xf32, #tpu.memory_space<vmem>>, vector<64x128xf32>,
    %c1_40 = arith.constant 1 : index
    %c2_41 = arith.constant 2 : index
    %c0_42 = arith.constant 0 : index
    %45 = vector.load %arg8[%c1_40, %c2_41, %c0_42] : memref<10x10x128xf32, #tpu.memory_space<vmem>>, vector<8x8x128xf32>
    %46 = vector.shape_cast %45 : vector<8x8x128xf32> to vector<64x128xf32>
    %c0_43 = arith.constant 0 : index
    %c640 = arith.constant 640 : index
    %47 = vector.load %arg9[%c0_43, %c640] : memref<64x1152xf32, #tpu.memory_space<vmem>>, vector<64x128xf32>
    tpu.vector_store %arg9[%c0_43, %c640], %46 {strides = array<i32>} : memref<64x1152xf32, #tpu.memory_space<vmem>>, vector<64x128xf32>,
    %c2_44 = arith.constant 2 : index
    %c0_45 = arith.constant 0 : index
    %c0_46 = arith.constant 0 : index
    %48 = vector.load %arg8[%c2_44, %c0_45, %c0_46] : memref<10x10x128xf32, #tpu.memory_space<vmem>>, vector<8x8x128xf32>
    %49 = vector.shape_cast %48 : vector<8x8x128xf32> to vector<64x128xf32>
    %c0_47 = arith.constant 0 : index
    %c768 = arith.constant 768 : index
    %50 = vector.load %arg9[%c0_47, %c768] : memref<64x1152xf32, #tpu.memory_space<vmem>>, vector<64x128xf32>
    tpu.vector_store %arg9[%c0_47, %c768], %49 {strides = array<i32>} : memref<64x1152xf32, #tpu.memory_space<vmem>>, vector<64x128xf32>,
    %c2_48 = arith.constant 2 : index
    %c1_49 = arith.constant 1 : index
    %c0_50 = arith.constant 0 : index
    %51 = vector.load %arg8[%c2_48, %c1_49, %c0_50] : memref<10x10x128xf32, #tpu.memory_space<vmem>>, vector<8x8x128xf32>
    %52 = vector.shape_cast %51 : vector<8x8x128xf32> to vector<64x128xf32>
    %c0_51 = arith.constant 0 : index
    %c896 = arith.constant 896 : index
    %53 = vector.load %arg9[%c0_51, %c896] : memref<64x1152xf32, #tpu.memory_space<vmem>>, vector<64x128xf32>
    tpu.vector_store %arg9[%c0_51, %c896], %52 {strides = array<i32>} : memref<64x1152xf32, #tpu.memory_space<vmem>>, vector<64x128xf32>,
    %c2_52 = arith.constant 2 : index
    %c2_53 = arith.constant 2 : index
    %c0_54 = arith.constant 0 : index
    %54 = vector.load %arg8[%c2_52, %c2_53, %c0_54] : memref<10x10x128xf32, #tpu.memory_space<vmem>>, vector<8x8x128xf32>
    %55 = vector.shape_cast %54 : vector<8x8x128xf32> to vector<64x128xf32>
    %c0_55 = arith.constant 0 : index
    %c1024 = arith.constant 1024 : index
    %56 = vector.load %arg9[%c0_55, %c1024] : memref<64x1152xf32, #tpu.memory_space<vmem>>, vector<64x128xf32>
    tpu.vector_store %arg9[%c0_55, %c1024], %55 {strides = array<i32>} : memref<64x1152xf32, #tpu.memory_space<vmem>>, vector<64x128xf32>,
    %c0_56 = arith.constant 0 : index
    %c0_57 = arith.constant 0 : index
    %57 = vector.load %arg9[%c0_56, %c0_57] : memref<64x1152xf32, #tpu.memory_space<vmem>>, vector<64x1152xf32>
    %c0_58 = arith.constant 0 : index
    %c0_59 = arith.constant 0 : index
    %58 = vector.load %arg5[%c0_58, %c0_59] : memref<1152x128xf32, #tpu.memory_space<vmem>>, vector<1152x128xf32>
    %cst_60 = arith.constant dense<0.000000e+00> : vector<64x128xf32>
    %59 = tpu.matmul %57, %58, %cst_60 {dimension_numbers = #tpu.dot_dimension_numbers<[1], [0], [0], [1], [0, 0, 1, 1], [], []>} : vector<64x1152xf32>, vector<1152x128xf32>, vector<64x128xf32> -> vector<64x128xf32>
    %c0_61 = arith.constant 0 : index
    %c0_62 = arith.constant 0 : index
    %c0_63 = arith.constant 0 : index
    %60 = vector.load %arg6[%c0_61, %c0_62, %c0_63] : memref<1x64x128xf32, #tpu.memory_space<vmem>>, vector<1x64x128xf32>
    %61 = vector.shape_cast %60 : vector<1x64x128xf32> to vector<64x128xf32>
    %62 = vector.shape_cast %59 : vector<64x128xf32> to vector<1x64x128xf32>
    tpu.vector_store %arg6[%c0_61, %c0_62, %c0_63], %62 {strides = array<i32>} : memref<1x64x128xf32, #tpu.memory_space<vmem>>, vector<1x64x128xf32>,
    %cst_64 = arith.constant dense<0.000000e+00> : vector<128xf32>
    %63 = vector.multi_reduction <add>, %59, %cst_64 [0] : vector<64x128xf32> to vector<128xf32>
    %64 = vector.shape_cast %63 : vector<128xf32> to vector<1x128xf32>
    %65 = arith.mulf %59, %59 : vector<64x128xf32>
    %cst_65 = arith.constant dense<0.000000e+00> : vector<128xf32>
    %66 = vector.multi_reduction <add>, %65, %cst_65 [0] : vector<64x128xf32> to vector<128xf32>
    %67 = vector.shape_cast %66 : vector<128xf32> to vector<1x128xf32>
    %cst_66 = arith.constant 0.000000e+00 : f32
    %68 = vector.broadcast %cst_66 : f32 to vector<6x128xf32>
    %69 = tpu.concatenate %64, %67, %68 in 0 : vector<1x128xf32>, vector<1x128xf32>, vector<6x128xf32> -> vector<8x128xf32>
    %c0_67 = arith.constant 0 : index
    %c0_68 = arith.constant 0 : index
    %c0_69 = arith.constant 0 : index
    %70 = vector.load %arg7[%c0_67, %c0_68, %c0_69] : memref<1x8x128xf32, #tpu.memory_space<vmem>>, vector<1x8x128xf32>
    %71 = vector.shape_cast %70 : vector<1x8x128xf32> to vector<8x128xf32>
    %72 = vector.shape_cast %69 : vector<8x128xf32> to vector<1x8x128xf32>
    tpu.vector_store %arg7[%c0_67, %c0_68, %c0_69], %72 {strides = array<i32>} : memref<1x8x128xf32, #tpu.memory_space<vmem>>, vector<1x8x128xf32>,
    return
  }
  func.func @transform_0(%arg0: i32) -> (i32, i32, i32) {
    %c0_i32 = arith.constant 0 : i32
    %c0_i32_0 = arith.constant 0 : i32
    %c0_i32_1 = arith.constant 0 : i32
    return %arg0, %c0_i32, %c0_i32_0 : i32, i32, i32
  }
  func.func @transform_1(%arg0: i32) -> (i32, i32) {
    %c0_i32 = arith.constant 0 : i32
    %c0_i32_0 = arith.constant 0 : i32
    %c0_i32_1 = arith.constant 0 : i32
    return %c0_i32, %c0_i32_0 : i32, i32
  }
  func.func @transform_2(%arg0: i32) -> (i32, i32) {
    %c0_i32 = arith.constant 0 : i32
    %c0_i32_0 = arith.constant 0 : i32
    %c0_i32_1 = arith.constant 0 : i32
    return %c0_i32, %c0_i32_0 : i32, i32
  }
  func.func @transform_3(%arg0: i32) -> (i32, i32) {
    %c0_i32 = arith.constant 0 : i32
    %c0_i32_0 = arith.constant 0 : i32
    %c0_i32_1 = arith.constant 0 : i32
    return %c0_i32, %c0_i32_0 : i32, i32
  }
  func.func @transform_4(%arg0: i32) -> (i32, i32) {
    %c0_i32 = arith.constant 0 : i32
    %c0_i32_0 = arith.constant 0 : i32
    %c0_i32_1 = arith.constant 0 : i32
    return %c0_i32, %c0_i32_0 : i32, i32
  }
  func.func @transform_5(%arg0: i32) -> (i32, i32, i32) {
    %c0_i32 = arith.constant 0 : i32
    %c0_i32_0 = arith.constant 0 : i32
    %c0_i32_1 = arith.constant 0 : i32
    return %arg0, %c0_i32, %c0_i32_0 : i32, i32, i32
  }
  func.func @transform_6(%arg0: i32) -> (i32, i32, i32) {
    %c0_i32 = arith.constant 0 : i32
    %c0_i32_0 = arith.constant 0 : i32
    %c0_i32_1 = arith.constant 0 : i32
    return %arg0, %c0_i32, %c0_i32_0 : i32, i32, i32
  }
}

</mosaic_0001>

<llo_original>
// kernel: basic_block_forward.5
$region0: #{basic_block_forward.5}
  #allocation0 [shape = 'u32[]', space=smem, size = 0x4, offset = 0x4, fixed_abs, tag = 'smem constant byte address 0x4 - core index']
  #allocation1 [shape = 'u32[144,128]{1,0:T(1,128)}', space=vmem, size = 0x12000, scoped, tag = 'internal scratch']
  %s0 = inlined_call_operand.vmem [shape: f32[128,128], index: 0, kind: input, shape index: {}]
  %s1 = inlined_call_operand.vmem [shape: f32[128,128], index: 1, kind: input, shape index: {}]
  %s2 = inlined_call_operand.vmem [shape: f32[8,128], index: 2, kind: input, shape index: {}]
  %s3 = inlined_call_operand.vmem [shape: f32[1,128], index: 3, kind: input, shape index: {}]
  %s4 = inlined_call_operand.vmem [shape: f32[1,128], index: 4, kind: input, shape index: {}]
  %s5 = inlined_call_operand.vmem [shape: f32[8,128], index: 5, kind: input, shape index: {}]
  %s6 = inlined_call_operand.vmem [shape: f32[1,128], index: 6, kind: input, shape index: {}]
  %s7 = inlined_call_operand.vmem [shape: f32[1,128], index: 7, kind: input, shape index: {}]
  %s8 = inlined_call_operand.vmem [shape: f32[128,128], index: 8, kind: output, shape index: {}]
  %s9 = sld [smem:[#allocation0]]
  $region42: #{basic_block_forward.5} parent=0
    _
  %s11 = ssub.s32 1, %s9
  %s12 = scalar_select 0, %s11, %s9
  // Predicated region
  $region2: #{basic_block_forward.5} parent=0 // pred_check
    _
  $region3: #{basic_block_forward.5} parent=0 // pred_check_branch
    %14 = sbr.rel (0) target = $region5
  $region4: #{basic_block_forward.5} parent=0 // pred_region
    _
  $region5: #{basic_block_forward.5} parent=0 // pred_fallthru
    _
  // Predicated region
  $region6: #{basic_block_forward.5} parent=0 // pred_check
    _
  $region7: #{basic_block_forward.5} parent=0 // pred_check_branch
    %16 = sbr.rel (0) target = $region9
  $region8: #{basic_block_forward.5} parent=0 // pred_region
    _
  $region9: #{basic_block_forward.5} parent=0 // pred_fallthru
    _
  // Predicated region
  $region10: #{basic_block_forward.5} parent=0 // pred_check
    _
  $region11: #{basic_block_forward.5} parent=0 // pred_check_branch
    %18 = sbr.rel (0) target = $region13
  $region12: #{basic_block_forward.5} parent=0 // pred_region
    _
  $region13: #{basic_block_forward.5} parent=0 // pred_fallthru
    _
  // Predicated region
  $region14: #{basic_block_forward.5} parent=0 // pred_check
    _
  $region15: #{basic_block_forward.5} parent=0 // pred_check_branch
    %20 = sbr.rel (0) target = $region17
  $region16: #{basic_block_forward.5} parent=0 // pred_region
    _
  $region17: #{basic_block_forward.5} parent=0 // pred_fallthru
    _
  // Predicated region
  $region18: #{basic_block_forward.5} parent=0 // pred_check
    _
  $region19: #{basic_block_forward.5} parent=0 // pred_check_branch
    %22 = sbr.rel (0) target = $region21
  $region20: #{basic_block_forward.5} parent=0 // pred_region
    _
  $region21: #{basic_block_forward.5} parent=0 // pred_fallthru
    _
  // Predicated region
  $region22: #{basic_block_forward.5} parent=0 // pred_check
    _
  $region23: #{basic_block_forward.5} parent=0 // pred_check_branch
    %24 = sbr.rel (0) target = $region25
  $region24: #{basic_block_forward.5} parent=0 // pred_region
    _
  $region25: #{basic_block_forward.5} parent=0 // pred_fallthru
    _
  // Predicated region
  $region26: #{basic_block_forward.5} parent=0 // pred_check
    _
  $region27: #{basic_block_forward.5} parent=0 // pred_check_branch
    %26 = sbr.rel (0) target = $region29
  $region28: #{basic_block_forward.5} parent=0 // pred_region
    _
  $region29: #{basic_block_forward.5} parent=0 // pred_fallthru
    _
  // Predicated region
  $region30: #{basic_block_forward.5} parent=0 // pred_check
    _
  $region31: #{basic_block_forward.5} parent=0 // pred_check_branch
    %28 = sbr.rel (0) target = $region33
  $region32: #{basic_block_forward.5} parent=0 // pred_region
    _
  $region33: #{basic_block_forward.5} parent=0 // pred_fallthru
    _
  %v29 = vld [vmem:[%s2] sm:$0x1]
  %v30 = vmul.f32 %v29, 0.0078125
  %v31 = vld [vmem:[%s2 + $0x1] sm:$0x1]
  %v32 = vmul.f32 %v31, 0.0078125
  %v33 = vmul.f32 %v30, %v30
  %v34 = vsub.f32 %v32, %v33
  %v35 = vmax.f32 %v34, 0.0
  %v36 = vld [vmem:[%s3] sm:$0x1]
  %v37 = vadd.f32 %v35, 1e-05
  %v38 = vrsqrt.pop %v37
  %v39 = vmul.f32 %v36, %v38
  %v40 = vld [vmem:[%s4] sm:$0x1]
  %v41 = vmul.f32 %v30, %v39
  %v42 = vsub.f32 %v40, %v41
  %v43 = vld [vmem:[%s0] sm:$0xff]
  %v44 = vld [vmem:[%s0 + $0x8] sm:$0xff]
  %v45 = vld [vmem:[%s0 + $0x10] sm:$0xff]
  %v46 = vld [vmem:[%s0 + $0x18] sm:$0xff]
  %v47 = vld [vmem:[%s0 + $0x20] sm:$0xff]
  %v48 = vld [vmem:[%s0 + $0x28] sm:$0xff]
  %v49 = vld [vmem:[%s0 + $0x30] sm:$0xff]
  %v50 = vld [vmem:[%s0 + $0x38] sm:$0xff]
  %v51 = vld [vmem:[%s0 + $0x40] sm:$0xff]
  %v52 = vld [vmem:[%s0 + $0x48] sm:$0xff]
  %v53 = vld [vmem:[%s0 + $0x50] sm:$0xff]
  %v54 = vld [vmem:[%s0 + $0x58] sm:$0xff]
  %v55 = vld [vmem:[%s0 + $0x60] sm:$0xff]
  %v56 = vld [vmem:[%s0 + $0x68] sm:$0xff]
  %v57 = vld [vmem:[%s0 + $0x70] sm:$0xff]
  %v58 = vld [vmem:[%s0 + $0x78] sm:$0xff]
  %v60 = vlaneseq
  %v61 = vshrl.u32 %v60, 7
  %v62 = vsub.s32 0, %v61
  %v63 = vrot.slane %v39, %v62
  %v65 = vmul.f32 %v43, %v63
  %v66 = vmul.f32 %v44, %v63
  %v67 = vmul.f32 %v45, %v63
  %v68 = vmul.f32 %v46, %v63
  %v69 = vmul.f32 %v47, %v63
  %v70 = vmul.f32 %v48, %v63
  %v71 = vmul.f32 %v49, %v63
  %v72 = vmul.f32 %v50, %v63
  %v73 = vmul.f32 %v51, %v63
  %v74 = vmul.f32 %v52, %v63
  %v75 = vmul.f32 %v53, %v63
  %v76 = vmul.f32 %v54, %v63
  %v77 = vmul.f32 %v55, %v63
  %v78 = vmul.f32 %v56, %v63
  %v79 = vmul.f32 %v57, %v63
  %v80 = vmul.f32 %v58, %v63
  %v82 = vlaneseq
  %v83 = vshrl.u32 %v82, 7
  %v84 = vsub.s32 0, %v83
  %v85 = vrot.slane %v42, %v84
  %v87 = vadd.f32 %v65, %v85
  %v88 = vadd.f32 %v66, %v85
  %v89 = vadd.f32 %v67, %v85
  %v90 = vadd.f32 %v68, %v85
  %v91 = vadd.f32 %v69, %v85
  %v92 = vadd.f32 %v70, %v85
  %v93 = vadd.f32 %v71, %v85
  %v94 = vadd.f32 %v72, %v85
  %v95 = vadd.f32 %v73, %v85
  %v96 = vadd.f32 %v74, %v85
  %v97 = vadd.f32 %v75, %v85
  %v98 = vadd.f32 %v76, %v85
  %v99 = vadd.f32 %v77, %v85
  %v100 = vadd.f32 %v78, %v85
  %v101 = vadd.f32 %v79, %v85
  %v102 = vadd.f32 %v80, %v85
  %v103 = vld [vmem:[%s5] sm:$0x1]
  %v104 = vmul.f32 %v103, 0.0078125
  %v105 = vld [vmem:[%s5 + $0x1] sm:$0x1]
  %v106 = vmul.f32 %v105, 0.0078125
  %v107 = vmul.f32 %v104, %v104
  %v108 = vsub.f32 %v106, %v107
  %v109 = vmax.f32 %v108, 0.0
  %v110 = vld [vmem:[%s6] sm:$0x1]
  %v111 = vadd.f32 %v109, 1e-05
  %v112 = vrsqrt.pop %v111
  %v113 = vmul.f32 %v110, %v112
  %v114 = vld [vmem:[%s7] sm:$0x1]
  %v115 = vmul.f32 %v104, %v113
  %v116 = vsub.f32 %v114, %v115
  %v117 = vld [vmem:[%s1] sm:$0xff]
  %v118 = vld [vmem:[%s1 + $0x8] sm:$0xff]
  %v119 = vld [vmem:[%s1 + $0x10] sm:$0xff]
  %v120 = vld [vmem:[%s1 + $0x18] sm:$0xff]
  %v121 = vld [vmem:[%s1 + $0x20] sm:$0xff]
  %v122 = vld [vmem:[%s1 + $0x28] sm:$0xff]
  %v123 = vld [vmem:[%s1 + $0x30] sm:$0xff]
  %v124 = vld [vmem:[%s1 + $0x38] sm:$0xff]
  %v125 = vld [vmem:[%s1 + $0x40] sm:$0xff]
  %v126 = vld [vmem:[%s1 + $0x48] sm:$0xff]
  %v127 = vld [vmem:[%s1 + $0x50] sm:$0xff]
  %v128 = vld [vmem:[%s1 + $0x58] sm:$0xff]
  %v129 = vld [vmem:[%s1 + $0x60] sm:$0xff]
  %v130 = vld [vmem:[%s1 + $0x68] sm:$0xff]
  %v131 = vld [vmem:[%s1 + $0x70] sm:$0xff]
  %v132 = vld [vmem:[%s1 + $0x78] sm:$0xff]
  %v134 = vlaneseq
  %v135 = vshrl.u32 %v134, 7
  %v136 = vsub.s32 0, %v135
  %v137 = vrot.slane %v113, %v136
  %v139 = vmul.f32 %v117, %v137
  %v140 = vmul.f32 %v118, %v137
  %v141 = vmul.f32 %v119, %v137
  %v142 = vmul.f32 %v120, %v137
  %v143 = vmul.f32 %v121, %v137
  %v144 = vmul.f32 %v122, %v137
  %v145 = vmul.f32 %v123, %v137
  %v146 = vmul.f32 %v124, %v137
  %v147 = vmul.f32 %v125, %v137
  %v148 = vmul.f32 %v126, %v137
  %v149 = vmul.f32 %v127, %v137
  %v150 = vmul.f32 %v128, %v137
  %v151 = vmul.f32 %v129, %v137
  %v152 = vmul.f32 %v130, %v137
  %v153 = vmul.f32 %v131, %v137
  %v154 = vmul.f32 %v132, %v137
  %v156 = vlaneseq
  %v157 = vshrl.u32 %v156, 7
  %v158 = vsub.s32 0, %v157
  %v159 = vrot.slane %v116, %v158
  %v161 = vadd.f32 %v139, %v159
  %v162 = vadd.f32 %v140, %v159
  %v163 = vadd.f32 %v141, %v159
  %v164 = vadd.f32 %v142, %v159
  %v165 = vadd.f32 %v143, %v159
  %v166 = vadd.f32 %v144, %v159
  %v167 = vadd.f32 %v145, %v159
  %v168 = vadd.f32 %v146, %v159
  %v169 = vadd.f32 %v147, %v159
  %v170 = vadd.f32 %v148, %v159
  %v171 = vadd.f32 %v149, %v159
  %v172 = vadd.f32 %v150, %v159
  %v173 = vadd.f32 %v151, %v159
  %v174 = vadd.f32 %v152, %v159
  %v175 = vadd.f32 %v153, %v159
  %v176 = vadd.f32 %v154, %v159
  %v177 = vadd.f32 %v87, %v161
  %v178 = vadd.f32 %v88, %v162
  %v179 = vadd.f32 %v89, %v163
  %v180 = vadd.f32 %v90, %v164
  %v181 = vadd.f32 %v91, %v165
  %v182 = vadd.f32 %v92, %v166
  %v183 = vadd.f32 %v93, %v167
  %v184 = vadd.f32 %v94, %v168
  %v185 = vadd.f32 %v95, %v169
  %v186 = vadd.f32 %v96, %v170
  %v187 = vadd.f32 %v97, %v171
  %v188 = vadd.f32 %v98, %v172
  %v189 = vadd.f32 %v99, %v173
  %v190 = vadd.f32 %v100, %v174
  %v191 = vadd.f32 %v101, %v175
  %v192 = vadd.f32 %v102, %v176
  %v193 = vmax.f32 %v177, 0.0
  %v194 = vmax.f32 %v178, 0.0
  %v195 = vmax.f32 %v179, 0.0
  %v196 = vmax.f32 %v180, 0.0
  %v197 = vmax.f32 %v181, 0.0
  %v198 = vmax.f32 %v182, 0.0
  %v199 = vmax.f32 %v183, 0.0
  %v200 = vmax.f32 %v184, 0.0
  %v201 = vmax.f32 %v185, 0.0
  %v202 = vmax.f32 %v186, 0.0
  %v203 = vmax.f32 %v187, 0.0
  %v204 = vmax.f32 %v188, 0.0
  %v205 = vmax.f32 %v189, 0.0
  %v206 = vmax.f32 %v190, 0.0
  %v207 = vmax.f32 %v191, 0.0
  %v208 = vmax.f32 %v192, 0.0
  %209 = vst [vmem:[%s8] sm:$0xff] %v193
  %210 = vst [vmem:[%s8 + $0x8] sm:$0xff] %v194
  %211 = vst [vmem:[%s8 + $0x10] sm:$0xff] %v195
  %212 = vst [vmem:[%s8 + $0x18] sm:$0xff] %v196
  %213 = vst [vmem:[%s8 + $0x20] sm:$0xff] %v197
  %214 = vst [vmem:[%s8 + $0x28] sm:$0xff] %v198
  %215 = vst [vmem:[%s8 + $0x30] sm:$0xff] %v199
  %216 = vst [vmem:[%s8 + $0x38] sm:$0xff] %v200
  %217 = vst [vmem:[%s8 + $0x40] sm:$0xff] %v201
  %218 = vst [vmem:[%s8 + $0x48] sm:$0xff] %v202
  %219 = vst [vmem:[%s8 + $0x50] sm:$0xff] %v203
  %220 = vst [vmem:[%s8 + $0x58] sm:$0xff] %v204
  %221 = vst [vmem:[%s8 + $0x60] sm:$0xff] %v205
  %222 = vst [vmem:[%s8 + $0x68] sm:$0xff] %v206
  %223 = vst [vmem:[%s8 + $0x70] sm:$0xff] %v207
  %224 = vst [vmem:[%s8 + $0x78] sm:$0xff] %v208
  // Predicated region
  $region34: #{basic_block_forward.5} parent=0 // pred_check
    _
  $region35: #{basic_block_forward.5} parent=0 // pred_check_branch
    %226 = sbr.rel (0) target = $region37
  $region36: #{basic_block_forward.5} parent=0 // pred_region
    _
  $region37: #{basic_block_forward.5} parent=0 // pred_fallthru
    _
  // Predicated region
  $region38: #{basic_block_forward.5} parent=0 // pred_check
    _
  $region39: #{basic_block_forward.5} parent=0 // pred_check_branch
    %228 = sbr.rel (0) target = $region41
  $region40: #{basic_block_forward.5} parent=0 // pred_region
    _
  $region41: #{basic_block_forward.5} parent=0 // pred_fallthru
    _

// kernel: basic_block_forward.3
$region0: #{basic_block_forward.3}
  #allocation0 [shape = 'u32[]', space=smem, size = 0x4, offset = 0x4, fixed_abs, tag = 'smem constant byte address 0x4 - core index']
  #allocation1 [shape = 'u32[144,128]{1,0:T(1,128)}', space=vmem, size = 0x12000, scoped, tag = 'internal scratch']
  #allocation2 [shape = 'f32[64,1152]{1,0:T(8,128)}', space=vmem, size = 0x48000, scoped, tag = 'scratch operand']
  %s0 = inlined_call_operand.vmem [shape: f32[2,36,9,128], index: 0, kind: input, shape index: {}]
  %s1 = inlined_call_operand.vmem [shape: f32[1152,128], index: 1, kind: input, shape index: {}]
  %s2 = inlined_call_operand.vmem [shape: f32[128,128], index: 2, kind: input, shape index: {}]
  %s3 = inlined_call_operand.vmem [shape: f32[2,64,128], index: 3, kind: output, shape index: {0}]
  %s4 = inlined_call_operand.vmem [shape: f32[2,64,128], index: 4, kind: output, shape index: {1}]
  %s5 = inlined_call_operand.vmem [shape: f32[2,8,128], index: 5, kind: output, shape index: {2}]
  %s6 = inlined_call_operand.vmem [shape: f32[2,8,128], index: 6, kind: output, shape index: {3}]
  %7 = xla_tuple %s3, %s4, %s5, %s6
  %s8 = sld [smem:[#allocation0]]
  $region69: #{basic_block_forward.3} parent=0
    _
  %s10 = ssub.s32 1, %s8
  %s11 = scalar_select 0, %s10, %s8
  loop: start=0, step=1, limit=4
  $region2: #{basic_block_forward.3} parent=0 // loop_pre_header
    _
  $region3: #{basic_block_forward.3} parent=0 // loop_header
    %s13 = sphi 0, %s17
    %p14 = scmp.ge.s32.totalorder %s13, 4
    %s23 = sphi 0, %s25
    %s26 = sphi 0, %s23
    %s27 = sphi 0, %s26
    %s43 = sphi 0, %s27
    %s47 = sphi 0, %s47
    %s49 = sphi 0, %s47
    %s50 = sphi 0, %s49
    %s64 = sphi 0, %s50
    %s68 = sphi 0, %s68
    %s70 = sphi 0, %s68
    %s71 = sphi 0, %s70
    %s85 = sphi 0, %s71
    %s91 = sphi 0, %s93
    %s94 = sphi 0, %s91
    %s95 = sphi 0, %s94
    %s111 = sphi 0, %s95
    %s117 = sphi 0, %s119
    %s120 = sphi 0, %s117
    %s121 = sphi 0, %s120
    %s137 = sphi 0, %s121
    %s143 = sphi 0, %s145
    %s146 = sphi 0, %s143
    %s147 = sphi 0, %s146
    %s163 = sphi 0, %s147
    %s169 = sphi 0, %s171
    %s172 = sphi 0, %s169
    %s173 = sphi 0, %s172
    %s189 = sphi 0, %s173
  $region4: #{basic_block_forward.3} parent=0 // loop_header_branch
    %16 = sbr.rel (%p14) target = $region8
  $region5: #{basic_block_forward.3} parent=0 // loop_body
    %s18 = ssub.s32 %s13, 1
    %s19 = ssub.s32 %s13, 2
    %s20 = sadd.s32 %s13, 1
    %s21 = ssub.s32 %s13, %s20
    %p22 = scmp.eq.s32.totalorder %s21, 0
    %s24 = sadd.s32 %s23, 1
    %s25 = scalar_select %p22, %s23, %s24
    %p28 = pneg %p22
    %p29 = scmp.eq.s32.totalorder %s13, 1
    %p30 = por %p28, %p29
    %p31 = scmp.ne.s32.totalorder %s23, %s26
    %p32 = scmp.eq.s32.totalorder %s13, 0
    %p33 = por %p31, %p32
    %p34 = scmp.ne.s32.totalorder %s23, %s26
    %p35 = scmp.eq.s32.totalorder %s18, 1
    %p36 = por %p34, %p35
    %p37 = scmp.ne.s32.totalorder %s26, %s27
    %p38 = scmp.eq.s32.totalorder %s18, 0
    %p39 = por %p37, %p38
    %p40 = scmp.ne.s32.totalorder %s26, %s27
    %p41 = scmp.eq.s32.totalorder %s19, 1
    %p42 = por %p40, %p41
    %p44 = scmp.ne.s32.totalorder %s27, %s43
    %p45 = scmp.eq.s32.totalorder %s19, 0
    %p46 = por %p44, %p45
    %s48 = sadd.s32 %s47, 1
    %p51 = scmp.eq.s32.totalorder %s13, 1
    %p52 = scmp.ne.s32.totalorder %s47, %s49
    %p53 = scmp.eq.s32.totalorder %s13, 0
    %p54 = por %p52, %p53
    %p55 = scmp.ne.s32.totalorder %s47, %s49
    %p56 = scmp.eq.s32.totalorder %s18, 1
    %p57 = por %p55, %p56
    %p58 = scmp.ne.s32.totalorder %s49, %s50
    %p59 = scmp.eq.s32.totalorder %s18, 0
    %p60 = por %p58, %p59
    %p61 = scmp.ne.s32.totalorder %s49, %s50
    %p62 = scmp.eq.s32.totalorder %s19, 1
    %p63 = por %p61, %p62
    %p65 = scmp.ne.s32.totalorder %s50, %s64
    %p66 = scmp.eq.s32.totalorder %s19, 0
    %p67 = por %p65, %p66
    %s69 = sadd.s32 %s68, 1
    %p72 = scmp.eq.s32.totalorder %s13, 1
    %p73 = scmp.ne.s32.totalorder %s68, %s70
    %p74 = scmp.eq.s32.totalorder %s13, 0
    %p75 = por %p73, %p74
    %p76 = scmp.ne.s32.totalorder %s68, %s70
    %p77 = scmp.eq.s32.totalorder %s18, 1
    %p78 = por %p76, %p77
    %p79 = scmp.ne.s32.totalorder %s70, %s71
    %p80 = scmp.eq.s32.totalorder %s18, 0
    %p81 = por %p79, %p80
    %p82 = scmp.ne.s32.totalorder %s70, %s71
    %p83 = scmp.eq.s32.totalorder %s19, 1
    %p84 = por %p82, %p83
    %p86 = scmp.ne.s32.totalorder %s71, %s85
    %p87 = scmp.eq.s32.totalorder %s19, 0
    %p88 = por %p86, %p87
    %s89 = ssub.s32 %s13, %s20
    %p90 = scmp.eq.s32.totalorder %s89, 0
    %s92 = sadd.s32 %s91, 1
    %s93 = scalar_select %p90, %s91, %s92
    %p96 = pneg %p90
    %p97 = scmp.eq.s32.totalorder %s13, 1
    %p98 = por %p96, %p97
    %p99 = scmp.ne.s32.totalorder %s91, %s94
    %p100 = scmp.eq.s32.totalorder %s13, 0
    %p101 = por %p99, %p100
    %p102 = scmp.ne.s32.totalorder %s91, %s94
    %p103 = scmp.eq.s32.totalorder %s18, 1
    %p104 = por %p102, %p103
    %p105 = scmp.ne.s32.totalorder %s94, %s95
    %p106 = scmp.eq.s32.totalorder %s18, 0
    %p107 = por %p105, %p106
    %p108 = scmp.ne.s32.totalorder %s94, %s95
    %p109 = scmp.eq.s32.totalorder %s19, 1
    %p110 = por %p108, %p109
    %p112 = scmp.ne.s32.totalorder %s95, %s111
    %p113 = scmp.eq.s32.totalorder %s19, 0
    %p114 = por %p112, %p113
    %s115 = ssub.s32 %s13, %s20
    %p116 = scmp.eq.s32.totalorder %s115, 0
    %s118 = sadd.s32 %s117, 1
    %s119 = scalar_select %p116, %s117, %s118
    %p122 = pneg %p116
    %p123 = scmp.eq.s32.totalorder %s13, 1
    %p124 = por %p122, %p123
    %p125 = scmp.ne.s32.totalorder %s117, %s120
    %p126 = scmp.eq.s32.totalorder %s13, 0
    %p127 = por %p125, %p126
    %p128 = scmp.ne.s32.totalorder %s117, %s120
    %p129 = scmp.eq.s32.totalorder %s18, 1
    %p130 = por %p128, %p129
    %p131 = scmp.ne.s32.totalorder %s120, %s121
    %p132 = scmp.eq.s32.totalorder %s18, 0
    %p133 = por %p131, %p132
    %p134 = scmp.ne.s32.totalorder %s120, %s121
    %p135 = scmp.eq.s32.totalorder %s19, 1
    %p136 = por %p134, %p135
    %p138 = scmp.ne.s32.totalorder %s121, %s137
    %p139 = scmp.eq.s32.totalorder %s19, 0
    %p140 = por %p138, %p139
    %s141 = ssub.s32 %s13, %s20
    %p142 = scmp.eq.s32.totalorder %s141, 0
    %s144 = sadd.s32 %s143, 1
    %s145 = scalar_select %p142, %s143, %s144
    %p148 = pneg %p142
    %p149 = scmp.eq.s32.totalorder %s13, 1
    %p150 = por %p148, %p149
    %p151 = scmp.ne.s32.totalorder %s143, %s146
    %p152 = scmp.eq.s32.totalorder %s13, 0
    %p153 = por %p151, %p152
    %p154 = scmp.ne.s32.totalorder %s143, %s146
    %p155 = scmp.eq.s32.totalorder %s18, 1
    %p156 = por %p154, %p155
    %p157 = scmp.ne.s32.totalorder %s146, %s147
    %p158 = scmp.eq.s32.totalorder %s18, 0
    %p159 = por %p157, %p158
    %p160 = scmp.ne.s32.totalorder %s146, %s147
    %p161 = scmp.eq.s32.totalorder %s19, 1
    %p162 = por %p160, %p161
    %p164 = scmp.ne.s32.totalorder %s147, %s163
    %p165 = scmp.eq.s32.totalorder %s19, 0
    %p166 = por %p164, %p165
    %s167 = ssub.s32 %s13, %s20
    %p168 = scmp.eq.s32.totalorder %s167, 0
    %s170 = sadd.s32 %s169, 1
    %s171 = scalar_select %p168, %s169, %s170
    %p174 = pneg %p168
    %p175 = scmp.eq.s32.totalorder %s13, 1
    %p176 = por %p174, %p175
    %p177 = scmp.ne.s32.totalorder %s169, %s172
    %p178 = scmp.eq.s32.totalorder %s13, 0
    %p179 = por %p177, %p178
    %p180 = scmp.ne.s32.totalorder %s169, %s172
    %p181 = scmp.eq.s32.totalorder %s18, 1
    %p182 = por %p180, %p181
    %p183 = scmp.ne.s32.totalorder %s172, %s173
    %p184 = scmp.eq.s32.totalorder %s18, 0
    %p185 = por %p183, %p184
    %p186 = scmp.ne.s32.totalorder %s172, %s173
    %p187 = scmp.eq.s32.totalorder %s19, 1
    %p188 = por %p186, %p187
    %p190 = scmp.ne.s32.totalorder %s173, %s189
    %p191 = scmp.eq.s32.totalorder %s19, 0
    %p192 = por %p190, %p191
    %p193 = scmp.le.s32.totalorder 1, %s13
    %p194 = scmp.lt.s32.totalorder %s13, 3
    %p195 = pnand %p193, %p194
    %p196 = pneg %p195
    // Predicated region
    $region9: #{basic_block_forward.3} parent=5 // pred_check
      _
    $region10: #{basic_block_forward.3} parent=5 // pred_check_branch
      %198 = sbr.rel (%p195) target = $region12
    $region11: #{basic_block_forward.3} parent=5 // pred_region
      %s199 = ssub.s32 %s13, 1
      // Predicated region
      $region13: #{basic_block_forward.3} parent=11 // pred_check
        %p200 = pneg %p60
      $region14: #{basic_block_forward.3} parent=11 // pred_check_branch
        %202 = sbr.rel (%p200) target = $region16
      $region15: #{basic_block_forward.3} parent=11 // pred_region
        _
      $region16: #{basic_block_forward.3} parent=11 // pred_fallthru
        _
      // Predicated region
      $region17: #{basic_block_forward.3} parent=11 // pred_check
        %p203 = pneg %p81
      $region18: #{basic_block_forward.3} parent=11 // pred_check_branch
        %205 = sbr.rel (%p203) target = $region20
      $region19: #{basic_block_forward.3} parent=11 // pred_region
        _
      $region20: #{basic_block_forward.3} parent=11 // pred_fallthru
        _
    $region12: #{basic_block_forward.3} parent=5 // pred_fallthru
      _
    %p206 = scmp.lt.s32.totalorder %s13, 2
    // Predicated region
    $region21: #{basic_block_forward.3} parent=5 // pred_check
      %p207 = pneg %p206
    $region22: #{basic_block_forward.3} parent=5 // pred_check_branch
      %209 = sbr.rel (%p207) target = $region24
    $region23: #{basic_block_forward.3} parent=5 // pred_region
      // Predicated region
      $region25: #{basic_block_forward.3} parent=23 // pred_check
        %p210 = pneg %p33
      $region26: #{basic_block_forward.3} parent=23 // pred_check_branch
        %212 = sbr.rel (%p210) target = $region28
      $region27: #{basic_block_forward.3} parent=23 // pred_region
        %p213 = scmp.lt.s32.totalorder %s13, 1
        %s214 = scalar_select %p213, %s13, 1
        %s215 = smul.addr %s214, 72
        %s216 = smul.addr %s215, 8
        %s217 = scalar_lea.vmem %s0, %s216
      $region28: #{basic_block_forward.3} parent=23 // pred_fallthru
        _
    $region24: #{basic_block_forward.3} parent=5 // pred_fallthru
      _
    %p218 = scmp.le.s32.totalorder 1, %s13
    %p219 = scmp.lt.s32.totalorder %s13, 3
    %p220 = pnand %p218, %p219
    %p221 = pneg %p220
    // Predicated region
    $region29: #{basic_block_forward.3} parent=5 // pred_check
      _
    $region30: #{basic_block_forward.3} parent=5 // pred_check_branch
      %223 = sbr.rel (%p220) target = $region32
    $region31: #{basic_block_forward.3} parent=5 // pred_region
      %s224 = ssub.s32 %s13, 1
      %p225 = scmp.lt.s32.totalorder %s18, 1
      %s226 = scalar_select %p225, %s18, 1
      %s227 = smul.addr %s226, 72
      %s228 = smul.addr %s227, 8
      %s229 = scalar_lea.vmem %s0, %s228
      %p230 = pneg %p39
      %p231 = pneg %p36
      %p232 = pneg %p60
      %p233 = pneg %p57
      %p234 = pneg %p81
      %p235 = pneg %p78
      %p236 = pneg %p107
      %p237 = pneg %p104
      %p238 = scmp.lt.s32.totalorder %s18, 1
      %s239 = scalar_select %p238, %s18, 1
      %s240 = smul.addr %s239, 8
      %s241 = smul.addr %s240, 8
      %s242 = scalar_lea.vmem %s3, %s241
      %p243 = pneg %p133
      %p244 = pneg %p130
      %p245 = scmp.lt.s32.totalorder %s18, 1
      %s246 = scalar_select %p245, %s18, 1
      %s247 = smul.addr %s246, 8
      %s248 = smul.addr %s247, 8
      %s249 = scalar_lea.vmem %s4, %s248
      %p250 = pneg %p159
      %p251 = pneg %p156
      %p252 = scmp.lt.s32.totalorder %s18, 1
      %s253 = scalar_select %p252, %s18, 1
      %s254 = smul.addr %s253, 8
      %s255 = scalar_lea.vmem %s5, %s254
      %p256 = pneg %p185
      %p257 = pneg %p182
      %p258 = scmp.lt.s32.totalorder %s18, 1
      %s259 = scalar_select %p258, %s18, 1
      %s260 = smul.addr %s259, 8
      %s261 = scalar_lea.vmem %s6, %s260
      %p262 = scmp.lt.s32.totalorder %s18, 1
      %s263 = scalar_select %p262, %s18, 1
      %s264 = smul.addr %s263, 72
      %s265 = smul.addr %s264, 8
      %s266 = scalar_lea.vmem %s0, %s265
      %p267 = scmp.lt.s32.totalorder %s18, 1
      %s268 = scalar_select %p267, %s18, 1
      %s269 = smul.addr %s268, 8
      %s270 = smul.addr %s269, 8
      %s271 = scalar_lea.vmem %s3, %s270
      %p272 = scmp.lt.s32.totalorder %s18, 1
      %s273 = scalar_select %p272, %s18, 1
      %s274 = smul.addr %s273, 8
      %s275 = smul.addr %s274, 8
      %s276 = scalar_lea.vmem %s4, %s275
      %p277 = scmp.lt.s32.totalorder %s18, 1
      %s278 = scalar_select %p277, %s18, 1
      %s279 = smul.addr %s278, 8
      %s280 = scalar_lea.vmem %s5, %s279
      %p281 = scmp.lt.s32.totalorder %s18, 1
      %s282 = scalar_select %p281, %s18, 1
      %s283 = smul.addr %s282, 8
      %s284 = scalar_lea.vmem %s6, %s283
      %v285 = vld [vmem:[%s266] sm:$0xff]
      %v286 = vld [vmem:[%s266 + $0x10] sm:$0xff]
      %v287 = vld [vmem:[%s266 + $0x20] sm:$0xff]
      %v288 = vld [vmem:[%s266 + $0x30] sm:$0xff]
      %v289 = vld [vmem:[%s266 + $0x40] sm:$0xff]
      %v290 = vld [vmem:[%s266 + $0x50] sm:$0xff]
      %v291 = vld [vmem:[%s266 + $0x60] sm:$0xff]
      %v292 = vld [vmem:[%s266 + $0x70] sm:$0xff]
      %293 = vst [vmem:[#allocation2] sm:$0xff] %v285
      %294 = vst [vmem:[#allocation2 + $0x48] sm:$0xff] %v286
      %295 = vst [vmem:[#allocation2 + $0x90] sm:$0xff] %v287
      %296 = vst [vmem:[#allocation2 + $0xd8] sm:$0xff] %v288
      %297 = vst [vmem:[#allocation2 + $0x120] sm:$0xff] %v289
      %298 = vst [vmem:[#allocation2 + $0x168] sm:$0xff] %v290
      %299 = vst [vmem:[#allocation2 + $0x1b0] sm:$0xff] %v291
      %300 = vst [vmem:[#allocation2 + $0x1f8] sm:$0xff] %v292
      %s301 = scalar_lea.vmem %s266, 144
      %v302 = vld [vmem:[%s301] sm:$0xff]
      %v303 = vld [vmem:[%s301 + $0x10] sm:$0xff]
      %v304 = vld [vmem:[%s301 + $0x20] sm:$0xff]
      %v305 = vld [vmem:[%s301 + $0x30] sm:$0xff]
      %v306 = vld [vmem:[%s301 + $0x40] sm:$0xff]
      %v307 = vld [vmem:[%s301 + $0x50] sm:$0xff]
      %v308 = vld [vmem:[%s301 + $0x60] sm:$0xff]
      %v309 = vld [vmem:[%s301 + $0x70] sm:$0xff]
      %310 = vst [vmem:[#allocation2 + $0x8] sm:$0xff] %v302
      %311 = vst [vmem:[#allocation2 + $0x50] sm:$0xff] %v303
      %312 = vst [vmem:[#allocation2 + $0x98] sm:$0xff] %v304
      %313 = vst [vmem:[#allocation2 + $0xe0] sm:$0xff] %v305
      %314 = vst [vmem:[#allocation2 + $0x128] sm:$0xff] %v306
      %315 = vst [vmem:[#allocation2 + $0x170] sm:$0xff] %v307
      %316 = vst [vmem:[#allocation2 + $0x1b8] sm:$0xff] %v308
      %317 = vst [vmem:[#allocation2 + $0x200] sm:$0xff] %v309
      %v318 = vld [vmem:[%s266 + $0x1] sm:$0xff]
      %v319 = vld [vmem:[%s266 + $0x11] sm:$0xff]
      %v320 = vld [vmem:[%s266 + $0x21] sm:$0xff]
      %v321 = vld [vmem:[%s266 + $0x31] sm:$0xff]
      %v322 = vld [vmem:[%s266 + $0x41] sm:$0xff]
      %v323 = vld [vmem:[%s266 + $0x51] sm:$0xff]
      %v324 = vld [vmem:[%s266 + $0x61] sm:$0xff]
      %v325 = vld [vmem:[%s266 + $0x71] sm:$0xff]
      %326 = vst [vmem:[#allocation2 + $0x10] sm:$0xff] %v318
      %327 = vst [vmem:[#allocation2 + $0x58] sm:$0xff] %v319
      %328 = vst [vmem:[#allocation2 + $0xa0] sm:$0xff] %v320
      %329 = vst [vmem:[#allocation2 + $0xe8] sm:$0xff] %v321
      %330 = vst [vmem:[#allocation2 + $0x130] sm:$0xff] %v322
      %331 = vst [vmem:[#allocation2 + $0x178] sm:$0xff] %v323
      %332 = vst [vmem:[#allocation2 + $0x1c0] sm:$0xff] %v324
      %333 = vst [vmem:[#allocation2 + $0x208] sm:$0xff] %v325
      %s334 = scalar_lea.vmem %s266, 288
      %v335 = vld [vmem:[%s334] sm:$0xff]
      %v336 = vld [vmem:[%s334 + $0x10] sm:$0xff]
      %v337 = vld [vmem:[%s334 + $0x20] sm:$0xff]
      %v338 = vld [vmem:[%s334 + $0x30] sm:$0xff]
      %v339 = vld [vmem:[%s334 + $0x40] sm:$0xff]
      %v340 = vld [vmem:[%s334 + $0x50] sm:$0xff]
      %v341 = vld [vmem:[%s334 + $0x60] sm:$0xff]
      %v342 = vld [vmem:[%s334 + $0x70] sm:$0xff]
      %343 = vst [vmem:[#allocation2 + $0x18] sm:$0xff] %v335
      %344 = vst [vmem:[#allocation2 + $0x60] sm:$0xff] %v336
      %345 = vst [vmem:[#allocation2 + $0xa8] sm:$0xff] %v337
      %346 = vst [vmem:[#allocation2 + $0xf0] sm:$0xff] %v338
      %347 = vst [vmem:[#allocation2 + $0x138] sm:$0xff] %v339
      %348 = vst [vmem:[#allocation2 + $0x180] sm:$0xff] %v340
      %349 = vst [vmem:[#allocation2 + $0x1c8] sm:$0xff] %v341
      %350 = vst [vmem:[#allocation2 + $0x210] sm:$0xff] %v342
      %s351 = scalar_lea.vmem %s266, 432
      %v352 = vld [vmem:[%s351] sm:$0xff]
      %v353 = vld [vmem:[%s351 + $0x10] sm:$0xff]
      %v354 = vld [vmem:[%s351 + $0x20] sm:$0xff]
      %v355 = vld [vmem:[%s351 + $0x30] sm:$0xff]
      %v356 = vld [vmem:[%s351 + $0x40] sm:$0xff]
      %v357 = vld [vmem:[%s351 + $0x50] sm:$0xff]
      %v358 = vld [vmem:[%s351 + $0x60] sm:$0xff]
      %v359 = vld [vmem:[%s351 + $0x70] sm:$0xff]
      %360 = vst [vmem:[#allocation2 + $0x20] sm:$0xff] %v352
      %361 = vst [vmem:[#allocation2 + $0x68] sm:$0xff] %v353
      %362 = vst [vmem:[#allocation2 + $0xb0] sm:$0xff] %v354
      %363 = vst [vmem:[#allocation2 + $0xf8] sm:$0xff] %v355
      %364 = vst [vmem:[#allocation2 + $0x140] sm:$0xff] %v356
      %365 = vst [vmem:[#allocation2 + $0x188] sm:$0xff] %v357
      %366 = vst [vmem:[#allocation2 + $0x1d0] sm:$0xff] %v358
      %367 = vst [vmem:[#allocation2 + $0x218] sm:$0xff] %v359
      %v368 = vld [vmem:[%s334 + $0x1] sm:$0xff]
      %v369 = vld [vmem:[%s334 + $0x11] sm:$0xff]
      %v370 = vld [vmem:[%s334 + $0x21] sm:$0xff]
      %v371 = vld [vmem:[%s334 + $0x31] sm:$0xff]
      %v372 = vld [vmem:[%s334 + $0x41] sm:$0xff]
      %v373 = vld [vmem:[%s334 + $0x51] sm:$0xff]
      %v374 = vld [vmem:[%s334 + $0x61] sm:$0xff]
      %v375 = vld [vmem:[%s334 + $0x71] sm:$0xff]
      %376 = vst [vmem:[#allocation2 + $0x28] sm:$0xff] %v368
      %377 = vst [vmem:[#allocation2 + $0x70] sm:$0xff] %v369
      %378 = vst [vmem:[#allocation2 + $0xb8] sm:$0xff] %v370
      %379 = vst [vmem:[#allocation2 + $0x100] sm:$0xff] %v371
      %380 = vst [vmem:[#allocation2 + $0x148] sm:$0xff] %v372
      %381 = vst [vmem:[#allocation2 + $0x190] sm:$0xff] %v373
      %382 = vst [vmem:[#allocation2 + $0x1d8] sm:$0xff] %v374
      %383 = vst [vmem:[#allocation2 + $0x220] sm:$0xff] %v375
      %s384 = scalar_lea.vmem %s266, 16
      %v385 = vld [vmem:[%s384] sm:$0xff]
      %v386 = vld [vmem:[%s384 + $0x10] sm:$0xff]
      %v387 = vld [vmem:[%s384 + $0x20] sm:$0xff]
      %v388 = vld [vmem:[%s384 + $0x30] sm:$0xff]
      %v389 = vld [vmem:[%s384 + $0x40] sm:$0xff]
      %v390 = vld [vmem:[%s384 + $0x50] sm:$0xff]
      %v391 = vld [vmem:[%s384 + $0x60] sm:$0xff]
      %v392 = vld [vmem:[%s384 + $0x70] sm:$0xff]
      %393 = vst [vmem:[#allocation2 + $0x30] sm:$0xff] %v385
      %394 = vst [vmem:[#allocation2 + $0x78] sm:$0xff] %v386
      %395 = vst [vmem:[#allocation2 + $0xc0] sm:$0xff] %v387
      %396 = vst [vmem:[#allocation2 + $0x108] sm:$0xff] %v388
      %397 = vst [vmem:[#allocation2 + $0x150] sm:$0xff] %v389
      %398 = vst [vmem:[#allocation2 + $0x198] sm:$0xff] %v390
      %399 = vst [vmem:[#allocation2 + $0x1e0] sm:$0xff] %v391
      %400 = vst [vmem:[#allocation2 + $0x228] sm:$0xff] %v392
      %s401 = scalar_lea.vmem %s266, 160
      %v402 = vld [vmem:[%s401] sm:$0xff]
      %v403 = vld [vmem:[%s401 + $0x10] sm:$0xff]
      %v404 = vld [vmem:[%s401 + $0x20] sm:$0xff]
      %v405 = vld [vmem:[%s401 + $0x30] sm:$0xff]
      %v406 = vld [vmem:[%s401 + $0x40] sm:$0xff]
      %v407 = vld [vmem:[%s401 + $0x50] sm:$0xff]
      %v408 = vld [vmem:[%s401 + $0x60] sm:$0xff]
      %v409 = vld [vmem:[%s401 + $0x70] sm:$0xff]
      %410 = vst [vmem:[#allocation2 + $0x38] sm:$0xff] %v402
      %411 = vst [vmem:[#allocation2 + $0x80] sm:$0xff] %v403
      %412 = vst [vmem:[#allocation2 + $0xc8] sm:$0xff] %v404
      %413 = vst [vmem:[#allocation2 + $0x110] sm:$0xff] %v405
      %414 = vst [vmem:[#allocation2 + $0x158] sm:$0xff] %v406
      %415 = vst [vmem:[#allocation2 + $0x1a0] sm:$0xff] %v407
      %416 = vst [vmem:[#allocation2 + $0x1e8] sm:$0xff] %v408
      %417 = vst [vmem:[#allocation2 + $0x230] sm:$0xff] %v409
      %v418 = vld [vmem:[%s384 + $0x1] sm:$0xff]
      %v419 = vld [vmem:[%s384 + $0x11] sm:$0xff]
      %v420 = vld [vmem:[%s384 + $0x21] sm:$0xff]
      %v421 = vld [vmem:[%s384 + $0x31] sm:$0xff]
      %v422 = vld [vmem:[%s384 + $0x41] sm:$0xff]
      %v423 = vld [vmem:[%s384 + $0x51] sm:$0xff]
      %v424 = vld [vmem:[%s384 + $0x61] sm:$0xff]
      %v425 = vld [vmem:[%s384 + $0x71] sm:$0xff]
      %426 = vst [vmem:[#allocation2 + $0x40] sm:$0xff] %v418
      %427 = vst [vmem:[#allocation2 + $0x88] sm:$0xff] %v419
      %428 = vst [vmem:[#allocation2 + $0xd0] sm:$0xff] %v420
      %429 = vst [vmem:[#allocation2 + $0x118] sm:$0xff] %v421
      %430 = vst [vmem:[#allocation2 + $0x160] sm:$0xff] %v422
      %431 = vst [vmem:[#allocation2 + $0x1a8] sm:$0xff] %v423
      %432 = vst [vmem:[#allocation2 + $0x1f0] sm:$0xff] %v424
      %433 = vst [vmem:[#allocation2 + $0x238] sm:$0xff] %v425
      %v434 = vld [vmem:[#allocation2] sm:$0xff]
      %v435 = vld [vmem:[#allocation2 + $0x8] sm:$0xff]
      %v436 = vld [vmem:[#allocation2 + $0x10] sm:$0xff]
      %v437 = vld [vmem:[#allocation2 + $0x18] sm:$0xff]
      %v438 = vld [vmem:[#allocation2 + $0x20] sm:$0xff]
      %v439 = vld [vmem:[#allocation2 + $0x28] sm:$0xff]
      %v440 = vld [vmem:[#allocation2 + $0x30] sm:$0xff]
      %v441 = vld [vmem:[#allocation2 + $0x38] sm:$0xff]
      %v442 = vld [vmem:[#allocation2 + $0x40] sm:$0xff]
      %v443 = vld [vmem:[#allocation2 + $0x48] sm:$0xff]
      %v444 = vld [vmem:[#allocation2 + $0x50] sm:$0xff]
      %v445 = vld [vmem:[#allocation2 + $0x58] sm:$0xff]
      %v446 = vld [vmem:[#allocation2 + $0x60] sm:$0xff]
      %v447 = vld [vmem:[#allocation2 + $0x68] sm:$0xff]
      %v448 = vld [vmem:[#allocation2 + $0x70] sm:$0xff]
      %v449 = vld [vmem:[#allocation2 + $0x78] sm:$0xff]
      %v450 = vld [vmem:[#allocation2 + $0x80] sm:$0xff]
      %v451 = vld [vmem:[#allocation2 + $0x88] sm:$0xff]
      %v452 = vld [vmem:[#allocation2 + $0x90] sm:$0xff]
      %v453 = vld [vmem:[#allocation2 + $0x98] sm:$0xff]
      %v454 = vld [vmem:[#allocation2 + $0xa0] sm:$0xff]
      %v455 = vld [vmem:[#allocation2 + $0xa8] sm:$0xff]
      %v456 = vld [vmem:[#allocation2 + $0xb0] sm:$0xff]
      %v457 = vld [vmem:[#allocation2 + $0xb8] sm:$0xff]
      %v458 = vld [vmem:[#allocation2 + $0xc0] sm:$0xff]
      %v459 = vld [vmem:[#allocation2 + $0xc8] sm:$0xff]
      %v460 = vld [vmem:[#allocation2 + $0xd0] sm:$0xff]
      %v461 = vld [vmem:[#allocation2 + $0xd8] sm:$0xff]
      %v462 = vld [vmem:[#allocation2 + $0xe0] sm:$0xff]
      %v463 = vld [vmem:[#allocation2 + $0xe8] sm:$0xff]
      %v464 = vld [vmem:[#allocation2 + $0xf0] sm:$0xff]
      %v465 = vld [vmem:[#allocation2 + $0xf8] sm:$0xff]
      %v466 = vld [vmem:[#allocation2 + $0x100] sm:$0xff]
      %v467 = vld [vmem:[#allocation2 + $0x108] sm:$0xff]
      %v468 = vld [vmem:[#allocation2 + $0x110] sm:$0xff]
      %v469 = vld [vmem:[#allocation2 + $0x118] sm:$0xff]
      %v470 = vld [vmem:[#allocation2 + $0x120] sm:$0xff]
      %v471 = vld [vmem:[#allocation2 + $0x128] sm:$0xff]
      %v472 = vld [vmem:[#allocation2 + $0x130] sm:$0xff]
      %v473 = vld [vmem:[#allocation2 + $0x138] sm:$0xff]
      %v474 = vld [vmem:[#allocation2 + $0x140] sm:$0xff]
      %v475 = vld [vmem:[#allocation2 + $0x148] sm:$0xff]
      %v476 = vld [vmem:[#allocation2 + $0x150] sm:$0xff]
      %v477 = vld [vmem:[#allocation2 + $0x158] sm:$0xff]
      %v478 = vld [vmem:[#allocation2 + $0x160] sm:$0xff]
      %v479 = vld [vmem:[#allocation2 + $0x168] sm:$0xff]
      %v480 = vld [vmem:[#allocation2 + $0x170] sm:$0xff]
      %v481 = vld [vmem:[#allocation2 + $0x178] sm:$0xff]
      %v482 = vld [vmem:[#allocation2 + $0x180] sm:$0xff]
      %v483 = vld [vmem:[#allocation2 + $0x188] sm:$0xff]
      %v484 = vld [vmem:[#allocation2 + $0x190] sm:$0xff]
      %v485 = vld [vmem:[#allocation2 + $0x198] sm:$0xff]
      %v486 = vld [vmem:[#allocation2 + $0x1a0] sm:$0xff]
      %v487 = vld [vmem:[#allocation2 + $0x1a8] sm:$0xff]
      %v488 = vld [vmem:[#allocation2 + $0x1b0] sm:$0xff]
      %v489 = vld [vmem:[#allocation2 + $0x1b8] sm:$0xff]
      %v490 = vld [vmem:[#allocation2 + $0x1c0] sm:$0xff]
      %v491 = vld [vmem:[#allocation2 + $0x1c8] sm:$0xff]
      %v492 = vld [vmem:[#allocation2 + $0x1d0] sm:$0xff]
      %v493 = vld [vmem:[#allocation2 + $0x1d8] sm:$0xff]
      %v494 = vld [vmem:[#allocation2 + $0x1e0] sm:$0xff]
      %v495 = vld [vmem:[#allocation2 + $0x1e8] sm:$0xff]
      %v496 = vld [vmem:[#allocation2 + $0x1f0] sm:$0xff]
      %v497 = vld [vmem:[#allocation2 + $0x1f8] sm:$0xff]
      %v498 = vld [vmem:[#allocation2 + $0x200] sm:$0xff]
      %v499 = vld [vmem:[#allocation2 + $0x208] sm:$0xff]
      %v500 = vld [vmem:[#allocation2 + $0x210] sm:$0xff]
      %v501 = vld [vmem:[#allocation2 + $0x218] sm:$0xff]
      %v502 = vld [vmem:[#allocation2 + $0x220] sm:$0xff]
      %v503 = vld [vmem:[#allocation2 + $0x228] sm:$0xff]
      %v504 = vld [vmem:[#allocation2 + $0x230] sm:$0xff]
      %v505 = vld [vmem:[#allocation2 + $0x238] sm:$0xff]
      %v506 = vld [vmem:[%s1] sm:$0xff]
      %v507 = vld [vmem:[%s1 + $0x8] sm:$0xff]
      %v508 = vld [vmem:[%s1 + $0x10] sm:$0xff]
      %v509 = vld [vmem:[%s1 + $0x18] sm:$0xff]
      %v510 = vld [vmem:[%s1 + $0x20] sm:$0xff]
      %v511 = vld [vmem:[%s1 + $0x28] sm:$0xff]
      %v512 = vld [vmem:[%s1 + $0x30] sm:$0xff]
      %v513 = vld [vmem:[%s1 + $0x38] sm:$0xff]
      %v514 = vld [vmem:[%s1 + $0x40] sm:$0xff]
      %v515 = vld [vmem:[%s1 + $0x48] sm:$0xff]
      %v516 = vld [vmem:[%s1 + $0x50] sm:$0xff]
      %v517 = vld [vmem:[%s1 + $0x58] sm:$0xff]
      %v518 = vld [vmem:[%s1 + $0x60] sm:$0xff]
      %v519 = vld [vmem:[%s1 + $0x68] sm:$0xff]
      %v520 = vld [vmem:[%s1 + $0x70] sm:$0xff]
      %v521 = vld [vmem:[%s1 + $0x78] sm:$0xff]
      %v522 = vld [vmem:[%s1 + $0x80] sm:$0xff]
      %v523 = vld [vmem:[%s1 + $0x88] sm:$0xff]
      %v524 = vld [vmem:[%s1 + $0x90] sm:$0xff]
      %v525 = vld [vmem:[%s1 + $0x98] sm:$0xff]
      %v526 = vld [vmem:[%s1 + $0xa0] sm:$0xff]
      %v527 = vld [vmem:[%s1 + $0xa8] sm:$0xff]
      %v528 = vld [vmem:[%s1 + $0xb0] sm:$0xff]
      %v529 = vld [vmem:[%s1 + $0xb8] sm:$0xff]
      %v530 = vld [vmem:[%s1 + $0xc0] sm:$0xff]
      %v531 = vld [vmem:[%s1 + $0xc8] sm:$0xff]
      %v532 = vld [vmem:[%s1 + $0xd0] sm:$0xff]
      %v533 = vld [vmem:[%s1 + $0xd8] sm:$0xff]
      %v534 = vld [vmem:[%s1 + $0xe0] sm:$0xff]
      %v535 = vld [vmem:[%s1 + $0xe8] sm:$0xff]
      %v536 = vld [vmem:[%s1 + $0xf0] sm:$0xff]
      %v537 = vld [vmem:[%s1 + $0xf8] sm:$0xff]
      %v538 = vld [vmem:[%s1 + $0x100] sm:$0xff]
      %v539 = vld [vmem:[%s1 + $0x108] sm:$0xff]
      %v540 = vld [vmem:[%s1 + $0x110] sm:$0xff]
      %v541 = vld [vmem:[%s1 + $0x118] sm:$0xff]
      %v542 = vld [vmem:[%s1 + $0x120] sm:$0xff]
      %v543 = vld [vmem:[%s1 + $0x128] sm:$0xff]
      %v544 = vld [vmem:[%s1 + $0x130] sm:$0xff]
      %v545 = vld [vmem:[%s1 + $0x138] sm:$0xff]
      %v546 = vld [vmem:[%s1 + $0x140] sm:$0xff]
      %v547 = vld [vmem:[%s1 + $0x148] sm:$0xff]
      %v548 = vld [vmem:[%s1 + $0x150] sm:$0xff]
      %v549 = vld [vmem:[%s1 + $0x158] sm:$0xff]
      %v550 = vld [vmem:[%s1 + $0x160] sm:$0xff]
      %v551 = vld [vmem:[%s1 + $0x168] sm:$0xff]
      %v552 = vld [vmem:[%s1 + $0x170] sm:$0xff]
      %v553 = vld [vmem:[%s1 + $0x178] sm:$0xff]
      %v554 = vld [vmem:[%s1 + $0x180] sm:$0xff]
      %v555 = vld [vmem:[%s1 + $0x188] sm:$0xff]
      %v556 = vld [vmem:[%s1 + $0x190] sm:$0xff]
      %v557 = vld [vmem:[%s1 + $0x198] sm:$0xff]
      %v558 = vld [vmem:[%s1 + $0x1a0] sm:$0xff]
      %v559 = vld [vmem:[%s1 + $0x1a8] sm:$0xff]
      %v560 = vld [vmem:[%s1 + $0x1b0] sm:$0xff]
      %v561 = vld [vmem:[%s1 + $0x1b8] sm:$0xff]
      %v562 = vld [vmem:[%s1 + $0x1c0] sm:$0xff]
      %v563 = vld [vmem:[%s1 + $0x1c8] sm:$0xff]
      %v564 = vld [vmem:[%s1 + $0x1d0] sm:$0xff]
      %v565 = vld [vmem:[%s1 + $0x1d8] sm:$0xff]
      %v566 = vld [vmem:[%s1 + $0x1e0] sm:$0xff]
      %v567 = vld [vmem:[%s1 + $0x1e8] sm:$0xff]
      %v568 = vld [vmem:[%s1 + $0x1f0] sm:$0xff]
      %v569 = vld [vmem:[%s1 + $0x1f8] sm:$0xff]
      %v570 = vld [vmem:[%s1 + $0x200] sm:$0xff]
      %v571 = vld [vmem:[%s1 + $0x208] sm:$0xff]
      %v572 = vld [vmem:[%s1 + $0x210] sm:$0xff]
      %v573 = vld [vmem:[%s1 + $0x218] sm:$0xff]
      %v574 = vld [vmem:[%s1 + $0x220] sm:$0xff]
      %v575 = vld [vmem:[%s1 + $0x228] sm:$0xff]
      %v576 = vld [vmem:[%s1 + $0x230] sm:$0xff]
      %v577 = vld [vmem:[%s1 + $0x238] sm:$0xff]
      %v578 = vld [vmem:[%s1 + $0x240] sm:$0xff]
      %v579 = vld [vmem:[%s1 + $0x248] sm:$0xff]
      %v580 = vld [vmem:[%s1 + $0x250] sm:$0xff]
      %v581 = vld [vmem:[%s1 + $0x258] sm:$0xff]
      %v582 = vld [vmem:[%s1 + $0x260] sm:$0xff]
      %v583 = vld [vmem:[%s1 + $0x268] sm:$0xff]
      %v584 = vld [vmem:[%s1 + $0x270] sm:$0xff]
      %v585 = vld [vmem:[%s1 + $0x278] sm:$0xff]
      %v586 = vld [vmem:[%s1 + $0x280] sm:$0xff]
      %v587 = vld [vmem:[%s1 + $0x288] sm:$0xff]
      %v588 = vld [vmem:[%s1 + $0x290] sm:$0xff]
      %v589 = vld [vmem:[%s1 + $0x298] sm:$0xff]
      %v590 = vld [vmem:[%s1 + $0x2a0] sm:$0xff]
      %v591 = vld [vmem:[%s1 + $0x2a8] sm:$0xff]
      %v592 = vld [vmem:[%s1 + $0x2b0] sm:$0xff]
      %v593 = vld [vmem:[%s1 + $0x2b8] sm:$0xff]
      %v594 = vld [vmem:[%s1 + $0x2c0] sm:$0xff]
      %v595 = vld [vmem:[%s1 + $0x2c8] sm:$0xff]
      %v596 = vld [vmem:[%s1 + $0x2d0] sm:$0xff]
      %v597 = vld [vmem:[%s1 + $0x2d8] sm:$0xff]
      %v598 = vld [vmem:[%s1 + $0x2e0] sm:$0xff]
      %v599 = vld [vmem:[%s1 + $0x2e8] sm:$0xff]
      %v600 = vld [vmem:[%s1 + $0x2f0] sm:$0xff]
      %v601 = vld [vmem:[%s1 + $0x2f8] sm:$0xff]
      %v602 = vld [vmem:[%s1 + $0x300] sm:$0xff]
      %v603 = vld [vmem:[%s1 + $0x308] sm:$0xff]
      %v604 = vld [vmem:[%s1 + $0x310] sm:$0xff]
      %v605 = vld [vmem:[%s1 + $0x318] sm:$0xff]
      %v606 = vld [vmem:[%s1 + $0x320] sm:$0xff]
      %v607 = vld [vmem:[%s1 + $0x328] sm:$0xff]
      %v608 = vld [vmem:[%s1 + $0x330] sm:$0xff]
      %v609 = vld [vmem:[%s1 + $0x338] sm:$0xff]
      %v610 = vld [vmem:[%s1 + $0x340] sm:$0xff]
      %v611 = vld [vmem:[%s1 + $0x348] sm:$0xff]
      %v612 = vld [vmem:[%s1 + $0x350] sm:$0xff]
      %v613 = vld [vmem:[%s1 + $0x358] sm:$0xff]
      %v614 = vld [vmem:[%s1 + $0x360] sm:$0xff]
      %v615 = vld [vmem:[%s1 + $0x368] sm:$0xff]
      %v616 = vld [vmem:[%s1 + $0x370] sm:$0xff]
      %v617 = vld [vmem:[%s1 + $0x378] sm:$0xff]
      %v618 = vld [vmem:[%s1 + $0x380] sm:$0xff]
      %v619 = vld [vmem:[%s1 + $0x388] sm:$0xff]
      %v620 = vld [vmem:[%s1 + $0x390] sm:$0xff]
      %v621 = vld [vmem:[%s1 + $0x398] sm:$0xff]
      %v622 = vld [vmem:[%s1 + $0x3a0] sm:$0xff]
      %v623 = vld [vmem:[%s1 + $0x3a8] sm:$0xff]
      %v624 = vld [vmem:[%s1 + $0x3b0] sm:$0xff]
      %v625 = vld [vmem:[%s1 + $0x3b8] sm:$0xff]
      %v626 = vld [vmem:[%s1 + $0x3c0] sm:$0xff]
      %v627 = vld [vmem:[%s1 + $0x3c8] sm:$0xff]
      %v628 = vld [vmem:[%s1 + $0x3d0] sm:$0xff]
      %v629 = vld [vmem:[%s1 + $0x3d8] sm:$0xff]
      %v630 = vld [vmem:[%s1 + $0x3e0] sm:$0xff]
      %v631 = vld [vmem:[%s1 + $0x3e8] sm:$0xff]
      %v632 = vld [vmem:[%s1 + $0x3f0] sm:$0xff]
      %v633 = vld [vmem:[%s1 + $0x3f8] sm:$0xff]
      %v634 = vld [vmem:[%s1 + $0x400] sm:$0xff]
      %v635 = vld [vmem:[%s1 + $0x408] sm:$0xff]
      %v636 = vld [vmem:[%s1 + $0x410] sm:$0xff]
      %v637 = vld [vmem:[%s1 + $0x418] sm:$0xff]
      %v638 = vld [vmem:[%s1 + $0x420] sm:$0xff]
      %v639 = vld [vmem:[%s1 + $0x428] sm:$0xff]
      %v640 = vld [vmem:[%s1 + $0x430] sm:$0xff]
      %v641 = vld [vmem:[%s1 + $0x438] sm:$0xff]
      %v642 = vld [vmem:[%s1 + $0x440] sm:$0xff]
      %v643 = vld [vmem:[%s1 + $0x448] sm:$0xff]
      %v644 = vld [vmem:[%s1 + $0x450] sm:$0xff]
      %v645 = vld [vmem:[%s1 + $0x458] sm:$0xff]
      %v646 = vld [vmem:[%s1 + $0x460] sm:$0xff]
      %v647 = vld [vmem:[%s1 + $0x468] sm:$0xff]
      %v648 = vld [vmem:[%s1 + $0x470] sm:$0xff]
      %v649 = vld [vmem:[%s1 + $0x478] sm:$0xff]
      %650 = vmatprep.subr.mxu0 0.0
      %651 = vmatpush1.msra.mxu0 %v506
      %652 = vmatprep.subr.mxu0 0.0
      %653 = vmatpush1.msra.mxu0 %v507
      %654 = vmatprep.subr.mxu0 0.0
      %655 = vmatpush1.msra.mxu0 %v508
      %656 = vmatprep.subr.mxu0 0.0
      %657 = vmatpush1.msra.mxu0 %v509
      %658 = vmatprep.subr.mxu0 0.0
      %659 = vmatpush1.msra.mxu0 %v510
      %660 = vmatprep.subr.mxu0 0.0
      %661 = vmatpush1.msra.mxu0 %v511
      %662 = vmatprep.subr.mxu0 0.0
      %663 = vmatpush1.msra.mxu0 %v512
      %664 = vmatprep.subr.mxu0 0.0
      %665 = vmatpush1.msra.mxu0 %v513
      %666 = vmatprep.subr.mxu0 0.0
      %667 = vmatpush1.msra.mxu0 %v514
      %668 = vmatprep.subr.mxu0 0.0
      %669 = vmatpush1.msra.mxu0 %v515
      %670 = vmatprep.subr.mxu0 0.0
      %671 = vmatpush1.msra.mxu0 %v516
      %672 = vmatprep.subr.mxu0 0.0
      %673 = vmatpush1.msra.mxu0 %v517
      %674 = vmatprep.subr.mxu0 0.0
      %675 = vmatpush1.msra.mxu0 %v518
      %676 = vmatprep.subr.mxu0 0.0
      %677 = vmatpush1.msra.mxu0 %v519
      %678 = vmatprep.subr.mxu0 0.0
      %679 = vmatpush1.msra.mxu0 %v520
      %680 = vmatprep.subr.mxu0 0.0
      %681 = vmatpush1.msra.mxu0 %v521
      %682 = vmatprep.subr.mxu0 0.0
      %683 = vmatpush1.msra.mxu0 %v522
      %684 = vmatprep.subr.mxu0 0.0
      %685 = vmatpush1.msra.mxu0 %v523
      %686 = vmatprep.subr.mxu0 0.0
      %687 = vmatpush1.msra.mxu0 %v524
      %688 = vmatprep.subr.mxu0 0.0
      %689 = vmatpush1.msra.mxu0 %v525
      %690 = vmatprep.subr.mxu0 0.0
      %691 = vmatpush1.msra.mxu0 %v526
      %692 = vmatprep.subr.mxu0 0.0
      %693 = vmatpush1.msra.mxu0 %v527
      %694 = vmatprep.subr.mxu0 0.0
      %695 = vmatpush1.msra.mxu0 %v528
      %696 = vmatprep.subr.mxu0 0.0
      %697 = vmatpush1.msra.mxu0 %v529
      %698 = vmatprep.subr.mxu0 0.0
      %699 = vmatpush1.msra.mxu0 %v530
      %700 = vmatprep.subr.mxu0 0.0
      %701 = vmatpush1.msra.mxu0 %v531
      %702 = vmatprep.subr.mxu0 0.0
      %703 = vmatpush1.msra.mxu0 %v532
      %704 = vmatprep.subr.mxu0 0.0
      %705 = vmatpush1.msra.mxu0 %v533
      %706 = vmatprep.subr.mxu0 0.0
      %707 = vmatpush1.msra.mxu0 %v534
      %708 = vmatprep.subr.mxu0 0.0
      %709 = vmatpush1.msra.mxu0 %v535
      %710 = vmatprep.subr.mxu0 0.0
      %711 = vmatpush1.msra.mxu0 %v536
      %712 = vmatprep.subr.mxu0 0.0
      %713 = vmatpush1.msra.mxu0 %v537
      %714 = vmatprep.mubr.f32.mxu0 %v435
      %715 = vmatmul.mubr.f32.gmra.mrb[0].mxu0 %v434
      %v716 = vpop.f32.mrb[0].mxu0
      %v717 = vadd.f32 0.0, %v716
      %v718 = vpop.f32.mrb[0].mxu0
      %719 = vmatprep.mubr.f32.mxu0 %v444
      %720 = vmatmul.mubr.f32.gmra.mrb[0].mxu0 %v443
      %v721 = vpop.f32.mrb[0].mxu0
      %v722 = vadd.f32 0.0, %v721
      %v723 = vpop.f32.mrb[0].mxu0
      %724 = vmatprep.mubr.f32.mxu0 %v453
      %725 = vmatmul.mubr.f32.gmra.mrb[0].mxu0 %v452
      %v726 = vpop.f32.mrb[0].mxu0
      %v727 = vadd.f32 0.0, %v726
      %v728 = vpop.f32.mrb[0].mxu0
      %729 = vmatprep.mubr.f32.mxu0 %v462
      %730 = vmatmul.mubr.f32.gmra.mrb[0].mxu0 %v461
      %v731 = vpop.f32.mrb[0].mxu0
      %v732 = vadd.f32 0.0, %v731
      %v733 = vpop.f32.mrb[0].mxu0
      %734 = vmatprep.mubr.f32.mxu0 %v471
      %735 = vmatmul.mubr.f32.gmra.mrb[0].mxu0 %v470
      %v736 = vpop.f32.mrb[0].mxu0
      %v737 = vadd.f32 0.0, %v736
      %v738 = vpop.f32.mrb[0].mxu0
      %739 = vmatprep.mubr.f32.mxu0 %v480
      %740 = vmatmul.mubr.f32.gmra.mrb[0].mxu0 %v479
      %v741 = vpop.f32.mrb[0].mxu0
      %v742 = vadd.f32 0.0, %v741
      %v743 = vpop.f32.mrb[0].mxu0
      %744 = vmatprep.mubr.f32.mxu0 %v489
      %745 = vmatmul.mubr.f32.gmra.mrb[0].mxu0 %v488
      %v746 = vpop.f32.mrb[0].mxu0
      %v747 = vadd.f32 0.0, %v746
      %v748 = vpop.f32.mrb[0].mxu0
      %749 = vmatprep.mubr.f32.mxu0 %v498
      %750 = vmatmul.mubr.f32.gmra.mrb[0].mxu0 %v497
      %v751 = vpop.f32.mrb[0].mxu0
      %v752 = vadd.f32 0.0, %v751
      %v753 = vpop.f32.mrb[0].mxu0
      %754 = vdwg.mxu0
      %755 = vmatprep.subr.mxu0 0.0
      %756 = vmatpush1.msra.mxu0 %v538
      %757 = vmatprep.subr.mxu0 0.0
      %758 = vmatpush1.msra.mxu0 %v539
      %759 = vmatprep.subr.mxu0 0.0
      %760 = vmatpush1.msra.mxu0 %v540
      %761 = vmatprep.subr.mxu0 0.0
      %762 = vmatpush1.msra.mxu0 %v541
      %763 = vmatprep.subr.mxu0 0.0
      %764 = vmatpush1.msra.mxu0 %v542
      %765 = vmatprep.subr.mxu0 0.0
      %766 = vmatpush1.msra.mxu0 %v543
      %767 = vmatprep.subr.mxu0 0.0
      %768 = vmatpush1.msra.mxu0 %v544
      %769 = vmatprep.subr.mxu0 0.0
      %770 = vmatpush1.msra.mxu0 %v545
      %771 = vmatprep.subr.mxu0 0.0
      %772 = vmatpush1.msra.mxu0 %v546
      %773 = vmatprep.subr.mxu0 0.0
      %774 = vmatpush1.msra.mxu0 %v547
      %775 = vmatprep.subr.mxu0 0.0
      %776 = vmatpush1.msra.mxu0 %v548
      %777 = vmatprep.subr.mxu0 0.0
      %778 = vmatpush1.msra.mxu0 %v549
      %779 = vmatprep.subr.mxu0 0.0
      %780 = vmatpush1.msra.mxu0 %v550
      %781 = vmatprep.subr.mxu0 0.0
      %782 = vmatpush1.msra.mxu0 %v551
      %783 = vmatprep.subr.mxu0 0.0
      %784 = vmatpush1.msra.mxu0 %v552
      %785 = vmatprep.subr.mxu0 0.0
      %786 = vmatpush1.msra.mxu0 %v553
      %787 = vmatprep.subr.mxu0 0.0
      %788 = vmatpush1.msra.mxu0 %v554
      %789 = vmatprep.subr.mxu0 0.0
      %790 = vmatpush1.msra.mxu0 %v555
      %791 = vmatprep.subr.mxu0 0.0
      %792 = vmatpush1.msra.mxu0 %v556
      %793 = vmatprep.subr.mxu0 0.0
      %794 = vmatpush1.msra.mxu0 %v557
      %795 = vmatprep.subr.mxu0 0.0
      %796 = vmatpush1.msra.mxu0 %v558
      %797 = vmatprep.subr.mxu0 0.0
      %798 = vmatpush1.msra.mxu0 %v559
      %799 = vmatprep.subr.mxu0 0.0
      %800 = vmatpush1.msra.mxu0 %v560
      %801 = vmatprep.subr.mxu0 0.0
      %802 = vmatpush1.msra.mxu0 %v561
      %803 = vmatprep.subr.mxu0 0.0
      %804 = vmatpush1.msra.mxu0 %v562
      %805 = vmatprep.subr.mxu0 0.0
      %806 = vmatpush1.msra.mxu0 %v563
      %807 = vmatprep.subr.mxu0 0.0
      %808 = vmatpush1.msra.mxu0 %v564
      %809 = vmatprep.subr.mxu0 0.0
      %810 = vmatpush1.msra.mxu0 %v565
      %811 = vmatprep.subr.mxu0 0.0
      %812 = vmatpush1.msra.mxu0 %v566
      %813 = vmatprep.subr.mxu0 0.0
      %814 = vmatpush1.msra.mxu0 %v567
      %815 = vmatprep.subr.mxu0 0.0
      %816 = vmatpush1.msra.mxu0 %v568
      %817 = vmatprep.subr.mxu0 0.0
      %818 = vmatpush1.msra.mxu0 %v569
      %819 = vmatprep.mubr.f32.mxu0 %v437
      %820 = vmatmul.mubr.f32.gmra.mrb[0].mxu0 %v436
      %v821 = vpop.f32.mrb[0].mxu0
      %v822 = vadd.f32 %v717, %v821
      %v823 = vpop.f32.mrb[0].mxu0
      %824 = vmatprep.mubr.f32.mxu0 %v446
      %825 = vmatmul.mubr.f32.gmra.mrb[0].mxu0 %v445
      %v826 = vpop.f32.mrb[0].mxu0
      %v827 = vadd.f32 %v722, %v826
      %v828 = vpop.f32.mrb[0].mxu0
      %829 = vmatprep.mubr.f32.mxu0 %v455
      %830 = vmatmul.mubr.f32.gmra.mrb[0].mxu0 %v454
      %v831 = vpop.f32.mrb[0].mxu0
      %v832 = vadd.f32 %v727, %v831
      %v833 = vpop.f32.mrb[0].mxu0
      %834 = vmatprep.mubr.f32.mxu0 %v464
      %835 = vmatmul.mubr.f32.gmra.mrb[0].mxu0 %v463
      %v836 = vpop.f32.mrb[0].mxu0
      %v837 = vadd.f32 %v732, %v836
      %v838 = vpop.f32.mrb[0].mxu0
      %839 = vmatprep.mubr.f32.mxu0 %v473
      %840 = vmatmul.mubr.f32.gmra.mrb[0].mxu0 %v472
      %v841 = vpop.f32.mrb[0].mxu0
      %v842 = vadd.f32 %v737, %v841
      %v843 = vpop.f32.mrb[0].mxu0
      %844 = vmatprep.mubr.f32.mxu0 %v482
      %845 = vmatmul.mubr.f32.gmra.mrb[0].mxu0 %v481
      %v846 = vpop.f32.mrb[0].mxu0
      %v847 = vadd.f32 %v742, %v846
      %v848 = vpop.f32.mrb[0].mxu0
      %849 = vmatprep.mubr.f32.mxu0 %v491
      %850 = vmatmul.mubr.f32.gmra.mrb[0].mxu0 %v490
      %v851 = vpop.f32.mrb[0].mxu0
      %v852 = vadd.f32 %v747, %v851
      %v853 = vpop.f32.mrb[0].mxu0
      %854 = vmatprep.mubr.f32.mxu0 %v500
      %855 = vmatmul.mubr.f32.gmra.mrb[0].mxu0 %v499
      %v856 = vpop.f32.mrb[0].mxu0
      %v857 = vadd.f32 %v752, %v856
      %v858 = vpop.f32.mrb[0].mxu0
      %859 = vdwg.mxu0
      %860 = vmatprep.subr.mxu0 0.0
      %861 = vmatpush1.msra.mxu0 %v570
      %862 = vmatprep.subr.mxu0 0.0
      %863 = vmatpush1.msra.mxu0 %v571
      %864 = vmatprep.subr.mxu0 0.0
      %865 = vmatpush1.msra.mxu0 %v572
      %866 = vmatprep.subr.mxu0 0.0
      %867 = vmatpush1.msra.mxu0 %v573
      %868 = vmatprep.subr.mxu0 0.0
      %869 = vmatpush1.msra.mxu0 %v574
      %870 = vmatprep.subr.mxu0 0.0
      %871 = vmatpush1.msra.mxu0 %v575
      %872 = vmatprep.subr.mxu0 0.0
      %873 = vmatpush1.msra.mxu0 %v576
      %874 = vmatprep.subr.mxu0 0.0
      %875 = vmatpush1.msra.mxu0 %v577
      %876 = vmatprep.subr.mxu0 0.0
      %877 = vmatpush1.msra.mxu0 %v578
      %878 = vmatprep.subr.mxu0 0.0
      %879 = vmatpush1.msra.mxu0 %v579
      %880 = vmatprep.subr.mxu0 0.0
      %881 = vmatpush1.msra.mxu0 %v580
      %882 = vmatprep.subr.mxu0 0.0
      %883 = vmatpush1.msra.mxu0 %v581
      %884 = vmatprep.subr.mxu0 0.0
      %885 = vmatpush1.msra.mxu0 %v582
      %886 = vmatprep.subr.mxu0 0.0
      %887 = vmatpush1.msra.mxu0 %v583
      %888 = vmatprep.subr.mxu0 0.0
      %889 = vmatpush1.msra.mxu0 %v584
      %890 = vmatprep.subr.mxu0 0.0
      %891 = vmatpush1.msra.mxu0 %v585
      %892 = vmatprep.subr.mxu0 0.0
      %893 = vmatpush1.msra.mxu0 %v586
      %894 = vmatprep.subr.mxu0 0.0
      %895 = vmatpush1.msra.mxu0 %v587
      %896 = vmatprep.subr.mxu0 0.0
      %897 = vmatpush1.msra.mxu0 %v588
      %898 = vmatprep.subr.mxu0 0.0
      %899 = vmatpush1.msra.mxu0 %v589
      %900 = vmatprep.subr.mxu0 0.0
      %901 = vmatpush1.msra.mxu0 %v590
      %902 = vmatprep.subr.mxu0 0.0
      %903 = vmatpush1.msra.mxu0 %v591
      %904 = vmatprep.subr.mxu0 0.0
      %905 = vmatpush1.msra.mxu0 %v592
      %906 = vmatprep.subr.mxu0 0.0
      %907 = vmatpush1.msra.mxu0 %v593
      %908 = vmatprep.subr.mxu0 0.0
      %909 = vmatpush1.msra.mxu0 %v594
      %910 = vmatprep.subr.mxu0 0.0
      %911 = vmatpush1.msra.mxu0 %v595
      %912 = vmatprep.subr.mxu0 0.0
      %913 = vmatpush1.msra.mxu0 %v596
      %914 = vmatprep.subr.mxu0 0.0
      %915 = vmatpush1.msra.mxu0 %v597
      %916 = vmatprep.subr.mxu0 0.0
      %917 = vmatpush1.msra.mxu0 %v598
      %918 = vmatprep.subr.mxu0 0.0
      %919 = vmatpush1.msra.mxu0 %v599
      %920 = vmatprep.subr.mxu0 0.0
      %921 = vmatpush1.msra.mxu0 %v600
      %922 = vmatprep.subr.mxu0 0.0
      %923 = vmatpush1.msra.mxu0 %v601
      %924 = vmatprep.mubr.f32.mxu0 %v439
      %925 = vmatmul.mubr.f32.gmra.mrb[0].mxu0 %v438
      %v926 = vpop.f32.mrb[0].mxu0
      %v927 = vadd.f32 %v822, %v926
      %v928 = vpop.f32.mrb[0].mxu0
      %929 = vmatprep.mubr.f32.mxu0 %v448
      %930 = vmatmul.mubr.f32.gmra.mrb[0].mxu0 %v447
      %v931 = vpop.f32.mrb[0].mxu0
      %v932 = vadd.f32 %v827, %v931
      %v933 = vpop.f32.mrb[0].mxu0
      %934 = vmatprep.mubr.f32.mxu0 %v457
      %935 = vmatmul.mubr.f32.gmra.mrb[0].mxu0 %v456
      %v936 = vpop.f32.mrb[0].mxu0
      %v937 = vadd.f32 %v832, %v936
      %v938 = vpop.f32.mrb[0].mxu0
      %939 = vmatprep.mubr.f32.mxu0 %v466
      %940 = vmatmul.mubr.f32.gmra.mrb[0].mxu0 %v465
      %v941 = vpop.f32.mrb[0].mxu0
      %v942 = vadd.f32 %v837, %v941
      %v943 = vpop.f32.mrb[0].mxu0
      %944 = vmatprep.mubr.f32.mxu0 %v475
      %945 = vmatmul.mubr.f32.gmra.mrb[0].mxu0 %v474
      %v946 = vpop.f32.mrb[0].mxu0
      %v947 = vadd.f32 %v842, %v946
      %v948 = vpop.f32.mrb[0].mxu0
      %949 = vmatprep.mubr.f32.mxu0 %v484
      %950 = vmatmul.mubr.f32.gmra.mrb[0].mxu0 %v483
      %v951 = vpop.f32.mrb[0].mxu0
      %v952 = vadd.f32 %v847, %v951
      %v953 = vpop.f32.mrb[0].mxu0
      %954 = vmatprep.mubr.f32.mxu0 %v493
      %955 = vmatmul.mubr.f32.gmra.mrb[0].mxu0 %v492
      %v956 = vpop.f32.mrb[0].mxu0
      %v957 = vadd.f32 %v852, %v956
      %v958 = vpop.f32.mrb[0].mxu0
      %959 = vmatprep.mubr.f32.mxu0 %v502
      %960 = vmatmul.mubr.f32.gmra.mrb[0].mxu0 %v501
      %v961 = vpop.f32.mrb[0].mxu0
      %v962 = vadd.f32 %v857, %v961
      %v963 = vpop.f32.mrb[0].mxu0
      %964 = vdwg.mxu0
      %965 = vmatprep.subr.mxu0 0.0
      %966 = vmatpush1.msra.mxu0 %v602
      %967 = vmatprep.subr.mxu0 0.0
      %968 = vmatpush1.msra.mxu0 %v603
      %969 = vmatprep.subr.mxu0 0.0
      %970 = vmatpush1.msra.mxu0 %v604
      %971 = vmatprep.subr.mxu0 0.0
      %972 = vmatpush1.msra.mxu0 %v605
      %973 = vmatprep.subr.mxu0 0.0
      %974 = vmatpush1.msra.mxu0 %v606
      %975 = vmatprep.subr.mxu0 0.0
      %976 = vmatpush1.msra.mxu0 %v607
      %977 = vmatprep.subr.mxu0 0.0
      %978 = vmatpush1.msra.mxu0 %v608
      %979 = vmatprep.subr.mxu0 0.0
      %980 = vmatpush1.msra.mxu0 %v609
      %981 = vmatprep.subr.mxu0 0.0
      %982 = vmatpush1.msra.mxu0 %v610
      %983 = vmatprep.subr.mxu0 0.0
      %984 = vmatpush1.msra.mxu0 %v611
      %985 = vmatprep.subr.mxu0 0.0
      %986 = vmatpush1.msra.mxu0 %v612
      %987 = vmatprep.subr.mxu0 0.0
      %988 = vmatpush1.msra.mxu0 %v613
      %989 = vmatprep.subr.mxu0 0.0
      %990 = vmatpush1.msra.mxu0 %v614
      %991 = vmatprep.subr.mxu0 0.0
      %992 = vmatpush1.msra.mxu0 %v615
      %993 = vmatprep.subr.mxu0 0.0
      %994 = vmatpush1.msra.mxu0 %v616
      %995 = vmatprep.subr.mxu0 0.0
      %996 = vmatpush1.msra.mxu0 %v617
      %997 = vmatprep.subr.mxu0 0.0
      %998 = vmatpush1.msra.mxu0 %v618
      %999 = vmatprep.subr.mxu0 0.0
      %1000 = vmatpush1.msra.mxu0 %v619
      %1001 = vmatprep.subr.mxu0 0.0
      %1002 = vmatpush1.msra.mxu0 %v620
      %1003 = vmatprep.subr.mxu0 0.0
      %1004 = vmatpush1.msra.mxu0 %v621
      %1005 = vmatprep.subr.mxu0 0.0
      %1006 = vmatpush1.msra.mxu0 %v622
      %1007 = vmatprep.subr.mxu0 0.0
      %1008 = vmatpush1.msra.mxu0 %v623
      %1009 = vmatprep.subr.mxu0 0.0
      %1010 = vmatpush1.msra.mxu0 %v624
      %1011 = vmatprep.subr.mxu0 0.0
      %1012 = vmatpush1.msra.mxu0 %v625
      %1013 = vmatprep.subr.mxu0 0.0
      %1014 = vmatpush1.msra.mxu0 %v626
      %1015 = vmatprep.subr.mxu0 0.0
      %1016 = vmatpush1.msra.mxu0 %v627
      %1017 = vmatprep.subr.mxu0 0.0
      %1018 = vmatpush1.msra.mxu0 %v628
      %1019 = vmatprep.subr.mxu0 0.0
      %1020 = vmatpush1.msra.mxu0 %v629
      %1021 = vmatprep.subr.mxu0 0.0
      %1022 = vmatpush1.msra.mxu0 %v630
      %1023 = vmatprep.subr.mxu0 0.0
      %1024 = vmatpush1.msra.mxu0 %v631
      %1025 = vmatprep.subr.mxu0 0.0
      %1026 = vmatpush1.msra.mxu0 %v632
      %1027 = vmatprep.subr.mxu0 0.0
      %1028 = vmatpush1.msra.mxu0 %v633
      %1029 = vmatprep.mubr.f32.mxu0 %v441
      %1030 = vmatmul.mubr.f32.gmra.mrb[0].mxu0 %v440
      %v1031 = vpop.f32.mrb[0].mxu0
      %v1032 = vadd.f32 %v927, %v1031
      %v1033 = vpop.f32.mrb[0].mxu0
      %1034 = vmatprep.mubr.f32.mxu0 %v450
      %1035 = vmatmul.mubr.f32.gmra.mrb[0].mxu0 %v449
      %v1036 = vpop.f32.mrb[0].mxu0
      %v1037 = vadd.f32 %v932, %v1036
      %v1038 = vpop.f32.mrb[0].mxu0
      %1039 = vmatprep.mubr.f32.mxu0 %v459
      %1040 = vmatmul.mubr.f32.gmra.mrb[0].mxu0 %v458
      %v1041 = vpop.f32.mrb[0].mxu0
      %v1042 = vadd.f32 %v937, %v1041
      %v1043 = vpop.f32.mrb[0].mxu0
      %1044 = vmatprep.mubr.f32.mxu0 %v468
      %1045 = vmatmul.mubr.f32.gmra.mrb[0].mxu0 %v467
      %v1046 = vpop.f32.mrb[0].mxu0
      %v1047 = vadd.f32 %v942, %v1046
      %v1048 = vpop.f32.mrb[0].mxu0
      %1049 = vmatprep.mubr.f32.mxu0 %v477
      %1050 = vmatmul.mubr.f32.gmra.mrb[0].mxu0 %v476
      %v1051 = vpop.f32.mrb[0].mxu0
      %v1052 = vadd.f32 %v947, %v1051
      %v1053 = vpop.f32.mrb[0].mxu0
      %1054 = vmatprep.mubr.f32.mxu0 %v486
      %1055 = vmatmul.mubr.f32.gmra.mrb[0].mxu0 %v485
      %v1056 = vpop.f32.mrb[0].mxu0
      %v1057 = vadd.f32 %v952, %v1056
      %v1058 = vpop.f32.mrb[0].mxu0
      %1059 = vmatprep.mubr.f32.mxu0 %v495
      %1060 = vmatmul.mubr.f32.gmra.mrb[0].mxu0 %v494
      %v1061 = vpop.f32.mrb[0].mxu0
      %v1062 = vadd.f32 %v957, %v1061
      %v1063 = vpop.f32.mrb[0].mxu0
      %1064 = vmatprep.mubr.f32.mxu0 %v504
      %1065 = vmatmul.mubr.f32.gmra.mrb[0].mxu0 %v503
      %v1066 = vpop.f32.mrb[0].mxu0
      %v1067 = vadd.f32 %v962, %v1066
      %v1068 = vpop.f32.mrb[0].mxu0
      %1069 = vdwg.mxu0
      %1070 = vmatprep.subr.mxu0 0.0
      %1071 = vmatpush1.msra.mxu0 %v634
      %1072 = vmatprep.subr.mxu0 0.0
      %1073 = vmatpush1.msra.mxu0 %v635
      %1074 = vmatprep.subr.mxu0 0.0
      %1075 = vmatpush1.msra.mxu0 %v636
      %1076 = vmatprep.subr.mxu0 0.0
      %1077 = vmatpush1.msra.mxu0 %v637
      %1078 = vmatprep.subr.mxu0 0.0
      %1079 = vmatpush1.msra.mxu0 %v638
      %1080 = vmatprep.subr.mxu0 0.0
      %1081 = vmatpush1.msra.mxu0 %v639
      %1082 = vmatprep.subr.mxu0 0.0
      %1083 = vmatpush1.msra.mxu0 %v640
      %1084 = vmatprep.subr.mxu0 0.0
      %1085 = vmatpush1.msra.mxu0 %v641
      %1086 = vmatprep.subr.mxu0 0.0
      %1087 = vmatpush1.msra.mxu0 %v642
      %1088 = vmatprep.subr.mxu0 0.0
      %1089 = vmatpush1.msra.mxu0 %v643
      %1090 = vmatprep.subr.mxu0 0.0
      %1091 = vmatpush1.msra.mxu0 %v644
      %1092 = vmatprep.subr.mxu0 0.0
      %1093 = vmatpush1.msra.mxu0 %v645
      %1094 = vmatprep.subr.mxu0 0.0
      %1095 = vmatpush1.msra.mxu0 %v646
      %1096 = vmatprep.subr.mxu0 0.0
      %1097 = vmatpush1.msra.mxu0 %v647
      %1098 = vmatprep.subr.mxu0 0.0
      %1099 = vmatpush1.msra.mxu0 %v648
      %1100 = vmatprep.subr.mxu0 0.0
      %1101 = vmatpush1.msra.mxu0 %v649
      %1102 = vmatprep.subr.mxu0 0.0
      %1103 = vmatpush1.msra.mxu0 0.0
      %1104 = vmatprep.subr.mxu0 0.0
      %1105 = vmatpush1.msra.mxu0 0.0
      %1106 = vmatprep.subr.mxu0 0.0
      %1107 = vmatpush1.msra.mxu0 0.0
      %1108 = vmatprep.subr.mxu0 0.0
      %1109 = vmatpush1.msra.mxu0 0.0
      %1110 = vmatprep.subr.mxu0 0.0
      %1111 = vmatpush1.msra.mxu0 0.0
      %1112 = vmatprep.subr.mxu0 0.0
      %1113 = vmatpush1.msra.mxu0 0.0
      %1114 = vmatprep.subr.mxu0 0.0
      %1115 = vmatpush1.msra.mxu0 0.0
      %1116 = vmatprep.subr.mxu0 0.0
      %1117 = vmatpush1.msra.mxu0 0.0
      %1118 = vmatprep.subr.mxu0 0.0
      %1119 = vmatpush1.msra.mxu0 0.0
      %1120 = vmatprep.subr.mxu0 0.0
      %1121 = vmatpush1.msra.mxu0 0.0
      %1122 = vmatprep.subr.mxu0 0.0
      %1123 = vmatpush1.msra.mxu0 0.0
      %1124 = vmatprep.subr.mxu0 0.0
      %1125 = vmatpush1.msra.mxu0 0.0
      %1126 = vmatprep.subr.mxu0 0.0
      %1127 = vmatpush1.msra.mxu0 0.0
      %1128 = vmatprep.subr.mxu0 0.0
      %1129 = vmatpush1.msra.mxu0 0.0
      %1130 = vmatprep.subr.mxu0 0.0
      %1131 = vmatpush1.msra.mxu0 0.0
      %1132 = vmatprep.subr.mxu0 0.0
      %1133 = vmatpush1.msra.mxu0 0.0
      %1134 = vmatprep.mubr.f32.mxu0 0.0
      %1135 = vmatmul.mubr.f32.gmra.mrb[0].mxu0 %v442
      %v1136 = vpop.f32.mrb[0].mxu0
      %v1137 = vadd.f32 %v1032, %v1136
      %v1138 = vpop.f32.mrb[0].mxu0
      %1139 = vmatprep.mubr.f32.mxu0 0.0
      %1140 = vmatmul.mubr.f32.gmra.mrb[0].mxu0 %v451
      %v1141 = vpop.f32.mrb[0].mxu0
      %v1142 = vadd.f32 %v1037, %v1141
      %v1143 = vpop.f32.mrb[0].mxu0
      %1144 = vmatprep.mubr.f32.mxu0 0.0
      %1145 = vmatmul.mubr.f32.gmra.mrb[0].mxu0 %v460
      %v1146 = vpop.f32.mrb[0].mxu0
      %v1147 = vadd.f32 %v1042, %v1146
      %v1148 = vpop.f32.mrb[0].mxu0
      %1149 = vmatprep.mubr.f32.mxu0 0.0
      %1150 = vmatmul.mubr.f32.gmra.mrb[0].mxu0 %v469
      %v1151 = vpop.f32.mrb[0].mxu0
      %v1152 = vadd.f32 %v1047, %v1151
      %v1153 = vpop.f32.mrb[0].mxu0
      %1154 = vmatprep.mubr.f32.mxu0 0.0
      %1155 = vmatmul.mubr.f32.gmra.mrb[0].mxu0 %v478
      %v1156 = vpop.f32.mrb[0].mxu0
      %v1157 = vadd.f32 %v1052, %v1156
      %v1158 = vpop.f32.mrb[0].mxu0
      %1159 = vmatprep.mubr.f32.mxu0 0.0
      %1160 = vmatmul.mubr.f32.gmra.mrb[0].mxu0 %v487
      %v1161 = vpop.f32.mrb[0].mxu0
      %v1162 = vadd.f32 %v1057, %v1161
      %v1163 = vpop.f32.mrb[0].mxu0
      %1164 = vmatprep.mubr.f32.mxu0 0.0
      %1165 = vmatmul.mubr.f32.gmra.mrb[0].mxu0 %v496
      %v1166 = vpop.f32.mrb[0].mxu0
      %v1167 = vadd.f32 %v1062, %v1166
      %v1168 = vpop.f32.mrb[0].mxu0
      %1169 = vmatprep.mubr.f32.mxu0 0.0
      %1170 = vmatmul.mubr.f32.gmra.mrb[0].mxu0 %v505
      %v1171 = vpop.f32.mrb[0].mxu0
      %v1172 = vadd.f32 %v1067, %v1171
      %v1173 = vpop.f32.mrb[0].mxu0
      %1174 = vdwg.mxu0
      %1175 = vst [vmem:[%s271] sm:$0xff] %v1137
      %1176 = vst [vmem:[%s271 + $0x8] sm:$0xff] %v1142
      %1177 = vst [vmem:[%s271 + $0x10] sm:$0xff] %v1147
      %1178 = vst [vmem:[%s271 + $0x18] sm:$0xff] %v1152
      %1179 = vst [vmem:[%s271 + $0x20] sm:$0xff] %v1157
      %1180 = vst [vmem:[%s271 + $0x28] sm:$0xff] %v1162
      %1181 = vst [vmem:[%s271 + $0x30] sm:$0xff] %v1167
      %1182 = vst [vmem:[%s271 + $0x38] sm:$0xff] %v1172
      %v1183 = vadd.f32 %v1137, %v1142
      %v1184 = vadd.f32 %v1183, %v1147
      %v1185 = vadd.f32 %v1184, %v1152
      %v1186 = vadd.f32 %v1185, %v1157
      %v1187 = vadd.f32 %v1186, %v1162
      %v1188 = vadd.f32 %v1187, %v1167
      %v1189 = vadd.f32 %v1188, %v1172
      %v1190 = vrot.slane %v1189, 4
      %v1191 = vadd.f32 %v1189, %v1190
      %v1192 = vrot.slane %v1191, 2
      %v1193 = vadd.f32 %v1191, %v1192
      %v1194 = vrot.slane %v1193, 1
      %v1195 = vadd.f32 %v1193, %v1194
      %v1196 = vmul.f32 %v1137, %v1137
      %v1197 = vmul.f32 %v1142, %v1142
      %v1198 = vmul.f32 %v1147, %v1147
      %v1199 = vmul.f32 %v1152, %v1152
      %v1200 = vmul.f32 %v1157, %v1157
      %v1201 = vmul.f32 %v1162, %v1162
      %v1202 = vmul.f32 %v1167, %v1167
      %v1203 = vmul.f32 %v1172, %v1172
      %v1204 = vadd.f32 %v1196, %v1197
      %v1205 = vadd.f32 %v1204, %v1198
      %v1206 = vadd.f32 %v1205, %v1199
      %v1207 = vadd.f32 %v1206, %v1200
      %v1208 = vadd.f32 %v1207, %v1201
      %v1209 = vadd.f32 %v1208, %v1202
      %v1210 = vadd.f32 %v1209, %v1203
      %v1211 = vrot.slane %v1210, 4
      %v1212 = vadd.f32 %v1210, %v1211
      %v1213 = vrot.slane %v1212, 2
      %v1214 = vadd.f32 %v1212, %v1213
      %v1215 = vrot.slane %v1214, 1
      %v1216 = vadd.f32 %v1214, %v1215
      %vm1217 = vcmask 1040384
      %v1218 = vsel %vm1217, %v1195, %v1216
      %vm1219 = vcmask 1041408
      %v1220 = vsel %vm1219, %v1218, 0.0
      %1221 = vst [vmem:[%s280] sm:$0xff] %v1220
      %v1222 = vld [vmem:[#allocation2 + $0x20] sm:$0xff]
      %v1223 = vld [vmem:[#allocation2 + $0x68] sm:$0xff]
      %v1224 = vld [vmem:[#allocation2 + $0xb0] sm:$0xff]
      %v1225 = vld [vmem:[#allocation2 + $0xf8] sm:$0xff]
      %v1226 = vld [vmem:[#allocation2 + $0x140] sm:$0xff]
      %v1227 = vld [vmem:[#allocation2 + $0x188] sm:$0xff]
      %v1228 = vld [vmem:[#allocation2 + $0x1d0] sm:$0xff]
      %v1229 = vld [vmem:[#allocation2 + $0x218] sm:$0xff]
      %v1230 = vld [vmem:[%s2] sm:$0xff]
      %v1231 = vld [vmem:[%s2 + $0x8] sm:$0xff]
      %v1232 = vld [vmem:[%s2 + $0x10] sm:$0xff]
      %v1233 = vld [vmem:[%s2 + $0x18] sm:$0xff]
      %v1234 = vld [vmem:[%s2 + $0x20] sm:$0xff]
      %v1235 = vld [vmem:[%s2 + $0x28] sm:$0xff]
      %v1236 = vld [vmem:[%s2 + $0x30] sm:$0xff]
      %v1237 = vld [vmem:[%s2 + $0x38] sm:$0xff]
      %v1238 = vld [vmem:[%s2 + $0x40] sm:$0xff]
      %v1239 = vld [vmem:[%s2 + $0x48] sm:$0xff]
      %v1240 = vld [vmem:[%s2 + $0x50] sm:$0xff]
      %v1241 = vld [vmem:[%s2 + $0x58] sm:$0xff]
      %v1242 = vld [vmem:[%s2 + $0x60] sm:$0xff]
      %v1243 = vld [vmem:[%s2 + $0x68] sm:$0xff]
      %v1244 = vld [vmem:[%s2 + $0x70] sm:$0xff]
      %v1245 = vld [vmem:[%s2 + $0x78] sm:$0xff]
      %1246 = vmatprep.subr.mxu0 0.0
      %1247 = vmatpush1.msra.mxu0 %v1230
      %1248 = vmatprep.subr.mxu0 0.0
      %1249 = vmatpush1.msra.mxu0 %v1231
      %1250 = vmatprep.subr.mxu0 0.0
      %1251 = vmatpush1.msra.mxu0 %v1232
      %1252 = vmatprep.subr.mxu0 0.0
      %1253 = vmatpush1.msra.mxu0 %v1233
      %1254 = vmatprep.subr.mxu0 0.0
      %1255 = vmatpush1.msra.mxu0 %v1234
      %1256 = vmatprep.subr.mxu0 0.0
      %1257 = vmatpush1.msra.mxu0 %v1235
      %1258 = vmatprep.subr.mxu0 0.0
      %1259 = vmatpush1.msra.mxu0 %v1236
      %1260 = vmatprep.subr.mxu0 0.0
      %1261 = vmatpush1.msra.mxu0 %v1237
      %1262 = vmatprep.subr.mxu0 0.0
      %1263 = vmatpush1.msra.mxu0 %v1238
      %1264 = vmatprep.subr.mxu0 0.0
      %1265 = vmatpush1.msra.mxu0 %v1239
      %1266 = vmatprep.subr.mxu0 0.0
      %1267 = vmatpush1.msra.mxu0 %v1240
      %1268 = vmatprep.subr.mxu0 0.0
      %1269 = vmatpush1.msra.mxu0 %v1241
      %1270 = vmatprep.subr.mxu0 0.0
      %1271 = vmatpush1.msra.mxu0 %v1242
      %1272 = vmatprep.subr.mxu0 0.0
      %1273 = vmatpush1.msra.mxu0 %v1243
      %1274 = vmatprep.subr.mxu0 0.0
      %1275 = vmatpush1.msra.mxu0 %v1244
      %1276 = vmatprep.subr.mxu0 0.0
      %1277 = vmatpush1.msra.mxu0 %v1245
      %1278 = vmatprep.subr.mxu0 0.0
      %1279 = vmatpush1.msra.mxu0 0.0
      %1280 = vmatprep.subr.mxu0 0.0
      %1281 = vmatpush1.msra.mxu0 0.0
      %1282 = vmatprep.subr.mxu0 0.0
      %1283 = vmatpush1.msra.mxu0 0.0
      %1284 = vmatprep.subr.mxu0 0.0
      %1285 = vmatpush1.msra.mxu0 0.0
      %1286 = vmatprep.subr.mxu0 0.0
      %1287 = vmatpush1.msra.mxu0 0.0
      %1288 = vmatprep.subr.mxu0 0.0
      %1289 = vmatpush1.msra.mxu0 0.0
      %1290 = vmatprep.subr.mxu0 0.0
      %1291 = vmatpush1.msra.mxu0 0.0
      %1292 = vmatprep.subr.mxu0 0.0
      %1293 = vmatpush1.msra.mxu0 0.0
      %1294 = vmatprep.subr.mxu0 0.0
      %1295 = vmatpush1.msra.mxu0 0.0
      %1296 = vmatprep.subr.mxu0 0.0
      %1297 = vmatpush1.msra.mxu0 0.0
      %1298 = vmatprep.subr.mxu0 0.0
      %1299 = vmatpush1.msra.mxu0 0.0
      %1300 = vmatprep.subr.mxu0 0.0
      %1301 = vmatpush1.msra.mxu0 0.0
      %1302 = vmatprep.subr.mxu0 0.0
      %1303 = vmatpush1.msra.mxu0 0.0
      %1304 = vmatprep.subr.mxu0 0.0
      %1305 = vmatpush1.msra.mxu0 0.0
      %1306 = vmatprep.subr.mxu0 0.0
      %1307 = vmatpush1.msra.mxu0 0.0
      %1308 = vmatprep.subr.mxu0 0.0
      %1309 = vmatpush1.msra.mxu0 0.0
      %1310 = vmatprep.mubr.f32.mxu0 0.0
      %1311 = vmatmul.mubr.f32.gmra.mrb[0].mxu0 %v1222
      %v1312 = vpop.f32.mrb[0].mxu0
      %v1313 = vadd.f32 0.0, %v1312
      %v1314 = vpop.f32.mrb[0].mxu0
      %1315 = vmatprep.mubr.f32.mxu0 0.0
      %1316 = vmatmul.mubr.f32.gmra.mrb[0].mxu0 %v1223
      %v1317 = vpop.f32.mrb[0].mxu0
      %v1318 = vadd.f32 0.0, %v1317
      %v1319 = vpop.f32.mrb[0].mxu0
      %1320 = vmatprep.mubr.f32.mxu0 0.0
      %1321 = vmatmul.mubr.f32.gmra.mrb[0].mxu0 %v1224
      %v1322 = vpop.f32.mrb[0].mxu0
      %v1323 = vadd.f32 0.0, %v1322
      %v1324 = vpop.f32.mrb[0].mxu0
      %1325 = vmatprep.mubr.f32.mxu0 0.0
      %1326 = vmatmul.mubr.f32.gmra.mrb[0].mxu0 %v1225
      %v1327 = vpop.f32.mrb[0].mxu0
      %v1328 = vadd.f32 0.0, %v1327
      %v1329 = vpop.f32.mrb[0].mxu0
      %1330 = vmatprep.mubr.f32.mxu0 0.0
      %1331 = vmatmul.mubr.f32.gmra.mrb[0].mxu0 %v1226
      %v1332 = vpop.f32.mrb[0].mxu0
      %v1333 = vadd.f32 0.0, %v1332
      %v1334 = vpop.f32.mrb[0].mxu0
      %1335 = vmatprep.mubr.f32.mxu0 0.0
      %1336 = vmatmul.mubr.f32.gmra.mrb[0].mxu0 %v1227
      %v1337 = vpop.f32.mrb[0].mxu0
      %v1338 = vadd.f32 0.0, %v1337
      %v1339 = vpop.f32.mrb[0].mxu0
      %1340 = vmatprep.mubr.f32.mxu0 0.0
      %1341 = vmatmul.mubr.f32.gmra.mrb[0].mxu0 %v1228
      %v1342 = vpop.f32.mrb[0].mxu0
      %v1343 = vadd.f32 0.0, %v1342
      %v1344 = vpop.f32.mrb[0].mxu0
      %1345 = vmatprep.mubr.f32.mxu0 0.0
      %1346 = vmatmul.mubr.f32.gmra.mrb[0].mxu0 %v1229
      %v1347 = vpop.f32.mrb[0].mxu0
      %v1348 = vadd.f32 0.0, %v1347
      %v1349 = vpop.f32.mrb[0].mxu0
      %1350 = vdwg.mxu0
      %1351 = vst [vmem:[%s276] sm:$0xff] %v1313
      %1352 = vst [vmem:[%s276 + $0x8] sm:$0xff] %v1318
      %1353 = vst [vmem:[%s276 + $0x10] sm:$0xff] %v1323
      %1354 = vst [vmem:[%s276 + $0x18] sm:$0xff] %v1328
      %1355 = vst [vmem:[%s276 + $0x20] sm:$0xff] %v1333
      %1356 = vst [vmem:[%s276 + $0x28] sm:$0xff] %v1338
      %1357 = vst [vmem:[%s276 + $0x30] sm:$0xff] %v1343
      %1358 = vst [vmem:[%s276 + $0x38] sm:$0xff] %v1348
      %v1359 = vadd.f32 %v1313, %v1318
      %v1360 = vadd.f32 %v1359, %v1323
      %v1361 = vadd.f32 %v1360, %v1328
      %v1362 = vadd.f32 %v1361, %v1333
      %v1363 = vadd.f32 %v1362, %v1338
      %v1364 = vadd.f32 %v1363, %v1343
      %v1365 = vadd.f32 %v1364, %v1348
      %v1366 = vrot.slane %v1365, 4
      %v1367 = vadd.f32 %v1365, %v1366
      %v1368 = vrot.slane %v1367, 2
      %v1369 = vadd.f32 %v1367, %v1368
      %v1370 = vrot.slane %v1369, 1
      %v1371 = vadd.f32 %v1369, %v1370
      %v1372 = vmul.f32 %v1313, %v1313
      %v1373 = vmul.f32 %v1318, %v1318
      %v1374 = vmul.f32 %v1323, %v1323
      %v1375 = vmul.f32 %v1328, %v1328
      %v1376 = vmul.f32 %v1333, %v1333
      %v1377 = vmul.f32 %v1338, %v1338
      %v1378 = vmul.f32 %v1343, %v1343
      %v1379 = vmul.f32 %v1348, %v1348
      %v1380 = vadd.f32 %v1372, %v1373
      %v1381 = vadd.f32 %v1380, %v1374
      %v1382 = vadd.f32 %v1381, %v1375
      %v1383 = vadd.f32 %v1382, %v1376
      %v1384 = vadd.f32 %v1383, %v1377
      %v1385 = vadd.f32 %v1384, %v1378
      %v1386 = vadd.f32 %v1385, %v1379
      %v1387 = vrot.slane %v1386, 4
      %v1388 = vadd.f32 %v1386, %v1387
      %v1389 = vrot.slane %v1388, 2
      %v1390 = vadd.f32 %v1388, %v1389
      %v1391 = vrot.slane %v1390, 1
      %v1392 = vadd.f32 %v1390, %v1391
      %v1393 = vsel %vm1217, %v1371, %v1392
      %v1394 = vsel %vm1219, %v1393, 0.0
      %1395 = vst [vmem:[%s284] sm:$0xff] %v1394
      %p1396 = scmp.lt.s32.totalorder %s18, 1
      %s1397 = scalar_select %p1396, %s18, 1
      %s1398 = smul.addr %s1397, 8
      %s1399 = smul.addr %s1398, 8
      %s1400 = scalar_lea.vmem %s3, %s1399
      %p1401 = scmp.lt.s32.totalorder %s18, 1
      %s1402 = scalar_select %p1401, %s18, 1
      %s1403 = smul.addr %s1402, 8
      %s1404 = smul.addr %s1403, 8
      %s1405 = scalar_lea.vmem %s4, %s1404
      %p1406 = scmp.lt.s32.totalorder %s18, 1
      %s1407 = scalar_select %p1406, %s18, 1
      %s1408 = smul.addr %s1407, 8
      %s1409 = scalar_lea.vmem %s5, %s1408
      %p1410 = scmp.lt.s32.totalorder %s18, 1
      %s1411 = scalar_select %p1410, %s18, 1
      %s1412 = smul.addr %s1411, 8
      %s1413 = scalar_lea.vmem %s6, %s1412
      // Predicated region
      $region33: #{basic_block_forward.3} parent=31 // pred_check
        %p1414 = pneg %p104
      $region34: #{basic_block_forward.3} parent=31 // pred_check_branch
        %1416 = sbr.rel (%p1414) target = $region36
      $region35: #{basic_block_forward.3} parent=31 // pred_region
        _
      $region36: #{basic_block_forward.3} parent=31 // pred_fallthru
        _
      // Predicated region
      $region37: #{basic_block_forward.3} parent=31 // pred_check
        %p1417 = pneg %p130
      $region38: #{basic_block_forward.3} parent=31 // pred_check_branch
        %1419 = sbr.rel (%p1417) target = $region40
      $region39: #{basic_block_forward.3} parent=31 // pred_region
        _
      $region40: #{basic_block_forward.3} parent=31 // pred_fallthru
        _
      // Predicated region
      $region41: #{basic_block_forward.3} parent=31 // pred_check
        %p1420 = pneg %p156
      $region42: #{basic_block_forward.3} parent=31 // pred_check_branch
        %1422 = sbr.rel (%p1420) target = $region44
      $region43: #{basic_block_forward.3} parent=31 // pred_region
        _
      $region44: #{basic_block_forward.3} parent=31 // pred_fallthru
        _
      // Predicated region
      $region45: #{basic_block_forward.3} parent=31 // pred_check
        %p1423 = pneg %p182
      $region46: #{basic_block_forward.3} parent=31 // pred_check_branch
        %1425 = sbr.rel (%p1423) target = $region48
      $region47: #{basic_block_forward.3} parent=31 // pred_region
        _
      $region48: #{basic_block_forward.3} parent=31 // pred_fallthru
        _
    $region32: #{basic_block_forward.3} parent=5 // pred_fallthru
      _
    %p1426 = scmp.le.s32.totalorder 2, %s13
    // Predicated region
    $region49: #{basic_block_forward.3} parent=5 // pred_check
      %p1427 = pneg %p1426
    $region50: #{basic_block_forward.3} parent=5 // pred_check_branch
      %1429 = sbr.rel (%p1427) target = $region52
    $region51: #{basic_block_forward.3} parent=5 // pred_region
      %s1430 = ssub.s32 %s13, 2
      // Predicated region
      $region53: #{basic_block_forward.3} parent=51 // pred_check
        %p1431 = pneg %p110
      $region54: #{basic_block_forward.3} parent=51 // pred_check_branch
        %1433 = sbr.rel (%p1431) target = $region56
      $region55: #{basic_block_forward.3} parent=51 // pred_region
        %p1434 = scmp.lt.s32.totalorder %s19, 1
        %s1435 = scalar_select %p1434, %s19, 1
        %s1436 = smul.addr %s1435, 8
        %s1437 = smul.addr %s1436, 8
        %s1438 = scalar_lea.vmem %s3, %s1437
      $region56: #{basic_block_forward.3} parent=51 // pred_fallthru
        _
      // Predicated region
      $region57: #{basic_block_forward.3} parent=51 // pred_check
        %p1439 = pneg %p136
      $region58: #{basic_block_forward.3} parent=51 // pred_check_branch
        %1441 = sbr.rel (%p1439) target = $region60
      $region59: #{basic_block_forward.3} parent=51 // pred_region
        %p1442 = scmp.lt.s32.totalorder %s19, 1
        %s1443 = scalar_select %p1442, %s19, 1
        %s1444 = smul.addr %s1443, 8
        %s1445 = smul.addr %s1444, 8
        %s1446 = scalar_lea.vmem %s4, %s1445
      $region60: #{basic_block_forward.3} parent=51 // pred_fallthru
        _
      // Predicated region
      $region61: #{basic_block_forward.3} parent=51 // pred_check
        %p1447 = pneg %p162
      $region62: #{basic_block_forward.3} parent=51 // pred_check_branch
        %1449 = sbr.rel (%p1447) target = $region64
      $region63: #{basic_block_forward.3} parent=51 // pred_region
        %p1450 = scmp.lt.s32.totalorder %s19, 1
        %s1451 = scalar_select %p1450, %s19, 1
        %s1452 = smul.addr %s1451, 8
        %s1453 = scalar_lea.vmem %s5, %s1452
      $region64: #{basic_block_forward.3} parent=51 // pred_fallthru
        _
      // Predicated region
      $region65: #{basic_block_forward.3} parent=51 // pred_check
        %p1454 = pneg %p188
      $region66: #{basic_block_forward.3} parent=51 // pred_check_branch
        %1456 = sbr.rel (%p1454) target = $region68
      $region67: #{basic_block_forward.3} parent=51 // pred_region
        %p1457 = scmp.lt.s32.totalorder %s19, 1
        %s1458 = scalar_select %p1457, %s19, 1
        %s1459 = smul.addr %s1458, 8
        %s1460 = scalar_lea.vmem %s6, %s1459
      $region68: #{basic_block_forward.3} parent=51 // pred_fallthru
        _
    $region52: #{basic_block_forward.3} parent=5 // pred_fallthru
      _
  $region6: #{basic_block_forward.3} parent=0 // loop_footer
    %s17 = sadd.s32 1, %s13
  $region7: #{basic_block_forward.3} parent=0 // loop_footer_branch
    %12 = sbr.rel target = $region3
  $region8: #{basic_block_forward.3} parent=0 // loop_exit
    _

// kernel: basic_block_forward.4
$region0: #{basic_block_forward.4}
  #allocation0 [shape = 'u32[]', space=smem, size = 0x4, offset = 0x4, fixed_abs, tag = 'smem constant byte address 0x4 - core index']
  #allocation1 [shape = 'u32[144,128]{1,0:T(1,128)}', space=vmem, size = 0x12000, scoped, tag = 'internal scratch']
  #allocation2 [shape = 'f32[10,10,128]{2,1,0:T(8,128)}', space=vmem, size = 0x14000, scoped, tag = 'scratch operand']
  #allocation3 [shape = 'f32[64,1152]{1,0:T(8,128)}', space=vmem, size = 0x48000, scoped, tag = 'scratch operand']
  %s0 = inlined_call_operand.vmem [shape: f32[2,64,128], index: 0, kind: input, shape index: {}]
  %s1 = inlined_call_operand.vmem [shape: f32[8,128], index: 1, kind: input, shape index: {}]
  %s2 = inlined_call_operand.vmem [shape: f32[1,128], index: 2, kind: input, shape index: {}]
  %s3 = inlined_call_operand.vmem [shape: f32[1,128], index: 3, kind: input, shape index: {}]
  %s4 = inlined_call_operand.vmem [shape: f32[1152,128], index: 4, kind: input, shape index: {}]
  %s5 = inlined_call_operand.vmem [shape: f32[2,64,128], index: 5, kind: output, shape index: {0}]
  %s6 = inlined_call_operand.vmem [shape: f32[2,8,128], index: 6, kind: output, shape index: {1}]
  %7 = xla_tuple %s5, %s6
  %s8 = sld [smem:[#allocation0]]
  $region61: #{basic_block_forward.4} parent=0
    _
  %s10 = ssub.s32 1, %s8
  %s11 = scalar_select 0, %s10, %s8
  loop: start=0, step=1, limit=4
  $region2: #{basic_block_forward.4} parent=0 // loop_pre_header
    _
  $region3: #{basic_block_forward.4} parent=0 // loop_header
    %s13 = sphi 0, %s17
    %p14 = scmp.ge.s32.totalorder %s13, 4
    %s23 = sphi 0, %s25
    %s26 = sphi 0, %s23
    %s27 = sphi 0, %s26
    %s43 = sphi 0, %s27
    %s47 = sphi 0, %s47
    %s49 = sphi 0, %s47
    %s50 = sphi 0, %s49
    %s64 = sphi 0, %s50
    %s68 = sphi 0, %s68
    %s70 = sphi 0, %s68
    %s71 = sphi 0, %s70
    %s85 = sphi 0, %s71
    %s89 = sphi 0, %s89
    %s91 = sphi 0, %s89
    %s92 = sphi 0, %s91
    %s106 = sphi 0, %s92
    %s110 = sphi 0, %s110
    %s112 = sphi 0, %s110
    %s113 = sphi 0, %s112
    %s127 = sphi 0, %s113
    %s133 = sphi 0, %s135
    %s136 = sphi 0, %s133
    %s137 = sphi 0, %s136
    %s153 = sphi 0, %s137
    %s159 = sphi 0, %s161
    %s162 = sphi 0, %s159
    %s163 = sphi 0, %s162
    %s179 = sphi 0, %s163
  $region4: #{basic_block_forward.4} parent=0 // loop_header_branch
    %16 = sbr.rel (%p14) target = $region8
  $region5: #{basic_block_forward.4} parent=0 // loop_body
    %s18 = ssub.s32 %s13, 1
    %s19 = ssub.s32 %s13, 2
    %s20 = sadd.s32 %s13, 1
    %s21 = ssub.s32 %s13, %s20
    %p22 = scmp.eq.s32.totalorder %s21, 0
    %s24 = sadd.s32 %s23, 1
    %s25 = scalar_select %p22, %s23, %s24
    %p28 = pneg %p22
    %p29 = scmp.eq.s32.totalorder %s13, 1
    %p30 = por %p28, %p29
    %p31 = scmp.ne.s32.totalorder %s23, %s26
    %p32 = scmp.eq.s32.totalorder %s13, 0
    %p33 = por %p31, %p32
    %p34 = scmp.ne.s32.totalorder %s23, %s26
    %p35 = scmp.eq.s32.totalorder %s18, 1
    %p36 = por %p34, %p35
    %p37 = scmp.ne.s32.totalorder %s26, %s27
    %p38 = scmp.eq.s32.totalorder %s18, 0
    %p39 = por %p37, %p38
    %p40 = scmp.ne.s32.totalorder %s26, %s27
    %p41 = scmp.eq.s32.totalorder %s19, 1
    %p42 = por %p40, %p41
    %p44 = scmp.ne.s32.totalorder %s27, %s43
    %p45 = scmp.eq.s32.totalorder %s19, 0
    %p46 = por %p44, %p45
    %s48 = sadd.s32 %s47, 1
    %p51 = scmp.eq.s32.totalorder %s13, 1
    %p52 = scmp.ne.s32.totalorder %s47, %s49
    %p53 = scmp.eq.s32.totalorder %s13, 0
    %p54 = por %p52, %p53
    %p55 = scmp.ne.s32.totalorder %s47, %s49
    %p56 = scmp.eq.s32.totalorder %s18, 1
    %p57 = por %p55, %p56
    %p58 = scmp.ne.s32.totalorder %s49, %s50
    %p59 = scmp.eq.s32.totalorder %s18, 0
    %p60 = por %p58, %p59
    %p61 = scmp.ne.s32.totalorder %s49, %s50
    %p62 = scmp.eq.s32.totalorder %s19, 1
    %p63 = por %p61, %p62
    %p65 = scmp.ne.s32.totalorder %s50, %s64
    %p66 = scmp.eq.s32.totalorder %s19, 0
    %p67 = por %p65, %p66
    %s69 = sadd.s32 %s68, 1
    %p72 = scmp.eq.s32.totalorder %s13, 1
    %p73 = scmp.ne.s32.totalorder %s68, %s70
    %p74 = scmp.eq.s32.totalorder %s13, 0
    %p75 = por %p73, %p74
    %p76 = scmp.ne.s32.totalorder %s68, %s70
    %p77 = scmp.eq.s32.totalorder %s18, 1
    %p78 = por %p76, %p77
    %p79 = scmp.ne.s32.totalorder %s70, %s71
    %p80 = scmp.eq.s32.totalorder %s18, 0
    %p81 = por %p79, %p80
    %p82 = scmp.ne.s32.totalorder %s70, %s71
    %p83 = scmp.eq.s32.totalorder %s19, 1
    %p84 = por %p82, %p83
    %p86 = scmp.ne.s32.totalorder %s71, %s85
    %p87 = scmp.eq.s32.totalorder %s19, 0
    %p88 = por %p86, %p87
    %s90 = sadd.s32 %s89, 1
    %p93 = scmp.eq.s32.totalorder %s13, 1
    %p94 = scmp.ne.s32.totalorder %s89, %s91
    %p95 = scmp.eq.s32.totalorder %s13, 0
    %p96 = por %p94, %p95
    %p97 = scmp.ne.s32.totalorder %s89, %s91
    %p98 = scmp.eq.s32.totalorder %s18, 1
    %p99 = por %p97, %p98
    %p100 = scmp.ne.s32.totalorder %s91, %s92
    %p101 = scmp.eq.s32.totalorder %s18, 0
    %p102 = por %p100, %p101
    %p103 = scmp.ne.s32.totalorder %s91, %s92
    %p104 = scmp.eq.s32.totalorder %s19, 1
    %p105 = por %p103, %p104
    %p107 = scmp.ne.s32.totalorder %s92, %s106
    %p108 = scmp.eq.s32.totalorder %s19, 0
    %p109 = por %p107, %p108
    %s111 = sadd.s32 %s110, 1
    %p114 = scmp.eq.s32.totalorder %s13, 1
    %p115 = scmp.ne.s32.totalorder %s110, %s112
    %p116 = scmp.eq.s32.totalorder %s13, 0
    %p117 = por %p115, %p116
    %p118 = scmp.ne.s32.totalorder %s110, %s112
    %p119 = scmp.eq.s32.totalorder %s18, 1
    %p120 = por %p118, %p119
    %p121 = scmp.ne.s32.totalorder %s112, %s113
    %p122 = scmp.eq.s32.totalorder %s18, 0
    %p123 = por %p121, %p122
    %p124 = scmp.ne.s32.totalorder %s112, %s113
    %p125 = scmp.eq.s32.totalorder %s19, 1
    %p126 = por %p124, %p125
    %p128 = scmp.ne.s32.totalorder %s113, %s127
    %p129 = scmp.eq.s32.totalorder %s19, 0
    %p130 = por %p128, %p129
    %s131 = ssub.s32 %s13, %s20
    %p132 = scmp.eq.s32.totalorder %s131, 0
    %s134 = sadd.s32 %s133, 1
    %s135 = scalar_select %p132, %s133, %s134
    %p138 = pneg %p132
    %p139 = scmp.eq.s32.totalorder %s13, 1
    %p140 = por %p138, %p139
    %p141 = scmp.ne.s32.totalorder %s133, %s136
    %p142 = scmp.eq.s32.totalorder %s13, 0
    %p143 = por %p141, %p142
    %p144 = scmp.ne.s32.totalorder %s133, %s136
    %p145 = scmp.eq.s32.totalorder %s18, 1
    %p146 = por %p144, %p145
    %p147 = scmp.ne.s32.totalorder %s136, %s137
    %p148 = scmp.eq.s32.totalorder %s18, 0
    %p149 = por %p147, %p148
    %p150 = scmp.ne.s32.totalorder %s136, %s137
    %p151 = scmp.eq.s32.totalorder %s19, 1
    %p152 = por %p150, %p151
    %p154 = scmp.ne.s32.totalorder %s137, %s153
    %p155 = scmp.eq.s32.totalorder %s19, 0
    %p156 = por %p154, %p155
    %s157 = ssub.s32 %s13, %s20
    %p158 = scmp.eq.s32.totalorder %s157, 0
    %s160 = sadd.s32 %s159, 1
    %s161 = scalar_select %p158, %s159, %s160
    %p164 = pneg %p158
    %p165 = scmp.eq.s32.totalorder %s13, 1
    %p166 = por %p164, %p165
    %p167 = scmp.ne.s32.totalorder %s159, %s162
    %p168 = scmp.eq.s32.totalorder %s13, 0
    %p169 = por %p167, %p168
    %p170 = scmp.ne.s32.totalorder %s159, %s162
    %p171 = scmp.eq.s32.totalorder %s18, 1
    %p172 = por %p170, %p171
    %p173 = scmp.ne.s32.totalorder %s162, %s163
    %p174 = scmp.eq.s32.totalorder %s18, 0
    %p175 = por %p173, %p174
    %p176 = scmp.ne.s32.totalorder %s162, %s163
    %p177 = scmp.eq.s32.totalorder %s19, 1
    %p178 = por %p176, %p177
    %p180 = scmp.ne.s32.totalorder %s163, %s179
    %p181 = scmp.eq.s32.totalorder %s19, 0
    %p182 = por %p180, %p181
    %p183 = scmp.le.s32.totalorder 1, %s13
    %p184 = scmp.lt.s32.totalorder %s13, 3
    %p185 = pnand %p183, %p184
    %p186 = pneg %p185
    // Predicated region
    $region9: #{basic_block_forward.4} parent=5 // pred_check
      _
    $region10: #{basic_block_forward.4} parent=5 // pred_check_branch
      %188 = sbr.rel (%p185) target = $region12
    $region11: #{basic_block_forward.4} parent=5 // pred_region
      %s189 = ssub.s32 %s13, 1
      // Predicated region
      $region13: #{basic_block_forward.4} parent=11 // pred_check
        %p190 = pneg %p60
      $region14: #{basic_block_forward.4} parent=11 // pred_check_branch
        %192 = sbr.rel (%p190) target = $region16
      $region15: #{basic_block_forward.4} parent=11 // pred_region
        _
      $region16: #{basic_block_forward.4} parent=11 // pred_fallthru
        _
      // Predicated region
      $region17: #{basic_block_forward.4} parent=11 // pred_check
        %p193 = pneg %p81
      $region18: #{basic_block_forward.4} parent=11 // pred_check_branch
        %195 = sbr.rel (%p193) target = $region20
      $region19: #{basic_block_forward.4} parent=11 // pred_region
        _
      $region20: #{basic_block_forward.4} parent=11 // pred_fallthru
        _
      // Predicated region
      $region21: #{basic_block_forward.4} parent=11 // pred_check
        %p196 = pneg %p102
      $region22: #{basic_block_forward.4} parent=11 // pred_check_branch
        %198 = sbr.rel (%p196) target = $region24
      $region23: #{basic_block_forward.4} parent=11 // pred_region
        _
      $region24: #{basic_block_forward.4} parent=11 // pred_fallthru
        _
      // Predicated region
      $region25: #{basic_block_forward.4} parent=11 // pred_check
        %p199 = pneg %p123
      $region26: #{basic_block_forward.4} parent=11 // pred_check_branch
        %201 = sbr.rel (%p199) target = $region28
      $region27: #{basic_block_forward.4} parent=11 // pred_region
        _
      $region28: #{basic_block_forward.4} parent=11 // pred_fallthru
        _
    $region12: #{basic_block_forward.4} parent=5 // pred_fallthru
      _
    %p202 = scmp.lt.s32.totalorder %s13, 2
    // Predicated region
    $region29: #{basic_block_forward.4} parent=5 // pred_check
      %p203 = pneg %p202
    $region30: #{basic_block_forward.4} parent=5 // pred_check_branch
      %205 = sbr.rel (%p203) target = $region32
    $region31: #{basic_block_forward.4} parent=5 // pred_region
      // Predicated region
      $region33: #{basic_block_forward.4} parent=31 // pred_check
        %p206 = pneg %p33
      $region34: #{basic_block_forward.4} parent=31 // pred_check_branch
        %208 = sbr.rel (%p206) target = $region36
      $region35: #{basic_block_forward.4} parent=31 // pred_region
        %p209 = scmp.lt.s32.totalorder %s13, 1
        %s210 = scalar_select %p209, %s13, 1
        %s211 = smul.addr %s210, 8
        %s212 = smul.addr %s211, 8
        %s213 = scalar_lea.vmem %s0, %s212
      $region36: #{basic_block_forward.4} parent=31 // pred_fallthru
        _
    $region32: #{basic_block_forward.4} parent=5 // pred_fallthru
      _
    %p214 = scmp.le.s32.totalorder 1, %s13
    %p215 = scmp.lt.s32.totalorder %s13, 3
    %p216 = pnand %p214, %p215
    %p217 = pneg %p216
    // Predicated region
    $region37: #{basic_block_forward.4} parent=5 // pred_check
      _
    $region38: #{basic_block_forward.4} parent=5 // pred_check_branch
      %219 = sbr.rel (%p216) target = $region40
    $region39: #{basic_block_forward.4} parent=5 // pred_region
      %s220 = ssub.s32 %s13, 1
      %p221 = scmp.lt.s32.totalorder %s18, 1
      %s222 = scalar_select %p221, %s18, 1
      %s223 = smul.addr %s222, 8
      %s224 = smul.addr %s223, 8
      %s225 = scalar_lea.vmem %s0, %s224
      %p226 = pneg %p39
      %p227 = pneg %p36
      %p228 = pneg %p60
      %p229 = pneg %p57
      %p230 = pneg %p81
      %p231 = pneg %p78
      %p232 = pneg %p102
      %p233 = pneg %p99
      %p234 = pneg %p123
      %p235 = pneg %p120
      %p236 = pneg %p149
      %p237 = pneg %p146
      %p238 = scmp.lt.s32.totalorder %s18, 1
      %s239 = scalar_select %p238, %s18, 1
      %s240 = smul.addr %s239, 8
      %s241 = smul.addr %s240, 8
      %s242 = scalar_lea.vmem %s5, %s241
      %p243 = pneg %p175
      %p244 = pneg %p172
      %p245 = scmp.lt.s32.totalorder %s18, 1
      %s246 = scalar_select %p245, %s18, 1
      %s247 = smul.addr %s246, 8
      %s248 = scalar_lea.vmem %s6, %s247
      %p249 = scmp.lt.s32.totalorder %s18, 1
      %s250 = scalar_select %p249, %s18, 1
      %s251 = smul.addr %s250, 8
      %s252 = smul.addr %s251, 8
      %s253 = scalar_lea.vmem %s0, %s252
      %p254 = scmp.lt.s32.totalorder %s18, 1
      %s255 = scalar_select %p254, %s18, 1
      %s256 = smul.addr %s255, 8
      %s257 = smul.addr %s256, 8
      %s258 = scalar_lea.vmem %s5, %s257
      %p259 = scmp.lt.s32.totalorder %s18, 1
      %s260 = scalar_select %p259, %s18, 1
      %s261 = smul.addr %s260, 8
      %s262 = scalar_lea.vmem %s6, %s261
      %v263 = vld [vmem:[%s1] sm:$0x1]
      %v264 = vmul.f32 %v263, 0.0078125
      %v265 = vld [vmem:[%s1 + $0x1] sm:$0x1]
      %v266 = vmul.f32 %v265, 0.0078125
      %v267 = vmul.f32 %v264, %v264
      %v268 = vsub.f32 %v266, %v267
      %v269 = vmax.f32 %v268, 0.0
      %v270 = vld [vmem:[%s2] sm:$0x1]
      %v271 = vadd.f32 %v269, 1e-05
      %v272 = vrsqrt.pop %v271
      %v273 = vmul.f32 %v270, %v272
      %v274 = vld [vmem:[%s3] sm:$0x1]
      %v275 = vmul.f32 %v264, %v273
      %v276 = vsub.f32 %v274, %v275
      %v277 = vld [vmem:[%s253] sm:$0xff]
      %v278 = vld [vmem:[%s253 + $0x8] sm:$0xff]
      %v279 = vld [vmem:[%s253 + $0x10] sm:$0xff]
      %v280 = vld [vmem:[%s253 + $0x18] sm:$0xff]
      %v281 = vld [vmem:[%s253 + $0x20] sm:$0xff]
      %v282 = vld [vmem:[%s253 + $0x28] sm:$0xff]
      %v283 = vld [vmem:[%s253 + $0x30] sm:$0xff]
      %v284 = vld [vmem:[%s253 + $0x38] sm:$0xff]
      %v286 = vlaneseq
      %v287 = vshrl.u32 %v286, 7
      %v288 = vsub.s32 0, %v287
      %v289 = vrot.slane %v273, %v288
      %v291 = vmul.f32 %v277, %v289
      %v292 = vmul.f32 %v278, %v289
      %v293 = vmul.f32 %v279, %v289
      %v294 = vmul.f32 %v280, %v289
      %v295 = vmul.f32 %v281, %v289
      %v296 = vmul.f32 %v282, %v289
      %v297 = vmul.f32 %v283, %v289
      %v298 = vmul.f32 %v284, %v289
      %v300 = vlaneseq
      %v301 = vshrl.u32 %v300, 7
      %v302 = vsub.s32 0, %v301
      %v303 = vrot.slane %v276, %v302
      %v305 = vadd.f32 %v291, %v303
      %v306 = vadd.f32 %v292, %v303
      %v307 = vadd.f32 %v293, %v303
      %v308 = vadd.f32 %v294, %v303
      %v309 = vadd.f32 %v295, %v303
      %v310 = vadd.f32 %v296, %v303
      %v311 = vadd.f32 %v297, %v303
      %v312 = vadd.f32 %v298, %v303
      %v313 = vmax.f32 %v305, 0.0
      %v314 = vmax.f32 %v306, 0.0
      %v315 = vmax.f32 %v307, 0.0
      %v316 = vmax.f32 %v308, 0.0
      %v317 = vmax.f32 %v309, 0.0
      %v318 = vmax.f32 %v310, 0.0
      %v319 = vmax.f32 %v311, 0.0
      %v320 = vmax.f32 %v312, 0.0
      %321 = vst [vmem:[#allocation2] sm:$0xff] 0.0
      %322 = vst [vmem:[#allocation2 + $0x8] sm:$0x3] 0.0
      %323 = vst [vmem:[#allocation2 + $0x10] sm:$0xff] 0.0
      %324 = vst [vmem:[#allocation2 + $0x18] sm:$0x3] 0.0
      %325 = vst [vmem:[#allocation2 + $0x20] sm:$0xff] 0.0
      %326 = vst [vmem:[#allocation2 + $0x28] sm:$0x3] 0.0
      %327 = vst [vmem:[#allocation2 + $0x30] sm:$0xff] 0.0
      %328 = vst [vmem:[#allocation2 + $0x38] sm:$0x3] 0.0
      %329 = vst [vmem:[#allocation2 + $0x40] sm:$0xff] 0.0
      %330 = vst [vmem:[#allocation2 + $0x48] sm:$0x3] 0.0
      %331 = vst [vmem:[#allocation2 + $0x50] sm:$0xff] 0.0
      %332 = vst [vmem:[#allocation2 + $0x58] sm:$0x3] 0.0
      %333 = vst [vmem:[#allocation2 + $0x60] sm:$0xff] 0.0
      %334 = vst [vmem:[#allocation2 + $0x68] sm:$0x3] 0.0
      %335 = vst [vmem:[#allocation2 + $0x70] sm:$0xff] 0.0
      %336 = vst [vmem:[#allocation2 + $0x78] sm:$0x3] 0.0
      %337 = vst [vmem:[#allocation2 + $0x80] sm:$0xff] 0.0
      %338 = vst [vmem:[#allocation2 + $0x88] sm:$0x3] 0.0
      %339 = vst [vmem:[#allocation2 + $0x90] sm:$0xff] 0.0
      %340 = vst [vmem:[#allocation2 + $0x98] sm:$0x3] 0.0
      %s341 = scalar_lea.vmem [#allocation2], 16
      %342 = vst [vmem:[%s341 + $0x1] sm:$0xff] %v313
      %343 = vst [vmem:[%s341 + $0x11] sm:$0xff] %v314
      %344 = vst [vmem:[%s341 + $0x21] sm:$0xff] %v315
      %345 = vst [vmem:[%s341 + $0x31] sm:$0xff] %v316
      %346 = vst [vmem:[%s341 + $0x41] sm:$0xff] %v317
      %347 = vst [vmem:[%s341 + $0x51] sm:$0xff] %v318
      %348 = vst [vmem:[%s341 + $0x61] sm:$0xff] %v319
      %349 = vst [vmem:[%s341 + $0x71] sm:$0xff] %v320
      %v350 = vld [vmem:[#allocation2] sm:$0xff]
      %v351 = vld [vmem:[#allocation2 + $0x10] sm:$0xff]
      %v352 = vld [vmem:[#allocation2 + $0x20] sm:$0xff]
      %v353 = vld [vmem:[#allocation2 + $0x30] sm:$0xff]
      %v354 = vld [vmem:[#allocation2 + $0x40] sm:$0xff]
      %v355 = vld [vmem:[#allocation2 + $0x50] sm:$0xff]
      %v356 = vld [vmem:[#allocation2 + $0x60] sm:$0xff]
      %v357 = vld [vmem:[#allocation2 + $0x70] sm:$0xff]
      %358 = vst [vmem:[#allocation3] sm:$0xff] %v350
      %359 = vst [vmem:[#allocation3 + $0x48] sm:$0xff] %v351
      %360 = vst [vmem:[#allocation3 + $0x90] sm:$0xff] %v352
      %361 = vst [vmem:[#allocation3 + $0xd8] sm:$0xff] %v353
      %362 = vst [vmem:[#allocation3 + $0x120] sm:$0xff] %v354
      %363 = vst [vmem:[#allocation3 + $0x168] sm:$0xff] %v355
      %364 = vst [vmem:[#allocation3 + $0x1b0] sm:$0xff] %v356
      %365 = vst [vmem:[#allocation3 + $0x1f8] sm:$0xff] %v357
      %v366 = vld [vmem:[#allocation2 + $0x1] sm:$0xff]
      %v367 = vld [vmem:[#allocation2 + $0x11] sm:$0xff]
      %v368 = vld [vmem:[#allocation2 + $0x21] sm:$0xff]
      %v369 = vld [vmem:[#allocation2 + $0x31] sm:$0xff]
      %v370 = vld [vmem:[#allocation2 + $0x41] sm:$0xff]
      %v371 = vld [vmem:[#allocation2 + $0x51] sm:$0xff]
      %v372 = vld [vmem:[#allocation2 + $0x61] sm:$0xff]
      %v373 = vld [vmem:[#allocation2 + $0x71] sm:$0xff]
      %374 = vst [vmem:[#allocation3 + $0x8] sm:$0xff] %v366
      %375 = vst [vmem:[#allocation3 + $0x50] sm:$0xff] %v367
      %376 = vst [vmem:[#allocation3 + $0x98] sm:$0xff] %v368
      %377 = vst [vmem:[#allocation3 + $0xe0] sm:$0xff] %v369
      %378 = vst [vmem:[#allocation3 + $0x128] sm:$0xff] %v370
      %379 = vst [vmem:[#allocation3 + $0x170] sm:$0xff] %v371
      %380 = vst [vmem:[#allocation3 + $0x1b8] sm:$0xff] %v372
      %381 = vst [vmem:[#allocation3 + $0x200] sm:$0xff] %v373
      %v382 = vld [vmem:[#allocation2 + $0x2] sm:$0xff]
      %v383 = vld [vmem:[#allocation2 + $0x12] sm:$0xff]
      %v384 = vld [vmem:[#allocation2 + $0x22] sm:$0xff]
      %v385 = vld [vmem:[#allocation2 + $0x32] sm:$0xff]
      %v386 = vld [vmem:[#allocation2 + $0x42] sm:$0xff]
      %v387 = vld [vmem:[#allocation2 + $0x52] sm:$0xff]
      %v388 = vld [vmem:[#allocation2 + $0x62] sm:$0xff]
      %v389 = vld [vmem:[#allocation2 + $0x72] sm:$0xff]
      %390 = vst [vmem:[#allocation3 + $0x10] sm:$0xff] %v382
      %391 = vst [vmem:[#allocation3 + $0x58] sm:$0xff] %v383
      %392 = vst [vmem:[#allocation3 + $0xa0] sm:$0xff] %v384
      %393 = vst [vmem:[#allocation3 + $0xe8] sm:$0xff] %v385
      %394 = vst [vmem:[#allocation3 + $0x130] sm:$0xff] %v386
      %395 = vst [vmem:[#allocation3 + $0x178] sm:$0xff] %v387
      %396 = vst [vmem:[#allocation3 + $0x1c0] sm:$0xff] %v388
      %397 = vst [vmem:[#allocation3 + $0x208] sm:$0xff] %v389
      %v398 = vld [vmem:[%s341] sm:$0xff]
      %v399 = vld [vmem:[%s341 + $0x10] sm:$0xff]
      %v400 = vld [vmem:[%s341 + $0x20] sm:$0xff]
      %v401 = vld [vmem:[%s341 + $0x30] sm:$0xff]
      %v402 = vld [vmem:[%s341 + $0x40] sm:$0xff]
      %v403 = vld [vmem:[%s341 + $0x50] sm:$0xff]
      %v404 = vld [vmem:[%s341 + $0x60] sm:$0xff]
      %v405 = vld [vmem:[%s341 + $0x70] sm:$0xff]
      %406 = vst [vmem:[#allocation3 + $0x18] sm:$0xff] %v398
      %407 = vst [vmem:[#allocation3 + $0x60] sm:$0xff] %v399
      %408 = vst [vmem:[#allocation3 + $0xa8] sm:$0xff] %v400
      %409 = vst [vmem:[#allocation3 + $0xf0] sm:$0xff] %v401
      %410 = vst [vmem:[#allocation3 + $0x138] sm:$0xff] %v402
      %411 = vst [vmem:[#allocation3 + $0x180] sm:$0xff] %v403
      %412 = vst [vmem:[#allocation3 + $0x1c8] sm:$0xff] %v404
      %413 = vst [vmem:[#allocation3 + $0x210] sm:$0xff] %v405
      %v414 = vld [vmem:[%s341 + $0x1] sm:$0xff]
      %v415 = vld [vmem:[%s341 + $0x11] sm:$0xff]
      %v416 = vld [vmem:[%s341 + $0x21] sm:$0xff]
      %v417 = vld [vmem:[%s341 + $0x31] sm:$0xff]
      %v418 = vld [vmem:[%s341 + $0x41] sm:$0xff]
      %v419 = vld [vmem:[%s341 + $0x51] sm:$0xff]
      %v420 = vld [vmem:[%s341 + $0x61] sm:$0xff]
      %v421 = vld [vmem:[%s341 + $0x71] sm:$0xff]
      %422 = vst [vmem:[#allocation3 + $0x20] sm:$0xff] %v414
      %423 = vst [vmem:[#allocation3 + $0x68] sm:$0xff] %v415
      %424 = vst [vmem:[#allocation3 + $0xb0] sm:$0xff] %v416
      %425 = vst [vmem:[#allocation3 + $0xf8] sm:$0xff] %v417
      %426 = vst [vmem:[#allocation3 + $0x140] sm:$0xff] %v418
      %427 = vst [vmem:[#allocation3 + $0x188] sm:$0xff] %v419
      %428 = vst [vmem:[#allocation3 + $0x1d0] sm:$0xff] %v420
      %429 = vst [vmem:[#allocation3 + $0x218] sm:$0xff] %v421
      %v430 = vld [vmem:[%s341 + $0x2] sm:$0xff]
      %v431 = vld [vmem:[%s341 + $0x12] sm:$0xff]
      %v432 = vld [vmem:[%s341 + $0x22] sm:$0xff]
      %v433 = vld [vmem:[%s341 + $0x32] sm:$0xff]
      %v434 = vld [vmem:[%s341 + $0x42] sm:$0xff]
      %v435 = vld [vmem:[%s341 + $0x52] sm:$0xff]
      %v436 = vld [vmem:[%s341 + $0x62] sm:$0xff]
      %v437 = vld [vmem:[%s341 + $0x72] sm:$0xff]
      %438 = vst [vmem:[#allocation3 + $0x28] sm:$0xff] %v430
      %439 = vst [vmem:[#allocation3 + $0x70] sm:$0xff] %v431
      %440 = vst [vmem:[#allocation3 + $0xb8] sm:$0xff] %v432
      %441 = vst [vmem:[#allocation3 + $0x100] sm:$0xff] %v433
      %442 = vst [vmem:[#allocation3 + $0x148] sm:$0xff] %v434
      %443 = vst [vmem:[#allocation3 + $0x190] sm:$0xff] %v435
      %444 = vst [vmem:[#allocation3 + $0x1d8] sm:$0xff] %v436
      %445 = vst [vmem:[#allocation3 + $0x220] sm:$0xff] %v437
      %s446 = scalar_lea.vmem [#allocation2], 32
      %v447 = vld [vmem:[%s446] sm:$0xff]
      %v448 = vld [vmem:[%s446 + $0x10] sm:$0xff]
      %v449 = vld [vmem:[%s446 + $0x20] sm:$0xff]
      %v450 = vld [vmem:[%s446 + $0x30] sm:$0xff]
      %v451 = vld [vmem:[%s446 + $0x40] sm:$0xff]
      %v452 = vld [vmem:[%s446 + $0x50] sm:$0xff]
      %v453 = vld [vmem:[%s446 + $0x60] sm:$0xff]
      %v454 = vld [vmem:[%s446 + $0x70] sm:$0xff]
      %455 = vst [vmem:[#allocation3 + $0x30] sm:$0xff] %v447
      %456 = vst [vmem:[#allocation3 + $0x78] sm:$0xff] %v448
      %457 = vst [vmem:[#allocation3 + $0xc0] sm:$0xff] %v449
      %458 = vst [vmem:[#allocation3 + $0x108] sm:$0xff] %v450
      %459 = vst [vmem:[#allocation3 + $0x150] sm:$0xff] %v451
      %460 = vst [vmem:[#allocation3 + $0x198] sm:$0xff] %v452
      %461 = vst [vmem:[#allocation3 + $0x1e0] sm:$0xff] %v453
      %462 = vst [vmem:[#allocation3 + $0x228] sm:$0xff] %v454
      %v463 = vld [vmem:[%s446 + $0x1] sm:$0xff]
      %v464 = vld [vmem:[%s446 + $0x11] sm:$0xff]
      %v465 = vld [vmem:[%s446 + $0x21] sm:$0xff]
      %v466 = vld [vmem:[%s446 + $0x31] sm:$0xff]
      %v467 = vld [vmem:[%s446 + $0x41] sm:$0xff]
      %v468 = vld [vmem:[%s446 + $0x51] sm:$0xff]
      %v469 = vld [vmem:[%s446 + $0x61] sm:$0xff]
      %v470 = vld [vmem:[%s446 + $0x71] sm:$0xff]
      %471 = vst [vmem:[#allocation3 + $0x38] sm:$0xff] %v463
      %472 = vst [vmem:[#allocation3 + $0x80] sm:$0xff] %v464
      %473 = vst [vmem:[#allocation3 + $0xc8] sm:$0xff] %v465
      %474 = vst [vmem:[#allocation3 + $0x110] sm:$0xff] %v466
      %475 = vst [vmem:[#allocation3 + $0x158] sm:$0xff] %v467
      %476 = vst [vmem:[#allocation3 + $0x1a0] sm:$0xff] %v468
      %477 = vst [vmem:[#allocation3 + $0x1e8] sm:$0xff] %v469
      %478 = vst [vmem:[#allocation3 + $0x230] sm:$0xff] %v470
      %v479 = vld [vmem:[%s446 + $0x2] sm:$0xff]
      %v480 = vld [vmem:[%s446 + $0x12] sm:$0xff]
      %v481 = vld [vmem:[%s446 + $0x22] sm:$0xff]
      %v482 = vld [vmem:[%s446 + $0x32] sm:$0xff]
      %v483 = vld [vmem:[%s446 + $0x42] sm:$0xff]
      %v484 = vld [vmem:[%s446 + $0x52] sm:$0xff]
      %v485 = vld [vmem:[%s446 + $0x62] sm:$0xff]
      %v486 = vld [vmem:[%s446 + $0x72] sm:$0xff]
      %487 = vst [vmem:[#allocation3 + $0x40] sm:$0xff] %v479
      %488 = vst [vmem:[#allocation3 + $0x88] sm:$0xff] %v480
      %489 = vst [vmem:[#allocation3 + $0xd0] sm:$0xff] %v481
      %490 = vst [vmem:[#allocation3 + $0x118] sm:$0xff] %v482
      %491 = vst [vmem:[#allocation3 + $0x160] sm:$0xff] %v483
      %492 = vst [vmem:[#allocation3 + $0x1a8] sm:$0xff] %v484
      %493 = vst [vmem:[#allocation3 + $0x1f0] sm:$0xff] %v485
      %494 = vst [vmem:[#allocation3 + $0x238] sm:$0xff] %v486
      %v495 = vld [vmem:[#allocation3] sm:$0xff]
      %v496 = vld [vmem:[#allocation3 + $0x8] sm:$0xff]
      %v497 = vld [vmem:[#allocation3 + $0x10] sm:$0xff]
      %v498 = vld [vmem:[#allocation3 + $0x18] sm:$0xff]
      %v499 = vld [vmem:[#allocation3 + $0x20] sm:$0xff]
      %v500 = vld [vmem:[#allocation3 + $0x28] sm:$0xff]
      %v501 = vld [vmem:[#allocation3 + $0x30] sm:$0xff]
      %v502 = vld [vmem:[#allocation3 + $0x38] sm:$0xff]
      %v503 = vld [vmem:[#allocation3 + $0x40] sm:$0xff]
      %v504 = vld [vmem:[#allocation3 + $0x48] sm:$0xff]
      %v505 = vld [vmem:[#allocation3 + $0x50] sm:$0xff]
      %v506 = vld [vmem:[#allocation3 + $0x58] sm:$0xff]
      %v507 = vld [vmem:[#allocation3 + $0x60] sm:$0xff]
      %v508 = vld [vmem:[#allocation3 + $0x68] sm:$0xff]
      %v509 = vld [vmem:[#allocation3 + $0x70] sm:$0xff]
      %v510 = vld [vmem:[#allocation3 + $0x78] sm:$0xff]
      %v511 = vld [vmem:[#allocation3 + $0x80] sm:$0xff]
      %v512 = vld [vmem:[#allocation3 + $0x88] sm:$0xff]
      %v513 = vld [vmem:[#allocation3 + $0x90] sm:$0xff]
      %v514 = vld [vmem:[#allocation3 + $0x98] sm:$0xff]
      %v515 = vld [vmem:[#allocation3 + $0xa0] sm:$0xff]
      %v516 = vld [vmem:[#allocation3 + $0xa8] sm:$0xff]
      %v517 = vld [vmem:[#allocation3 + $0xb0] sm:$0xff]
      %v518 = vld [vmem:[#allocation3 + $0xb8] sm:$0xff]
      %v519 = vld [vmem:[#allocation3 + $0xc0] sm:$0xff]
      %v520 = vld [vmem:[#allocation3 + $0xc8] sm:$0xff]
      %v521 = vld [vmem:[#allocation3 + $0xd0] sm:$0xff]
      %v522 = vld [vmem:[#allocation3 + $0xd8] sm:$0xff]
      %v523 = vld [vmem:[#allocation3 + $0xe0] sm:$0xff]
      %v524 = vld [vmem:[#allocation3 + $0xe8] sm:$0xff]
      %v525 = vld [vmem:[#allocation3 + $0xf0] sm:$0xff]
      %v526 = vld [vmem:[#allocation3 + $0xf8] sm:$0xff]
      %v527 = vld [vmem:[#allocation3 + $0x100] sm:$0xff]
      %v528 = vld [vmem:[#allocation3 + $0x108] sm:$0xff]
      %v529 = vld [vmem:[#allocation3 + $0x110] sm:$0xff]
      %v530 = vld [vmem:[#allocation3 + $0x118] sm:$0xff]
      %v531 = vld [vmem:[#allocation3 + $0x120] sm:$0xff]
      %v532 = vld [vmem:[#allocation3 + $0x128] sm:$0xff]
      %v533 = vld [vmem:[#allocation3 + $0x130] sm:$0xff]
      %v534 = vld [vmem:[#allocation3 + $0x138] sm:$0xff]
      %v535 = vld [vmem:[#allocation3 + $0x140] sm:$0xff]
      %v536 = vld [vmem:[#allocation3 + $0x148] sm:$0xff]
      %v537 = vld [vmem:[#allocation3 + $0x150] sm:$0xff]
      %v538 = vld [vmem:[#allocation3 + $0x158] sm:$0xff]
      %v539 = vld [vmem:[#allocation3 + $0x160] sm:$0xff]
      %v540 = vld [vmem:[#allocation3 + $0x168] sm:$0xff]
      %v541 = vld [vmem:[#allocation3 + $0x170] sm:$0xff]
      %v542 = vld [vmem:[#allocation3 + $0x178] sm:$0xff]
      %v543 = vld [vmem:[#allocation3 + $0x180] sm:$0xff]
      %v544 = vld [vmem:[#allocation3 + $0x188] sm:$0xff]
      %v545 = vld [vmem:[#allocation3 + $0x190] sm:$0xff]
      %v546 = vld [vmem:[#allocation3 + $0x198] sm:$0xff]
      %v547 = vld [vmem:[#allocation3 + $0x1a0] sm:$0xff]
      %v548 = vld [vmem:[#allocation3 + $0x1a8] sm:$0xff]
      %v549 = vld [vmem:[#allocation3 + $0x1b0] sm:$0xff]
      %v550 = vld [vmem:[#allocation3 + $0x1b8] sm:$0xff]
      %v551 = vld [vmem:[#allocation3 + $0x1c0] sm:$0xff]
      %v552 = vld [vmem:[#allocation3 + $0x1c8] sm:$0xff]
      %v553 = vld [vmem:[#allocation3 + $0x1d0] sm:$0xff]
      %v554 = vld [vmem:[#allocation3 + $0x1d8] sm:$0xff]
      %v555 = vld [vmem:[#allocation3 + $0x1e0] sm:$0xff]
      %v556 = vld [vmem:[#allocation3 + $0x1e8] sm:$0xff]
      %v557 = vld [vmem:[#allocation3 + $0x1f0] sm:$0xff]
      %v558 = vld [vmem:[#allocation3 + $0x1f8] sm:$0xff]
      %v559 = vld [vmem:[#allocation3 + $0x200] sm:$0xff]
      %v560 = vld [vmem:[#allocation3 + $0x208] sm:$0xff]
      %v561 = vld [vmem:[#allocation3 + $0x210] sm:$0xff]
      %v562 = vld [vmem:[#allocation3 + $0x218] sm:$0xff]
      %v563 = vld [vmem:[#allocation3 + $0x220] sm:$0xff]
      %v564 = vld [vmem:[#allocation3 + $0x228] sm:$0xff]
      %v565 = vld [vmem:[#allocation3 + $0x230] sm:$0xff]
      %v566 = vld [vmem:[#allocation3 + $0x238] sm:$0xff]
      %v567 = vld [vmem:[%s4] sm:$0xff]
      %v568 = vld [vmem:[%s4 + $0x8] sm:$0xff]
      %v569 = vld [vmem:[%s4 + $0x10] sm:$0xff]
      %v570 = vld [vmem:[%s4 + $0x18] sm:$0xff]
      %v571 = vld [vmem:[%s4 + $0x20] sm:$0xff]
      %v572 = vld [vmem:[%s4 + $0x28] sm:$0xff]
      %v573 = vld [vmem:[%s4 + $0x30] sm:$0xff]
      %v574 = vld [vmem:[%s4 + $0x38] sm:$0xff]
      %v575 = vld [vmem:[%s4 + $0x40] sm:$0xff]
      %v576 = vld [vmem:[%s4 + $0x48] sm:$0xff]
      %v577 = vld [vmem:[%s4 + $0x50] sm:$0xff]
      %v578 = vld [vmem:[%s4 + $0x58] sm:$0xff]
      %v579 = vld [vmem:[%s4 + $0x60] sm:$0xff]
      %v580 = vld [vmem:[%s4 + $0x68] sm:$0xff]
      %v581 = vld [vmem:[%s4 + $0x70] sm:$0xff]
      %v582 = vld [vmem:[%s4 + $0x78] sm:$0xff]
      %v583 = vld [vmem:[%s4 + $0x80] sm:$0xff]
      %v584 = vld [vmem:[%s4 + $0x88] sm:$0xff]
      %v585 = vld [vmem:[%s4 + $0x90] sm:$0xff]
      %v586 = vld [vmem:[%s4 + $0x98] sm:$0xff]
      %v587 = vld [vmem:[%s4 + $0xa0] sm:$0xff]
      %v588 = vld [vmem:[%s4 + $0xa8] sm:$0xff]
      %v589 = vld [vmem:[%s4 + $0xb0] sm:$0xff]
      %v590 = vld [vmem:[%s4 + $0xb8] sm:$0xff]
      %v591 = vld [vmem:[%s4 + $0xc0] sm:$0xff]
      %v592 = vld [vmem:[%s4 + $0xc8] sm:$0xff]
      %v593 = vld [vmem:[%s4 + $0xd0] sm:$0xff]
      %v594 = vld [vmem:[%s4 + $0xd8] sm:$0xff]
      %v595 = vld [vmem:[%s4 + $0xe0] sm:$0xff]
      %v596 = vld [vmem:[%s4 + $0xe8] sm:$0xff]
      %v597 = vld [vmem:[%s4 + $0xf0] sm:$0xff]
      %v598 = vld [vmem:[%s4 + $0xf8] sm:$0xff]
      %v599 = vld [vmem:[%s4 + $0x100] sm:$0xff]
      %v600 = vld [vmem:[%s4 + $0x108] sm:$0xff]
      %v601 = vld [vmem:[%s4 + $0x110] sm:$0xff]
      %v602 = vld [vmem:[%s4 + $0x118] sm:$0xff]
      %v603 = vld [vmem:[%s4 + $0x120] sm:$0xff]
      %v604 = vld [vmem:[%s4 + $0x128] sm:$0xff]
      %v605 = vld [vmem:[%s4 + $0x130] sm:$0xff]
      %v606 = vld [vmem:[%s4 + $0x138] sm:$0xff]
      %v607 = vld [vmem:[%s4 + $0x140] sm:$0xff]
      %v608 = vld [vmem:[%s4 + $0x148] sm:$0xff]
      %v609 = vld [vmem:[%s4 + $0x150] sm:$0xff]
      %v610 = vld [vmem:[%s4 + $0x158] sm:$0xff]
      %v611 = vld [vmem:[%s4 + $0x160] sm:$0xff]
      %v612 = vld [vmem:[%s4 + $0x168] sm:$0xff]
      %v613 = vld [vmem:[%s4 + $0x170] sm:$0xff]
      %v614 = vld [vmem:[%s4 + $0x178] sm:$0xff]
      %v615 = vld [vmem:[%s4 + $0x180] sm:$0xff]
      %v616 = vld [vmem:[%s4 + $0x188] sm:$0xff]
      %v617 = vld [vmem:[%s4 + $0x190] sm:$0xff]
      %v618 = vld [vmem:[%s4 + $0x198] sm:$0xff]
      %v619 = vld [vmem:[%s4 + $0x1a0] sm:$0xff]
      %v620 = vld [vmem:[%s4 + $0x1a8] sm:$0xff]
      %v621 = vld [vmem:[%s4 + $0x1b0] sm:$0xff]
      %v622 = vld [vmem:[%s4 + $0x1b8] sm:$0xff]
      %v623 = vld [vmem:[%s4 + $0x1c0] sm:$0xff]
      %v624 = vld [vmem:[%s4 + $0x1c8] sm:$0xff]
      %v625 = vld [vmem:[%s4 + $0x1d0] sm:$0xff]
      %v626 = vld [vmem:[%s4 + $0x1d8] sm:$0xff]
      %v627 = vld [vmem:[%s4 + $0x1e0] sm:$0xff]
      %v628 = vld [vmem:[%s4 + $0x1e8] sm:$0xff]
      %v629 = vld [vmem:[%s4 + $0x1f0] sm:$0xff]
      %v630 = vld [vmem:[%s4 + $0x1f8] sm:$0xff]
      %v631 = vld [vmem:[%s4 + $0x200] sm:$0xff]
      %v632 = vld [vmem:[%s4 + $0x208] sm:$0xff]
      %v633 = vld [vmem:[%s4 + $0x210] sm:$0xff]
      %v634 = vld [vmem:[%s4 + $0x218] sm:$0xff]
      %v635 = vld [vmem:[%s4 + $0x220] sm:$0xff]
      %v636 = vld [vmem:[%s4 + $0x228] sm:$0xff]
      %v637 = vld [vmem:[%s4 + $0x230] sm:$0xff]
      %v638 = vld [vmem:[%s4 + $0x238] sm:$0xff]
      %v639 = vld [vmem:[%s4 + $0x240] sm:$0xff]
      %v640 = vld [vmem:[%s4 + $0x248] sm:$0xff]
      %v641 = vld [vmem:[%s4 + $0x250] sm:$0xff]
      %v642 = vld [vmem:[%s4 + $0x258] sm:$0xff]
      %v643 = vld [vmem:[%s4 + $0x260] sm:$0xff]
      %v644 = vld [vmem:[%s4 + $0x268] sm:$0xff]
      %v645 = vld [vmem:[%s4 + $0x270] sm:$0xff]
      %v646 = vld [vmem:[%s4 + $0x278] sm:$0xff]
      %v647 = vld [vmem:[%s4 + $0x280] sm:$0xff]
      %v648 = vld [vmem:[%s4 + $0x288] sm:$0xff]
      %v649 = vld [vmem:[%s4 + $0x290] sm:$0xff]
      %v650 = vld [vmem:[%s4 + $0x298] sm:$0xff]
      %v651 = vld [vmem:[%s4 + $0x2a0] sm:$0xff]
      %v652 = vld [vmem:[%s4 + $0x2a8] sm:$0xff]
      %v653 = vld [vmem:[%s4 + $0x2b0] sm:$0xff]
      %v654 = vld [vmem:[%s4 + $0x2b8] sm:$0xff]
      %v655 = vld [vmem:[%s4 + $0x2c0] sm:$0xff]
      %v656 = vld [vmem:[%s4 + $0x2c8] sm:$0xff]
      %v657 = vld [vmem:[%s4 + $0x2d0] sm:$0xff]
      %v658 = vld [vmem:[%s4 + $0x2d8] sm:$0xff]
      %v659 = vld [vmem:[%s4 + $0x2e0] sm:$0xff]
      %v660 = vld [vmem:[%s4 + $0x2e8] sm:$0xff]
      %v661 = vld [vmem:[%s4 + $0x2f0] sm:$0xff]
      %v662 = vld [vmem:[%s4 + $0x2f8] sm:$0xff]
      %v663 = vld [vmem:[%s4 + $0x300] sm:$0xff]
      %v664 = vld [vmem:[%s4 + $0x308] sm:$0xff]
      %v665 = vld [vmem:[%s4 + $0x310] sm:$0xff]
      %v666 = vld [vmem:[%s4 + $0x318] sm:$0xff]
      %v667 = vld [vmem:[%s4 + $0x320] sm:$0xff]
      %v668 = vld [vmem:[%s4 + $0x328] sm:$0xff]
      %v669 = vld [vmem:[%s4 + $0x330] sm:$0xff]
      %v670 = vld [vmem:[%s4 + $0x338] sm:$0xff]
      %v671 = vld [vmem:[%s4 + $0x340] sm:$0xff]
      %v672 = vld [vmem:[%s4 + $0x348] sm:$0xff]
      %v673 = vld [vmem:[%s4 + $0x350] sm:$0xff]
      %v674 = vld [vmem:[%s4 + $0x358] sm:$0xff]
      %v675 = vld [vmem:[%s4 + $0x360] sm:$0xff]
      %v676 = vld [vmem:[%s4 + $0x368] sm:$0xff]
      %v677 = vld [vmem:[%s4 + $0x370] sm:$0xff]
      %v678 = vld [vmem:[%s4 + $0x378] sm:$0xff]
      %v679 = vld [vmem:[%s4 + $0x380] sm:$0xff]
      %v680 = vld [vmem:[%s4 + $0x388] sm:$0xff]
      %v681 = vld [vmem:[%s4 + $0x390] sm:$0xff]
      %v682 = vld [vmem:[%s4 + $0x398] sm:$0xff]
      %v683 = vld [vmem:[%s4 + $0x3a0] sm:$0xff]
      %v684 = vld [vmem:[%s4 + $0x3a8] sm:$0xff]
      %v685 = vld [vmem:[%s4 + $0x3b0] sm:$0xff]
      %v686 = vld [vmem:[%s4 + $0x3b8] sm:$0xff]
      %v687 = vld [vmem:[%s4 + $0x3c0] sm:$0xff]
      %v688 = vld [vmem:[%s4 + $0x3c8] sm:$0xff]
      %v689 = vld [vmem:[%s4 + $0x3d0] sm:$0xff]
      %v690 = vld [vmem:[%s4 + $0x3d8] sm:$0xff]
      %v691 = vld [vmem:[%s4 + $0x3e0] sm:$0xff]
      %v692 = vld [vmem:[%s4 + $0x3e8] sm:$0xff]
      %v693 = vld [vmem:[%s4 + $0x3f0] sm:$0xff]
      %v694 = vld [vmem:[%s4 + $0x3f8] sm:$0xff]
      %v695 = vld [vmem:[%s4 + $0x400] sm:$0xff]
      %v696 = vld [vmem:[%s4 + $0x408] sm:$0xff]
      %v697 = vld [vmem:[%s4 + $0x410] sm:$0xff]
      %v698 = vld [vmem:[%s4 + $0x418] sm:$0xff]
      %v699 = vld [vmem:[%s4 + $0x420] sm:$0xff]
      %v700 = vld [vmem:[%s4 + $0x428] sm:$0xff]
      %v701 = vld [vmem:[%s4 + $0x430] sm:$0xff]
      %v702 = vld [vmem:[%s4 + $0x438] sm:$0xff]
      %v703 = vld [vmem:[%s4 + $0x440] sm:$0xff]
      %v704 = vld [vmem:[%s4 + $0x448] sm:$0xff]
      %v705 = vld [vmem:[%s4 + $0x450] sm:$0xff]
      %v706 = vld [vmem:[%s4 + $0x458] sm:$0xff]
      %v707 = vld [vmem:[%s4 + $0x460] sm:$0xff]
      %v708 = vld [vmem:[%s4 + $0x468] sm:$0xff]
      %v709 = vld [vmem:[%s4 + $0x470] sm:$0xff]
      %v710 = vld [vmem:[%s4 + $0x478] sm:$0xff]
      %711 = vmatprep.subr.mxu0 0.0
      %712 = vmatpush1.msra.mxu0 %v567
      %713 = vmatprep.subr.mxu0 0.0
      %714 = vmatpush1.msra.mxu0 %v568
      %715 = vmatprep.subr.mxu0 0.0
      %716 = vmatpush1.msra.mxu0 %v569
      %717 = vmatprep.subr.mxu0 0.0
      %718 = vmatpush1.msra.mxu0 %v570
      %719 = vmatprep.subr.mxu0 0.0
      %720 = vmatpush1.msra.mxu0 %v571
      %721 = vmatprep.subr.mxu0 0.0
      %722 = vmatpush1.msra.mxu0 %v572
      %723 = vmatprep.subr.mxu0 0.0
      %724 = vmatpush1.msra.mxu0 %v573
      %725 = vmatprep.subr.mxu0 0.0
      %726 = vmatpush1.msra.mxu0 %v574
      %727 = vmatprep.subr.mxu0 0.0
      %728 = vmatpush1.msra.mxu0 %v575
      %729 = vmatprep.subr.mxu0 0.0
      %730 = vmatpush1.msra.mxu0 %v576
      %731 = vmatprep.subr.mxu0 0.0
      %732 = vmatpush1.msra.mxu0 %v577
      %733 = vmatprep.subr.mxu0 0.0
      %734 = vmatpush1.msra.mxu0 %v578
      %735 = vmatprep.subr.mxu0 0.0
      %736 = vmatpush1.msra.mxu0 %v579
      %737 = vmatprep.subr.mxu0 0.0
      %738 = vmatpush1.msra.mxu0 %v580
      %739 = vmatprep.subr.mxu0 0.0
      %740 = vmatpush1.msra.mxu0 %v581
      %741 = vmatprep.subr.mxu0 0.0
      %742 = vmatpush1.msra.mxu0 %v582
      %743 = vmatprep.subr.mxu0 0.0
      %744 = vmatpush1.msra.mxu0 %v583
      %745 = vmatprep.subr.mxu0 0.0
      %746 = vmatpush1.msra.mxu0 %v584
      %747 = vmatprep.subr.mxu0 0.0
      %748 = vmatpush1.msra.mxu0 %v585
      %749 = vmatprep.subr.mxu0 0.0
      %750 = vmatpush1.msra.mxu0 %v586
      %751 = vmatprep.subr.mxu0 0.0
      %752 = vmatpush1.msra.mxu0 %v587
      %753 = vmatprep.subr.mxu0 0.0
      %754 = vmatpush1.msra.mxu0 %v588
      %755 = vmatprep.subr.mxu0 0.0
      %756 = vmatpush1.msra.mxu0 %v589
      %757 = vmatprep.subr.mxu0 0.0
      %758 = vmatpush1.msra.mxu0 %v590
      %759 = vmatprep.subr.mxu0 0.0
      %760 = vmatpush1.msra.mxu0 %v591
      %761 = vmatprep.subr.mxu0 0.0
      %762 = vmatpush1.msra.mxu0 %v592
      %763 = vmatprep.subr.mxu0 0.0
      %764 = vmatpush1.msra.mxu0 %v593
      %765 = vmatprep.subr.mxu0 0.0
      %766 = vmatpush1.msra.mxu0 %v594
      %767 = vmatprep.subr.mxu0 0.0
      %768 = vmatpush1.msra.mxu0 %v595
      %769 = vmatprep.subr.mxu0 0.0
      %770 = vmatpush1.msra.mxu0 %v596
      %771 = vmatprep.subr.mxu0 0.0
      %772 = vmatpush1.msra.mxu0 %v597
      %773 = vmatprep.subr.mxu0 0.0
      %774 = vmatpush1.msra.mxu0 %v598
      %775 = vmatprep.mubr.f32.mxu0 %v496
      %776 = vmatmul.mubr.f32.gmra.mrb[0].mxu0 %v495
      %v777 = vpop.f32.mrb[0].mxu0
      %v778 = vadd.f32 0.0, %v777
      %v779 = vpop.f32.mrb[0].mxu0
      %780 = vmatprep.mubr.f32.mxu0 %v505
      %781 = vmatmul.mubr.f32.gmra.mrb[0].mxu0 %v504
      %v782 = vpop.f32.mrb[0].mxu0
      %v783 = vadd.f32 0.0, %v782
      %v784 = vpop.f32.mrb[0].mxu0
      %785 = vmatprep.mubr.f32.mxu0 %v514
      %786 = vmatmul.mubr.f32.gmra.mrb[0].mxu0 %v513
      %v787 = vpop.f32.mrb[0].mxu0
      %v788 = vadd.f32 0.0, %v787
      %v789 = vpop.f32.mrb[0].mxu0
      %790 = vmatprep.mubr.f32.mxu0 %v523
      %791 = vmatmul.mubr.f32.gmra.mrb[0].mxu0 %v522
      %v792 = vpop.f32.mrb[0].mxu0
      %v793 = vadd.f32 0.0, %v792
      %v794 = vpop.f32.mrb[0].mxu0
      %795 = vmatprep.mubr.f32.mxu0 %v532
      %796 = vmatmul.mubr.f32.gmra.mrb[0].mxu0 %v531
      %v797 = vpop.f32.mrb[0].mxu0
      %v798 = vadd.f32 0.0, %v797
      %v799 = vpop.f32.mrb[0].mxu0
      %800 = vmatprep.mubr.f32.mxu0 %v541
      %801 = vmatmul.mubr.f32.gmra.mrb[0].mxu0 %v540
      %v802 = vpop.f32.mrb[0].mxu0
      %v803 = vadd.f32 0.0, %v802
      %v804 = vpop.f32.mrb[0].mxu0
      %805 = vmatprep.mubr.f32.mxu0 %v550
      %806 = vmatmul.mubr.f32.gmra.mrb[0].mxu0 %v549
      %v807 = vpop.f32.mrb[0].mxu0
      %v808 = vadd.f32 0.0, %v807
      %v809 = vpop.f32.mrb[0].mxu0
      %810 = vmatprep.mubr.f32.mxu0 %v559
      %811 = vmatmul.mubr.f32.gmra.mrb[0].mxu0 %v558
      %v812 = vpop.f32.mrb[0].mxu0
      %v813 = vadd.f32 0.0, %v812
      %v814 = vpop.f32.mrb[0].mxu0
      %815 = vdwg.mxu0
      %816 = vmatprep.subr.mxu0 0.0
      %817 = vmatpush1.msra.mxu0 %v599
      %818 = vmatprep.subr.mxu0 0.0
      %819 = vmatpush1.msra.mxu0 %v600
      %820 = vmatprep.subr.mxu0 0.0
      %821 = vmatpush1.msra.mxu0 %v601
      %822 = vmatprep.subr.mxu0 0.0
      %823 = vmatpush1.msra.mxu0 %v602
      %824 = vmatprep.subr.mxu0 0.0
      %825 = vmatpush1.msra.mxu0 %v603
      %826 = vmatprep.subr.mxu0 0.0
      %827 = vmatpush1.msra.mxu0 %v604
      %828 = vmatprep.subr.mxu0 0.0
      %829 = vmatpush1.msra.mxu0 %v605
      %830 = vmatprep.subr.mxu0 0.0
      %831 = vmatpush1.msra.mxu0 %v606
      %832 = vmatprep.subr.mxu0 0.0
      %833 = vmatpush1.msra.mxu0 %v607
      %834 = vmatprep.subr.mxu0 0.0
      %835 = vmatpush1.msra.mxu0 %v608
      %836 = vmatprep.subr.mxu0 0.0
      %837 = vmatpush1.msra.mxu0 %v609
      %838 = vmatprep.subr.mxu0 0.0
      %839 = vmatpush1.msra.mxu0 %v610
      %840 = vmatprep.subr.mxu0 0.0
      %841 = vmatpush1.msra.mxu0 %v611
      %842 = vmatprep.subr.mxu0 0.0
      %843 = vmatpush1.msra.mxu0 %v612
      %844 = vmatprep.subr.mxu0 0.0
      %845 = vmatpush1.msra.mxu0 %v613
      %846 = vmatprep.subr.mxu0 0.0
      %847 = vmatpush1.msra.mxu0 %v614
      %848 = vmatprep.subr.mxu0 0.0
      %849 = vmatpush1.msra.mxu0 %v615
      %850 = vmatprep.subr.mxu0 0.0
      %851 = vmatpush1.msra.mxu0 %v616
      %852 = vmatprep.subr.mxu0 0.0
      %853 = vmatpush1.msra.mxu0 %v617
      %854 = vmatprep.subr.mxu0 0.0
      %855 = vmatpush1.msra.mxu0 %v618
      %856 = vmatprep.subr.mxu0 0.0
      %857 = vmatpush1.msra.mxu0 %v619
      %858 = vmatprep.subr.mxu0 0.0
      %859 = vmatpush1.msra.mxu0 %v620
      %860 = vmatprep.subr.mxu0 0.0
      %861 = vmatpush1.msra.mxu0 %v621
      %862 = vmatprep.subr.mxu0 0.0
      %863 = vmatpush1.msra.mxu0 %v622
      %864 = vmatprep.subr.mxu0 0.0
      %865 = vmatpush1.msra.mxu0 %v623
      %866 = vmatprep.subr.mxu0 0.0
      %867 = vmatpush1.msra.mxu0 %v624
      %868 = vmatprep.subr.mxu0 0.0
      %869 = vmatpush1.msra.mxu0 %v625
      %870 = vmatprep.subr.mxu0 0.0
      %871 = vmatpush1.msra.mxu0 %v626
      %872 = vmatprep.subr.mxu0 0.0
      %873 = vmatpush1.msra.mxu0 %v627
      %874 = vmatprep.subr.mxu0 0.0
      %875 = vmatpush1.msra.mxu0 %v628
      %876 = vmatprep.subr.mxu0 0.0
      %877 = vmatpush1.msra.mxu0 %v629
      %878 = vmatprep.subr.mxu0 0.0
      %879 = vmatpush1.msra.mxu0 %v630
      %880 = vmatprep.mubr.f32.mxu0 %v498
      %881 = vmatmul.mubr.f32.gmra.mrb[0].mxu0 %v497
      %v882 = vpop.f32.mrb[0].mxu0
      %v883 = vadd.f32 %v778, %v882
      %v884 = vpop.f32.mrb[0].mxu0
      %885 = vmatprep.mubr.f32.mxu0 %v507
      %886 = vmatmul.mubr.f32.gmra.mrb[0].mxu0 %v506
      %v887 = vpop.f32.mrb[0].mxu0
      %v888 = vadd.f32 %v783, %v887
      %v889 = vpop.f32.mrb[0].mxu0
      %890 = vmatprep.mubr.f32.mxu0 %v516
      %891 = vmatmul.mubr.f32.gmra.mrb[0].mxu0 %v515
      %v892 = vpop.f32.mrb[0].mxu0
      %v893 = vadd.f32 %v788, %v892
      %v894 = vpop.f32.mrb[0].mxu0
      %895 = vmatprep.mubr.f32.mxu0 %v525
      %896 = vmatmul.mubr.f32.gmra.mrb[0].mxu0 %v524
      %v897 = vpop.f32.mrb[0].mxu0
      %v898 = vadd.f32 %v793, %v897
      %v899 = vpop.f32.mrb[0].mxu0
      %900 = vmatprep.mubr.f32.mxu0 %v534
      %901 = vmatmul.mubr.f32.gmra.mrb[0].mxu0 %v533
      %v902 = vpop.f32.mrb[0].mxu0
      %v903 = vadd.f32 %v798, %v902
      %v904 = vpop.f32.mrb[0].mxu0
      %905 = vmatprep.mubr.f32.mxu0 %v543
      %906 = vmatmul.mubr.f32.gmra.mrb[0].mxu0 %v542
      %v907 = vpop.f32.mrb[0].mxu0
      %v908 = vadd.f32 %v803, %v907
      %v909 = vpop.f32.mrb[0].mxu0
      %910 = vmatprep.mubr.f32.mxu0 %v552
      %911 = vmatmul.mubr.f32.gmra.mrb[0].mxu0 %v551
      %v912 = vpop.f32.mrb[0].mxu0
      %v913 = vadd.f32 %v808, %v912
      %v914 = vpop.f32.mrb[0].mxu0
      %915 = vmatprep.mubr.f32.mxu0 %v561
      %916 = vmatmul.mubr.f32.gmra.mrb[0].mxu0 %v560
      %v917 = vpop.f32.mrb[0].mxu0
      %v918 = vadd.f32 %v813, %v917
      %v919 = vpop.f32.mrb[0].mxu0
      %920 = vdwg.mxu0
      %921 = vmatprep.subr.mxu0 0.0
      %922 = vmatpush1.msra.mxu0 %v631
      %923 = vmatprep.subr.mxu0 0.0
      %924 = vmatpush1.msra.mxu0 %v632
      %925 = vmatprep.subr.mxu0 0.0
      %926 = vmatpush1.msra.mxu0 %v633
      %927 = vmatprep.subr.mxu0 0.0
      %928 = vmatpush1.msra.mxu0 %v634
      %929 = vmatprep.subr.mxu0 0.0
      %930 = vmatpush1.msra.mxu0 %v635
      %931 = vmatprep.subr.mxu0 0.0
      %932 = vmatpush1.msra.mxu0 %v636
      %933 = vmatprep.subr.mxu0 0.0
      %934 = vmatpush1.msra.mxu0 %v637
      %935 = vmatprep.subr.mxu0 0.0
      %936 = vmatpush1.msra.mxu0 %v638
      %937 = vmatprep.subr.mxu0 0.0
      %938 = vmatpush1.msra.mxu0 %v639
      %939 = vmatprep.subr.mxu0 0.0
      %940 = vmatpush1.msra.mxu0 %v640
      %941 = vmatprep.subr.mxu0 0.0
      %942 = vmatpush1.msra.mxu0 %v641
      %943 = vmatprep.subr.mxu0 0.0
      %944 = vmatpush1.msra.mxu0 %v642
      %945 = vmatprep.subr.mxu0 0.0
      %946 = vmatpush1.msra.mxu0 %v643
      %947 = vmatprep.subr.mxu0 0.0
      %948 = vmatpush1.msra.mxu0 %v644
      %949 = vmatprep.subr.mxu0 0.0
      %950 = vmatpush1.msra.mxu0 %v645
      %951 = vmatprep.subr.mxu0 0.0
      %952 = vmatpush1.msra.mxu0 %v646
      %953 = vmatprep.subr.mxu0 0.0
      %954 = vmatpush1.msra.mxu0 %v647
      %955 = vmatprep.subr.mxu0 0.0
      %956 = vmatpush1.msra.mxu0 %v648
      %957 = vmatprep.subr.mxu0 0.0
      %958 = vmatpush1.msra.mxu0 %v649
      %959 = vmatprep.subr.mxu0 0.0
      %960 = vmatpush1.msra.mxu0 %v650
      %961 = vmatprep.subr.mxu0 0.0
      %962 = vmatpush1.msra.mxu0 %v651
      %963 = vmatprep.subr.mxu0 0.0
      %964 = vmatpush1.msra.mxu0 %v652
      %965 = vmatprep.subr.mxu0 0.0
      %966 = vmatpush1.msra.mxu0 %v653
      %967 = vmatprep.subr.mxu0 0.0
      %968 = vmatpush1.msra.mxu0 %v654
      %969 = vmatprep.subr.mxu0 0.0
      %970 = vmatpush1.msra.mxu0 %v655
      %971 = vmatprep.subr.mxu0 0.0
      %972 = vmatpush1.msra.mxu0 %v656
      %973 = vmatprep.subr.mxu0 0.0
      %974 = vmatpush1.msra.mxu0 %v657
      %975 = vmatprep.subr.mxu0 0.0
      %976 = vmatpush1.msra.mxu0 %v658
      %977 = vmatprep.subr.mxu0 0.0
      %978 = vmatpush1.msra.mxu0 %v659
      %979 = vmatprep.subr.mxu0 0.0
      %980 = vmatpush1.msra.mxu0 %v660
      %981 = vmatprep.subr.mxu0 0.0
      %982 = vmatpush1.msra.mxu0 %v661
      %983 = vmatprep.subr.mxu0 0.0
      %984 = vmatpush1.msra.mxu0 %v662
      %985 = vmatprep.mubr.f32.mxu0 %v500
      %986 = vmatmul.mubr.f32.gmra.mrb[0].mxu0 %v499
      %v987 = vpop.f32.mrb[0].mxu0
      %v988 = vadd.f32 %v883, %v987
      %v989 = vpop.f32.mrb[0].mxu0
      %990 = vmatprep.mubr.f32.mxu0 %v509
      %991 = vmatmul.mubr.f32.gmra.mrb[0].mxu0 %v508
      %v992 = vpop.f32.mrb[0].mxu0
      %v993 = vadd.f32 %v888, %v992
      %v994 = vpop.f32.mrb[0].mxu0
      %995 = vmatprep.mubr.f32.mxu0 %v518
      %996 = vmatmul.mubr.f32.gmra.mrb[0].mxu0 %v517
      %v997 = vpop.f32.mrb[0].mxu0
      %v998 = vadd.f32 %v893, %v997
      %v999 = vpop.f32.mrb[0].mxu0
      %1000 = vmatprep.mubr.f32.mxu0 %v527
      %1001 = vmatmul.mubr.f32.gmra.mrb[0].mxu0 %v526
      %v1002 = vpop.f32.mrb[0].mxu0
      %v1003 = vadd.f32 %v898, %v1002
      %v1004 = vpop.f32.mrb[0].mxu0
      %1005 = vmatprep.mubr.f32.mxu0 %v536
      %1006 = vmatmul.mubr.f32.gmra.mrb[0].mxu0 %v535
      %v1007 = vpop.f32.mrb[0].mxu0
      %v1008 = vadd.f32 %v903, %v1007
      %v1009 = vpop.f32.mrb[0].mxu0
      %1010 = vmatprep.mubr.f32.mxu0 %v545
      %1011 = vmatmul.mubr.f32.gmra.mrb[0].mxu0 %v544
      %v1012 = vpop.f32.mrb[0].mxu0
      %v1013 = vadd.f32 %v908, %v1012
      %v1014 = vpop.f32.mrb[0].mxu0
      %1015 = vmatprep.mubr.f32.mxu0 %v554
      %1016 = vmatmul.mubr.f32.gmra.mrb[0].mxu0 %v553
      %v1017 = vpop.f32.mrb[0].mxu0
      %v1018 = vadd.f32 %v913, %v1017
      %v1019 = vpop.f32.mrb[0].mxu0
      %1020 = vmatprep.mubr.f32.mxu0 %v563
      %1021 = vmatmul.mubr.f32.gmra.mrb[0].mxu0 %v562
      %v1022 = vpop.f32.mrb[0].mxu0
      %v1023 = vadd.f32 %v918, %v1022
      %v1024 = vpop.f32.mrb[0].mxu0
      %1025 = vdwg.mxu0
      %1026 = vmatprep.subr.mxu0 0.0
      %1027 = vmatpush1.msra.mxu0 %v663
      %1028 = vmatprep.subr.mxu0 0.0
      %1029 = vmatpush1.msra.mxu0 %v664
      %1030 = vmatprep.subr.mxu0 0.0
      %1031 = vmatpush1.msra.mxu0 %v665
      %1032 = vmatprep.subr.mxu0 0.0
      %1033 = vmatpush1.msra.mxu0 %v666
      %1034 = vmatprep.subr.mxu0 0.0
      %1035 = vmatpush1.msra.mxu0 %v667
      %1036 = vmatprep.subr.mxu0 0.0
      %1037 = vmatpush1.msra.mxu0 %v668
      %1038 = vmatprep.subr.mxu0 0.0
      %1039 = vmatpush1.msra.mxu0 %v669
      %1040 = vmatprep.subr.mxu0 0.0
      %1041 = vmatpush1.msra.mxu0 %v670
      %1042 = vmatprep.subr.mxu0 0.0
      %1043 = vmatpush1.msra.mxu0 %v671
      %1044 = vmatprep.subr.mxu0 0.0
      %1045 = vmatpush1.msra.mxu0 %v672
      %1046 = vmatprep.subr.mxu0 0.0
      %1047 = vmatpush1.msra.mxu0 %v673
      %1048 = vmatprep.subr.mxu0 0.0
      %1049 = vmatpush1.msra.mxu0 %v674
      %1050 = vmatprep.subr.mxu0 0.0
      %1051 = vmatpush1.msra.mxu0 %v675
      %1052 = vmatprep.subr.mxu0 0.0
      %1053 = vmatpush1.msra.mxu0 %v676
      %1054 = vmatprep.subr.mxu0 0.0
      %1055 = vmatpush1.msra.mxu0 %v677
      %1056 = vmatprep.subr.mxu0 0.0
      %1057 = vmatpush1.msra.mxu0 %v678
      %1058 = vmatprep.subr.mxu0 0.0
      %1059 = vmatpush1.msra.mxu0 %v679
      %1060 = vmatprep.subr.mxu0 0.0
      %1061 = vmatpush1.msra.mxu0 %v680
      %1062 = vmatprep.subr.mxu0 0.0
      %1063 = vmatpush1.msra.mxu0 %v681
      %1064 = vmatprep.subr.mxu0 0.0
      %1065 = vmatpush1.msra.mxu0 %v682
      %1066 = vmatprep.subr.mxu0 0.0
      %1067 = vmatpush1.msra.mxu0 %v683
      %1068 = vmatprep.subr.mxu0 0.0
      %1069 = vmatpush1.msra.mxu0 %v684
      %1070 = vmatprep.subr.mxu0 0.0
      %1071 = vmatpush1.msra.mxu0 %v685
      %1072 = vmatprep.subr.mxu0 0.0
      %1073 = vmatpush1.msra.mxu0 %v686
      %1074 = vmatprep.subr.mxu0 0.0
      %1075 = vmatpush1.msra.mxu0 %v687
      %1076 = vmatprep.subr.mxu0 0.0
      %1077 = vmatpush1.msra.mxu0 %v688
      %1078 = vmatprep.subr.mxu0 0.0
      %1079 = vmatpush1.msra.mxu0 %v689
      %1080 = vmatprep.subr.mxu0 0.0
      %1081 = vmatpush1.msra.mxu0 %v690
      %1082 = vmatprep.subr.mxu0 0.0
      %1083 = vmatpush1.msra.mxu0 %v691
      %1084 = vmatprep.subr.mxu0 0.0
      %1085 = vmatpush1.msra.mxu0 %v692
      %1086 = vmatprep.subr.mxu0 0.0
      %1087 = vmatpush1.msra.mxu0 %v693
      %1088 = vmatprep.subr.mxu0 0.0
      %1089 = vmatpush1.msra.mxu0 %v694
      %1090 = vmatprep.mubr.f32.mxu0 %v502
      %1091 = vmatmul.mubr.f32.gmra.mrb[0].mxu0 %v501
      %v1092 = vpop.f32.mrb[0].mxu0
      %v1093 = vadd.f32 %v988, %v1092
      %v1094 = vpop.f32.mrb[0].mxu0
      %1095 = vmatprep.mubr.f32.mxu0 %v511
      %1096 = vmatmul.mubr.f32.gmra.mrb[0].mxu0 %v510
      %v1097 = vpop.f32.mrb[0].mxu0
      %v1098 = vadd.f32 %v993, %v1097
      %v1099 = vpop.f32.mrb[0].mxu0
      %1100 = vmatprep.mubr.f32.mxu0 %v520
      %1101 = vmatmul.mubr.f32.gmra.mrb[0].mxu0 %v519
      %v1102 = vpop.f32.mrb[0].mxu0
      %v1103 = vadd.f32 %v998, %v1102
      %v1104 = vpop.f32.mrb[0].mxu0
      %1105 = vmatprep.mubr.f32.mxu0 %v529
      %1106 = vmatmul.mubr.f32.gmra.mrb[0].mxu0 %v528
      %v1107 = vpop.f32.mrb[0].mxu0
      %v1108 = vadd.f32 %v1003, %v1107
      %v1109 = vpop.f32.mrb[0].mxu0
      %1110 = vmatprep.mubr.f32.mxu0 %v538
      %1111 = vmatmul.mubr.f32.gmra.mrb[0].mxu0 %v537
      %v1112 = vpop.f32.mrb[0].mxu0
      %v1113 = vadd.f32 %v1008, %v1112
      %v1114 = vpop.f32.mrb[0].mxu0
      %1115 = vmatprep.mubr.f32.mxu0 %v547
      %1116 = vmatmul.mubr.f32.gmra.mrb[0].mxu0 %v546
      %v1117 = vpop.f32.mrb[0].mxu0
      %v1118 = vadd.f32 %v1013, %v1117
      %v1119 = vpop.f32.mrb[0].mxu0
      %1120 = vmatprep.mubr.f32.mxu0 %v556
      %1121 = vmatmul.mubr.f32.gmra.mrb[0].mxu0 %v555
      %v1122 = vpop.f32.mrb[0].mxu0
      %v1123 = vadd.f32 %v1018, %v1122
      %v1124 = vpop.f32.mrb[0].mxu0
      %1125 = vmatprep.mubr.f32.mxu0 %v565
      %1126 = vmatmul.mubr.f32.gmra.mrb[0].mxu0 %v564
      %v1127 = vpop.f32.mrb[0].mxu0
      %v1128 = vadd.f32 %v1023, %v1127
      %v1129 = vpop.f32.mrb[0].mxu0
      %1130 = vdwg.mxu0
      %1131 = vmatprep.subr.mxu0 0.0
      %1132 = vmatpush1.msra.mxu0 %v695
      %1133 = vmatprep.subr.mxu0 0.0
      %1134 = vmatpush1.msra.mxu0 %v696
      %1135 = vmatprep.subr.mxu0 0.0
      %1136 = vmatpush1.msra.mxu0 %v697
      %1137 = vmatprep.subr.mxu0 0.0
      %1138 = vmatpush1.msra.mxu0 %v698
      %1139 = vmatprep.subr.mxu0 0.0
      %1140 = vmatpush1.msra.mxu0 %v699
      %1141 = vmatprep.subr.mxu0 0.0
      %1142 = vmatpush1.msra.mxu0 %v700
      %1143 = vmatprep.subr.mxu0 0.0
      %1144 = vmatpush1.msra.mxu0 %v701
      %1145 = vmatprep.subr.mxu0 0.0
      %1146 = vmatpush1.msra.mxu0 %v702
      %1147 = vmatprep.subr.mxu0 0.0
      %1148 = vmatpush1.msra.mxu0 %v703
      %1149 = vmatprep.subr.mxu0 0.0
      %1150 = vmatpush1.msra.mxu0 %v704
      %1151 = vmatprep.subr.mxu0 0.0
      %1152 = vmatpush1.msra.mxu0 %v705
      %1153 = vmatprep.subr.mxu0 0.0
      %1154 = vmatpush1.msra.mxu0 %v706
      %1155 = vmatprep.subr.mxu0 0.0
      %1156 = vmatpush1.msra.mxu0 %v707
      %1157 = vmatprep.subr.mxu0 0.0
      %1158 = vmatpush1.msra.mxu0 %v708
      %1159 = vmatprep.subr.mxu0 0.0
      %1160 = vmatpush1.msra.mxu0 %v709
      %1161 = vmatprep.subr.mxu0 0.0
      %1162 = vmatpush1.msra.mxu0 %v710
      %1163 = vmatprep.subr.mxu0 0.0
      %1164 = vmatpush1.msra.mxu0 0.0
      %1165 = vmatprep.subr.mxu0 0.0
      %1166 = vmatpush1.msra.mxu0 0.0
      %1167 = vmatprep.subr.mxu0 0.0
      %1168 = vmatpush1.msra.mxu0 0.0
      %1169 = vmatprep.subr.mxu0 0.0
      %1170 = vmatpush1.msra.mxu0 0.0
      %1171 = vmatprep.subr.mxu0 0.0
      %1172 = vmatpush1.msra.mxu0 0.0
      %1173 = vmatprep.subr.mxu0 0.0
      %1174 = vmatpush1.msra.mxu0 0.0
      %1175 = vmatprep.subr.mxu0 0.0
      %1176 = vmatpush1.msra.mxu0 0.0
      %1177 = vmatprep.subr.mxu0 0.0
      %1178 = vmatpush1.msra.mxu0 0.0
      %1179 = vmatprep.subr.mxu0 0.0
      %1180 = vmatpush1.msra.mxu0 0.0
      %1181 = vmatprep.subr.mxu0 0.0
      %1182 = vmatpush1.msra.mxu0 0.0
      %1183 = vmatprep.subr.mxu0 0.0
      %1184 = vmatpush1.msra.mxu0 0.0
      %1185 = vmatprep.subr.mxu0 0.0
      %1186 = vmatpush1.msra.mxu0 0.0
      %1187 = vmatprep.subr.mxu0 0.0
      %1188 = vmatpush1.msra.mxu0 0.0
      %1189 = vmatprep.subr.mxu0 0.0
      %1190 = vmatpush1.msra.mxu0 0.0
      %1191 = vmatprep.subr.mxu0 0.0
      %1192 = vmatpush1.msra.mxu0 0.0
      %1193 = vmatprep.subr.mxu0 0.0
      %1194 = vmatpush1.msra.mxu0 0.0
      %1195 = vmatprep.mubr.f32.mxu0 0.0
      %1196 = vmatmul.mubr.f32.gmra.mrb[0].mxu0 %v503
      %v1197 = vpop.f32.mrb[0].mxu0
      %v1198 = vadd.f32 %v1093, %v1197
      %v1199 = vpop.f32.mrb[0].mxu0
      %1200 = vmatprep.mubr.f32.mxu0 0.0
      %1201 = vmatmul.mubr.f32.gmra.mrb[0].mxu0 %v512
      %v1202 = vpop.f32.mrb[0].mxu0
      %v1203 = vadd.f32 %v1098, %v1202
      %v1204 = vpop.f32.mrb[0].mxu0
      %1205 = vmatprep.mubr.f32.mxu0 0.0
      %1206 = vmatmul.mubr.f32.gmra.mrb[0].mxu0 %v521
      %v1207 = vpop.f32.mrb[0].mxu0
      %v1208 = vadd.f32 %v1103, %v1207
      %v1209 = vpop.f32.mrb[0].mxu0
      %1210 = vmatprep.mubr.f32.mxu0 0.0
      %1211 = vmatmul.mubr.f32.gmra.mrb[0].mxu0 %v530
      %v1212 = vpop.f32.mrb[0].mxu0
      %v1213 = vadd.f32 %v1108, %v1212
      %v1214 = vpop.f32.mrb[0].mxu0
      %1215 = vmatprep.mubr.f32.mxu0 0.0
      %1216 = vmatmul.mubr.f32.gmra.mrb[0].mxu0 %v539
      %v1217 = vpop.f32.mrb[0].mxu0
      %v1218 = vadd.f32 %v1113, %v1217
      %v1219 = vpop.f32.mrb[0].mxu0
      %1220 = vmatprep.mubr.f32.mxu0 0.0
      %1221 = vmatmul.mubr.f32.gmra.mrb[0].mxu0 %v548
      %v1222 = vpop.f32.mrb[0].mxu0
      %v1223 = vadd.f32 %v1118, %v1222
      %v1224 = vpop.f32.mrb[0].mxu0
      %1225 = vmatprep.mubr.f32.mxu0 0.0
      %1226 = vmatmul.mubr.f32.gmra.mrb[0].mxu0 %v557
      %v1227 = vpop.f32.mrb[0].mxu0
      %v1228 = vadd.f32 %v1123, %v1227
      %v1229 = vpop.f32.mrb[0].mxu0
      %1230 = vmatprep.mubr.f32.mxu0 0.0
      %1231 = vmatmul.mubr.f32.gmra.mrb[0].mxu0 %v566
      %v1232 = vpop.f32.mrb[0].mxu0
      %v1233 = vadd.f32 %v1128, %v1232
      %v1234 = vpop.f32.mrb[0].mxu0
      %1235 = vdwg.mxu0
      %1236 = vst [vmem:[%s258] sm:$0xff] %v1198
      %1237 = vst [vmem:[%s258 + $0x8] sm:$0xff] %v1203
      %1238 = vst [vmem:[%s258 + $0x10] sm:$0xff] %v1208
      %1239 = vst [vmem:[%s258 + $0x18] sm:$0xff] %v1213
      %1240 = vst [vmem:[%s258 + $0x20] sm:$0xff] %v1218
      %1241 = vst [vmem:[%s258 + $0x28] sm:$0xff] %v1223
      %1242 = vst [vmem:[%s258 + $0x30] sm:$0xff] %v1228
      %1243 = vst [vmem:[%s258 + $0x38] sm:$0xff] %v1233
      %v1244 = vadd.f32 %v1198, %v1203
      %v1245 = vadd.f32 %v1244, %v1208
      %v1246 = vadd.f32 %v1245, %v1213
      %v1247 = vadd.f32 %v1246, %v1218
      %v1248 = vadd.f32 %v1247, %v1223
      %v1249 = vadd.f32 %v1248, %v1228
      %v1250 = vadd.f32 %v1249, %v1233
      %v1251 = vrot.slane %v1250, 4
      %v1252 = vadd.f32 %v1250, %v1251
      %v1253 = vrot.slane %v1252, 2
      %v1254 = vadd.f32 %v1252, %v1253
      %v1255 = vrot.slane %v1254, 1
      %v1256 = vadd.f32 %v1254, %v1255
      %v1257 = vmul.f32 %v1198, %v1198
      %v1258 = vmul.f32 %v1203, %v1203
      %v1259 = vmul.f32 %v1208, %v1208
      %v1260 = vmul.f32 %v1213, %v1213
      %v1261 = vmul.f32 %v1218, %v1218
      %v1262 = vmul.f32 %v1223, %v1223
      %v1263 = vmul.f32 %v1228, %v1228
      %v1264 = vmul.f32 %v1233, %v1233
      %v1265 = vadd.f32 %v1257, %v1258
      %v1266 = vadd.f32 %v1265, %v1259
      %v1267 = vadd.f32 %v1266, %v1260
      %v1268 = vadd.f32 %v1267, %v1261
      %v1269 = vadd.f32 %v1268, %v1262
      %v1270 = vadd.f32 %v1269, %v1263
      %v1271 = vadd.f32 %v1270, %v1264
      %v1272 = vrot.slane %v1271, 4
      %v1273 = vadd.f32 %v1271, %v1272
      %v1274 = vrot.slane %v1273, 2
      %v1275 = vadd.f32 %v1273, %v1274
      %v1276 = vrot.slane %v1275, 1
      %v1277 = vadd.f32 %v1275, %v1276
      %vm1278 = vcmask 1040384
      %v1279 = vsel %vm1278, %v1256, %v1277
      %vm1280 = vcmask 1041408
      %v1281 = vsel %vm1280, %v1279, 0.0
      %1282 = vst [vmem:[%s262] sm:$0xff] %v1281
      %p1283 = scmp.lt.s32.totalorder %s18, 1
      %s1284 = scalar_select %p1283, %s18, 1
      %s1285 = smul.addr %s1284, 8
      %s1286 = smul.addr %s1285, 8
      %s1287 = scalar_lea.vmem %s5, %s1286
      %p1288 = scmp.lt.s32.totalorder %s18, 1
      %s1289 = scalar_select %p1288, %s18, 1
      %s1290 = smul.addr %s1289, 8
      %s1291 = scalar_lea.vmem %s6, %s1290
      // Predicated region
      $region41: #{basic_block_forward.4} parent=39 // pred_check
        %p1292 = pneg %p146
      $region42: #{basic_block_forward.4} parent=39 // pred_check_branch
        %1294 = sbr.rel (%p1292) target = $region44
      $region43: #{basic_block_forward.4} parent=39 // pred_region
        _
      $region44: #{basic_block_forward.4} parent=39 // pred_fallthru
        _
      // Predicated region
      $region45: #{basic_block_forward.4} parent=39 // pred_check
        %p1295 = pneg %p172
      $region46: #{basic_block_forward.4} parent=39 // pred_check_branch
        %1297 = sbr.rel (%p1295) target = $region48
      $region47: #{basic_block_forward.4} parent=39 // pred_region
        _
      $region48: #{basic_block_forward.4} parent=39 // pred_fallthru
        _
    $region40: #{basic_block_forward.4} parent=5 // pred_fallthru
      _
    %p1298 = scmp.le.s32.totalorder 2, %s13
    // Predicated region
    $region49: #{basic_block_forward.4} parent=5 // pred_check
      %p1299 = pneg %p1298
    $region50: #{basic_block_forward.4} parent=5 // pred_check_branch
      %1301 = sbr.rel (%p1299) target = $region52
    $region51: #{basic_block_forward.4} parent=5 // pred_region
      %s1302 = ssub.s32 %s13, 2
      // Predicated region
      $region53: #{basic_block_forward.4} parent=51 // pred_check
        %p1303 = pneg %p152
      $region54: #{basic_block_forward.4} parent=51 // pred_check_branch
        %1305 = sbr.rel (%p1303) target = $region56
      $region55: #{basic_block_forward.4} parent=51 // pred_region
        %p1306 = scmp.lt.s32.totalorder %s19, 1
        %s1307 = scalar_select %p1306, %s19, 1
        %s1308 = smul.addr %s1307, 8
        %s1309 = smul.addr %s1308, 8
        %s1310 = scalar_lea.vmem %s5, %s1309
      $region56: #{basic_block_forward.4} parent=51 // pred_fallthru
        _
      // Predicated region
      $region57: #{basic_block_forward.4} parent=51 // pred_check
        %p1311 = pneg %p178
      $region58: #{basic_block_forward.4} parent=51 // pred_check_branch
        %1313 = sbr.rel (%p1311) target = $region60
      $region59: #{basic_block_forward.4} parent=51 // pred_region
        %p1314 = scmp.lt.s32.totalorder %s19, 1
        %s1315 = scalar_select %p1314, %s19, 1
        %s1316 = smul.addr %s1315, 8
        %s1317 = scalar_lea.vmem %s6, %s1316
      $region60: #{basic_block_forward.4} parent=51 // pred_fallthru
        _
    $region52: #{basic_block_forward.4} parent=5 // pred_fallthru
      _
  $region6: #{basic_block_forward.4} parent=0 // loop_footer
    %s17 = sadd.s32 1, %s13
  $region7: #{basic_block_forward.4} parent=0 // loop_footer_branch
    %12 = sbr.rel target = $region3
  $region8: #{basic_block_forward.4} parent=0 // loop_exit
    _

</llo_original>
